<compile_context>
chip_gen: v7x
topology: tpu7x:2x2x1
jax: 0.10.0
libtpu: 0.0.40
codegen_flags: <defaults>
</compile_context>

<pallas_src>
import functools

import jax
import jax.numpy as jnp
from jax.experimental import pallas as pl
from jax.experimental.pallas import tpu as pltpu

# Full f32 matmul precision so kernel and pure-JAX reference agree tightly.
jax.config.update("jax_default_matmul_precision", "highest")


# ----------------------------------------------------------------------------
# Kernel 1: per-batch conv stack (phase-rotated conv1_1 + ReLU, conv1_2 + ReLU)
# ----------------------------------------------------------------------------
def conv_stack_kernel(pabs_ref, w1_ref, w2_ref, cbias_ref, out_ref):
    # pabs_ref : (1, P1, 18)  cols [0:8]=real taps, [8:16]=imag taps,
    #                         [16]=cos(phi), [17]=sin(phi)   (one batch)
    # w1_ref   : (16, 128)    conv1_1 weight, out-channels padded 75 -> 128
    # w2_ref   : (5, 128, 128) conv1_2 weight per tap, padded 75x25 -> 128x128
    # cbias_ref: (2, 128)     row0 = conv1 bias (padded), row1 = conv2 bias
    # out_ref  : (1, P2, 128) lane-dense conv2 output (cols >= 25 are zero)
    kw1 = w1_ref.shape[0] // 2          # 8
    kw2 = w2_ref.shape[0]               # 5
    p2 = out_ref.shape[1]

    pabs = pabs_ref[0]                  # (P1, 18)
    pr = pabs[:, 0:kw1]
    pi = pabs[:, kw1:2 * kw1]
    c = pabs[:, 2 * kw1:2 * kw1 + 1]
    s = pabs[:, 2 * kw1 + 1:2 * kw1 + 2]

    # Per-example phase rotation folded into the taps (linear mix).
    sig1 = c * pr + s * pi              # (P1, 8)  row-0 taps of conv1_1
    sig2 = c * pi + s * pr              # (P1, 8)  row-1 taps of conv1_1

    # conv1_1 as two K=8 GEMMs (no lane concat), lane-dense 128-wide result.
    c1 = (jnp.dot(sig1, w1_ref[0:kw1, :], preferred_element_type=jnp.float32)
          + jnp.dot(sig2, w1_ref[kw1:2 * kw1, :],
                    preferred_element_type=jnp.float32)
          + cbias_ref[0:1, :])
    c1 = jnp.maximum(c1, 0.0)           # (P1, 128)

    # conv1_2 as 5 shifted accumulated MXU dots (no 375-wide im2col concat).
    acc = jnp.dot(c1[0:p2, :], w2_ref[0], preferred_element_type=jnp.float32)
    for kw in range(1, kw2):
        acc = acc + jnp.dot(c1[kw:kw + p2, :], w2_ref[kw],
                            preferred_element_type=jnp.float32)
    out_ref[0] = jnp.maximum(acc + cbias_ref[1:2, :], 0.0)


# ----------------------------------------------------------------------------
# Kernel 2: GRU (batch_first, zero init state) + final Linear.
# ----------------------------------------------------------------------------
def gru_fc_kernel(x4_ref, wih_ref, whh_ref, gbias_ref, fcw_ref, fcb_ref,
                  out_ref, xp_ref, *, bp, t_steps):
    # x4_ref : (T*Bp, 25)   time-major GRU inputs, batch padded to Bp rows/step
    # xp_ref : (T*Bp, 3H)   VMEM scratch: hoisted input projection
    h_dim = whh_ref.shape[0]            # 128
    b_out = out_ref.shape[0]            # true batch

    # Hoisted input projection for ALL timesteps: one big GEMM into VMEM.
    xp_ref[...] = (jnp.dot(x4_ref[...], wih_ref[...],
                           preferred_element_type=jnp.float32)
                   + gbias_ref[0:1, :])                  # + b_ih
    b_hh = gbias_ref[1:2, :]

    def sigmoid(v):                     # tanh form: no VALU divide, EUP tanh
        return 0.5 * (jnp.tanh(0.5 * v) + 1.0)

    def step(t, h):
        start = pl.multiple_of(t * bp, bp)               # sublane-aligned
        xp = xp_ref[pl.ds(start, bp), :]                 # (Bp, 3H)
        hp = jnp.dot(h, whh_ref[...],
                     preferred_element_type=jnp.float32) + b_hh
        r = sigmoid(xp[:, 0:h_dim] + hp[:, 0:h_dim])
        z = sigmoid(xp[:, h_dim:2 * h_dim] + hp[:, h_dim:2 * h_dim])
        n = jnp.tanh(xp[:, 2 * h_dim:3 * h_dim]
                     + r * hp[:, 2 * h_dim:3 * h_dim])
        return (1.0 - z) * n + z * h

    h0 = jnp.zeros((bp, h_dim), jnp.float32)
    h = jax.lax.fori_loop(0, t_steps, step, h0)          # serial recurrence

    out_ref[...] = (jnp.dot(h[0:b_out, :], fcw_ref[...],
                            preferred_element_type=jnp.float32)
                    + fcb_ref[...])


# ----------------------------------------------------------------------------
# Wrapper: layout glue + the two pallas_calls.
# ----------------------------------------------------------------------------
def pet_forward(x, params, num_classes):
    """x: (B, 2, L) float32 -> (B, num_classes)."""
    B, _, L = x.shape
    H = params['gru_w_hh'].shape[1]     # 128
    P1 = L - 7                          # conv1_1 output width
    P2 = L - 11                         # conv1_2 output width / GRU steps
    KW1, KW2 = 8, 5
    C1, C2 = 75, 25
    CP = 128                            # lane-dense channel padding
    Bp = ((B + 7) // 8) * 8             # GRU batch rows padded to sublane tile

    real = x[:, 0, :]
    imag = x[:, 1, :]

    # TODO(synk): fc1 -> cos/sin phase path (2 scalars per example) stays in
    # the plain-JAX wrapper and is folded into the in-kernel tap rotation.
    x_flat = x.reshape(B, 2 * L)
    phi = x_flat @ params['fc1_w'].T + params['fc1_b']            # (B, 1)
    cs = jnp.concatenate([jnp.cos(phi), jnp.sin(phi)], axis=1)    # (B, 2)

    # im2col patches of the RAW signal (phase mix is linear, applied
    # in-kernel), packed with the per-example cos/sin columns: (B, P1, 18).
    Pr = jnp.stack([real[:, k:k + P1] for k in range(KW1)], axis=-1)
    Pi = jnp.stack([imag[:, k:k + P1] for k in range(KW1)], axis=-1)
    cs_b = jnp.broadcast_to(cs[:, None, :], (B, P1, 2))
    pabs = jnp.concatenate([Pr, Pi, cs_b], axis=-1)

    # Conv weight repacking (layout-only, done once): pad out-channels to 128
    # lanes so every GEMM and the kernel-1 writeback are lane-dense.
    w1 = params['conv1_w'].reshape(C1, 2 * KW1).T                 # (16, 75)
    w1p = jnp.zeros((2 * KW1, CP), jnp.float32).at[:, :C1].set(w1)
    w2 = jnp.transpose(params['conv2_w'][:, :, 0, :], (2, 1, 0))  # (5, 75, 25)
    w2p = jnp.zeros((KW2, CP, CP), jnp.float32).at[:, :C1, :C2].set(w2)
    cbias = jnp.zeros((2, CP), jnp.float32)
    cbias = cbias.at[0, :C1].set(params['conv1_b'])
    cbias = cbias.at[1, :C2].set(params['conv2_b'])

    conv_cost = pl.CostEstimate(
        flops=2 * B * (P1 * 2 * KW1 * CP + KW2 * P2 * CP * CP),
        transcendentals=0,
        bytes_accessed=4 * (B * P1 * 18 + 2 * KW1 * CP + KW2 * CP * CP
                            + 2 * CP + B * P2 * CP))

    c2_pad = pl.pallas_call(
        conv_stack_kernel,
        out_shape=jax.ShapeDtypeStruct((B, P2, CP), jnp.float32),
        grid=(B,),
        in_specs=[
            pl.BlockSpec((1, P1, 18), lambda b: (b, 0, 0)),
            pl.BlockSpec((2 * KW1, CP), lambda b: (0, 0)),
            pl.BlockSpec((KW2, CP, CP), lambda b: (0, 0, 0)),
            pl.BlockSpec((2, CP), lambda b: (0, 0)),
        ],
        out_specs=pl.BlockSpec((1, P2, CP), lambda b: (b, 0, 0)),
        compiler_params=pltpu.CompilerParams(
            dimension_semantics=("parallel",),
            vmem_limit_bytes=32 * 1024 * 1024),
        cost_estimate=conv_cost,
    )(pabs, w1p, w2p, cbias)

    # TODO(synk): the torch x3.view(B, L-11, 25) channel/position scramble and
    # the time-major repack stay as wrapper-side layout glue (fixed
    # permutations); fusing them into kernel 1's output indexing is future
    # work.
    c2 = c2_pad[:, :, :C2]                          # (B, P2, 25)  [pos, chan]
    x3 = jnp.transpose(c2, (0, 2, 1))               # (B, 25, P2) == torch x3
    x4 = x3.reshape(B, P2, C2)                      # torch .view semantics
    x4_p = jnp.zeros((Bp, P2, C2), jnp.float32).at[:B].set(x4)
    x4_tm = jnp.transpose(x4_p, (1, 0, 2)).reshape(P2 * Bp, C2)  # time-major

    wihT = params['gru_w_ih'].T                     # (25, 3H)
    whhT = params['gru_w_hh'].T                     # (H, 3H)
    gbias = jnp.stack([params['gru_b_ih'], params['gru_b_hh']], axis=0)
    fcwT = params['fc_w'].T                         # (H, NC)
    fcb = params['fc_b'].reshape(1, num_classes)

    gru_cost = pl.CostEstimate(
        flops=2 * (P2 * Bp * C2 * 3 * H + P2 * Bp * H * 3 * H
                   + B * H * num_classes),
        transcendentals=P2 * Bp * 3 * H,
        bytes_accessed=4 * (P2 * Bp * C2 + C2 * 3 * H + H * 3 * H + 2 * 3 * H
                            + H * num_classes + num_classes
                            + B * num_classes))

    vmem = pl.BlockSpec(memory_space=pltpu.MemorySpace.VMEM)
    out = pl.pallas_call(
        functools.partial(gru_fc_kernel, bp=Bp, t_steps=P2),
        out_shape=jax.ShapeDtypeStruct((B, num_classes), jnp.float32),
        in_specs=[vmem] * 6,
        out_specs=vmem,
        scratch_shapes=[pltpu.VMEM((P2 * Bp, 3 * H), jnp.float32)],
        compiler_params=pltpu.CompilerParams(
            vmem_limit_bytes=32 * 1024 * 1024),
        cost_estimate=gru_cost,
    )(x4_tm, wihT, whhT, gbias, fcwT, fcb)
    return out


# ----------------------------------------------------------------------------
# Pure-JAX reference replicating the PyTorch forward exactly.
# ----------------------------------------------------------------------------
def pet_reference(x, params, num_classes):
    B, _, L = x.shape
    H = params['gru_w_hh'].shape[1]
    P1 = L - 7
    P2 = L - 11

    x_flat = x.reshape(B, 2 * L)
    phi = x_flat @ params['fc1_w'].T + params['fc1_b']
    c, s = jnp.cos(phi), jnp.sin(phi)
    real, imag = x[:, 0, :], x[:, 1, :]
    sig1 = real * c + imag * s
    sig2 = imag * c + real * s
    signal = jnp.stack([sig1, sig2], axis=1)                    # (B, 2, L)

    w1 = params['conv1_w'][:, 0, :, :]                          # (75, 2, 8)
    pat1 = jnp.stack([signal[:, :, k:k + P1] for k in range(8)], axis=-1)
    conv1 = jnp.einsum('bhpk,ohk->bop', pat1, w1) \
        + params['conv1_b'][None, :, None]
    conv1 = jnp.maximum(conv1, 0.0)                             # (B, 75, P1)

    w2 = params['conv2_w'][:, :, 0, :]                          # (25, 75, 5)
    pat2 = jnp.stack([conv1[:, :, k:k + P2] for k in range(5)], axis=-1)
    conv2 = jnp.einsum('bcpk,ock->bop', pat2, w2) \
        + params['conv2_b'][None, :, None]
    conv2 = jnp.maximum(conv2, 0.0)                             # (B, 25, P2)

    x4 = conv2.reshape(B, P2, 25)                               # torch .view

    wih, whh = params['gru_w_ih'], params['gru_w_hh']
    bih, bhh = params['gru_b_ih'], params['gru_b_hh']
    h = jnp.zeros((B, H), jnp.float32)
    for t in range(P2):
        gi = x4[:, t, :] @ wih.T + bih
        gh = h @ whh.T + bhh
        r = jax.nn.sigmoid(gi[:, :H] + gh[:, :H])
        z = jax.nn.sigmoid(gi[:, H:2 * H] + gh[:, H:2 * H])
        n = jnp.tanh(gi[:, 2 * H:] + r * gh[:, 2 * H:])
        h = (1.0 - z) * n + z * h
    return h @ params['fc_w'].T + params['fc_b']


if __name__ == "__main__":
    B = 2
    L = 32                      # small input_shape=(2, 32); module default 1024
    num_classes = 11
    H = 128

    key = jax.random.PRNGKey(0)
    ks = jax.random.split(key, 13)

    def init(k, shape, scale=0.1):
        return (scale * jax.random.normal(k, shape)).astype(jnp.float32)

    params = dict(
        fc1_w=init(ks[0], (1, 2 * L)),
        fc1_b=init(ks[1], (1,)),
        conv1_w=init(ks[2], (75, 1, 2, 8)),
        conv1_b=init(ks[3], (75,)),
        conv2_w=init(ks[4], (25, 75, 1, 5)),
        conv2_b=init(ks[5], (25,)),
        gru_w_ih=init(ks[6], (3 * H, 25)),
        gru_w_hh=init(ks[7], (3 * H, H)),
        gru_b_ih=init(ks[8], (3 * H,)),
        gru_b_hh=init(ks[9], (3 * H,)),
        fc_w=init(ks[10], (num_classes, H)),
        fc_b=init(ks[11], (num_classes,)),
    )
    x = jax.random.normal(ks[12], (B, 2, L), jnp.float32)

    out = jax.block_until_ready(pet_forward(x, params, num_classes))
    ref = pet_reference(x, params, num_classes)

    assert out.shape == (B, num_classes)
    err = float(jnp.max(jnp.abs(out - ref)))
    assert jnp.allclose(out, ref, atol=1e-3, rtol=1e-3), f"mismatch: {err}"
    print("KERNEL_OK")
</pallas_src>

<mosaic_0001>
module attributes {stable_mosaic.version = 11 : i64} {
  func.func @conv_stack_kernel(%arg0: i32, %arg1: memref<1x25x18xf32, #tpu.memory_space<vmem>>, %arg2: memref<16x128xf32, #tpu.memory_space<vmem>>, %arg3: memref<5x128x128xf32, #tpu.memory_space<vmem>>, %arg4: memref<2x128xf32, #tpu.memory_space<vmem>>, %arg5: memref<1x21x128xf32, #tpu.memory_space<vmem>>) attributes {dimension_semantics = [#tpu.dimension_semantics<parallel>], iteration_bounds = array<i64: 2>, scalar_prefetch = 0 : i64, scratch_operands = 0 : i64, tpu.core_type = #tpu.core_type<tc>, window_params = [{transform_indices = @transform_0, window_bounds = array<i64: 1, 25, 18>}, {pipeline_mode = #tpu.pipeline_mode<synchronous>, transform_indices = @transform_1, window_bounds = array<i64: 16, 128>}, {pipeline_mode = #tpu.pipeline_mode<synchronous>, transform_indices = @transform_2, window_bounds = array<i64: 5, 128, 128>}, {pipeline_mode = #tpu.pipeline_mode<synchronous>, transform_indices = @transform_3, window_bounds = array<i64: 2, 128>}, {transform_indices = @transform_4, window_bounds = array<i64: 1, 21, 128>}]} {
    %c0 = arith.constant 0 : index
    %c0_0 = arith.constant 0 : index
    %c0_1 = arith.constant 0 : index
    %0 = vector.load %arg1[%c0, %c0_0, %c0_1] : memref<1x25x18xf32, #tpu.memory_space<vmem>>, vector<1x25x18xf32>
    %1 = vector.shape_cast %0 : vector<1x25x18xf32> to vector<25x18xf32>
    %2 = vector.extract_strided_slice %1 {offsets = [0, 0], sizes = [25, 8], strides = [1, 1]} : vector<25x18xf32> to vector<25x8xf32>
    %3 = vector.extract_strided_slice %1 {offsets = [0, 8], sizes = [25, 8], strides = [1, 1]} : vector<25x18xf32> to vector<25x8xf32>
    %4 = vector.extract_strided_slice %1 {offsets = [0, 16], sizes = [25, 1], strides = [1, 1]} : vector<25x18xf32> to vector<25x1xf32>
    %5 = vector.extract_strided_slice %1 {offsets = [0, 17], sizes = [25, 1], strides = [1, 1]} : vector<25x18xf32> to vector<25x1xf32>
    %6 = vector.broadcast %4 : vector<25x1xf32> to vector<25x8xf32>
    %7 = arith.mulf %6, %2 : vector<25x8xf32>
    %8 = vector.broadcast %5 : vector<25x1xf32> to vector<25x8xf32>
    %9 = arith.mulf %8, %3 : vector<25x8xf32>
    %10 = arith.addf %7, %9 : vector<25x8xf32>
    %11 = vector.broadcast %4 : vector<25x1xf32> to vector<25x8xf32>
    %12 = arith.mulf %11, %3 : vector<25x8xf32>
    %13 = vector.broadcast %5 : vector<25x1xf32> to vector<25x8xf32>
    %14 = arith.mulf %13, %2 : vector<25x8xf32>
    %15 = arith.addf %12, %14 : vector<25x8xf32>
    %c0_2 = arith.constant 0 : index
    %c0_3 = arith.constant 0 : index
    %16 = vector.load %arg2[%c0_2, %c0_3] : memref<16x128xf32, #tpu.memory_space<vmem>>, vector<8x128xf32>
    %cst = arith.constant dense<0.000000e+00> : vector<25x128xf32>
    %17 = tpu.matmul %10, %16, %cst {dimension_numbers = #tpu.dot_dimension_numbers<[1], [0], [0], [1], [0, 0, 1, 1], [], []>, precision = #tpu.contract_precision<fp32>} : vector<25x8xf32>, vector<8x128xf32>, vector<25x128xf32> -> vector<25x128xf32>
    %c8 = arith.constant 8 : index
    %c0_4 = arith.constant 0 : index
    %18 = vector.load %arg2[%c8, %c0_4] : memref<16x128xf32, #tpu.memory_space<vmem>>, vector<8x128xf32>
    %cst_5 = arith.constant dense<0.000000e+00> : vector<25x128xf32>
    %19 = tpu.matmul %15, %18, %cst_5 {dimension_numbers = #tpu.dot_dimension_numbers<[1], [0], [0], [1], [0, 0, 1, 1], [], []>, precision = #tpu.contract_precision<fp32>} : vector<25x8xf32>, vector<8x128xf32>, vector<25x128xf32> -> vector<25x128xf32>
    %20 = arith.addf %17, %19 : vector<25x128xf32>
    %c0_6 = arith.constant 0 : index
    %c0_7 = arith.constant 0 : index
    %21 = vector.load %arg4[%c0_6, %c0_7] : memref<2x128xf32, #tpu.memory_space<vmem>>, vector<1x128xf32>
    %22 = vector.broadcast %21 : vector<1x128xf32> to vector<25x128xf32>
    %23 = arith.addf %20, %22 : vector<25x128xf32>
    %cst_8 = arith.constant 0.000000e+00 : f32
    %24 = vector.broadcast %cst_8 : f32 to vector<25x128xf32>
    %25 = arith.maximumf %23, %24 : vector<25x128xf32>
    %26 = vector.extract_strided_slice %25 {offsets = [0, 0], sizes = [21, 128], strides = [1, 1]} : vector<25x128xf32> to vector<21x128xf32>
    %c0_9 = arith.constant 0 : index
    %c0_10 = arith.constant 0 : index
    %c0_11 = arith.constant 0 : index
    %27 = vector.load %arg3[%c0_9, %c0_10, %c0_11] : memref<5x128x128xf32, #tpu.memory_space<vmem>>, vector<1x128x128xf32>
    %28 = vector.shape_cast %27 : vector<1x128x128xf32> to vector<128x128xf32>
    %cst_12 = arith.constant dense<0.000000e+00> : vector<21x128xf32>
    %29 = tpu.matmul %26, %28, %cst_12 {dimension_numbers = #tpu.dot_dimension_numbers<[1], [0], [0], [1], [0, 0, 1, 1], [], []>, precision = #tpu.contract_precision<fp32>} : vector<21x128xf32>, vector<128x128xf32>, vector<21x128xf32> -> vector<21x128xf32>
    %30 = vector.extract_strided_slice %25 {offsets = [1, 0], sizes = [21, 128], strides = [1, 1]} : vector<25x128xf32> to vector<21x128xf32>
    %c1 = arith.constant 1 : index
    %c0_13 = arith.constant 0 : index
    %c0_14 = arith.constant 0 : index
    %31 = vector.load %arg3[%c1, %c0_13, %c0_14] : memref<5x128x128xf32, #tpu.memory_space<vmem>>, vector<1x128x128xf32>
    %32 = vector.shape_cast %31 : vector<1x128x128xf32> to vector<128x128xf32>
    %cst_15 = arith.constant dense<0.000000e+00> : vector<21x128xf32>
    %33 = tpu.matmul %30, %32, %cst_15 {dimension_numbers = #tpu.dot_dimension_numbers<[1], [0], [0], [1], [0, 0, 1, 1], [], []>, precision = #tpu.contract_precision<fp32>} : vector<21x128xf32>, vector<128x128xf32>, vector<21x128xf32> -> vector<21x128xf32>
    %34 = arith.addf %29, %33 : vector<21x128xf32>
    %35 = vector.extract_strided_slice %25 {offsets = [2, 0], sizes = [21, 128], strides = [1, 1]} : vector<25x128xf32> to vector<21x128xf32>
    %c2 = arith.constant 2 : index
    %c0_16 = arith.constant 0 : index
    %c0_17 = arith.constant 0 : index
    %36 = vector.load %arg3[%c2, %c0_16, %c0_17] : memref<5x128x128xf32, #tpu.memory_space<vmem>>, vector<1x128x128xf32>
    %37 = vector.shape_cast %36 : vector<1x128x128xf32> to vector<128x128xf32>
    %cst_18 = arith.constant dense<0.000000e+00> : vector<21x128xf32>
    %38 = tpu.matmul %35, %37, %cst_18 {dimension_numbers = #tpu.dot_dimension_numbers<[1], [0], [0], [1], [0, 0, 1, 1], [], []>, precision = #tpu.contract_precision<fp32>} : vector<21x128xf32>, vector<128x128xf32>, vector<21x128xf32> -> vector<21x128xf32>
    %39 = arith.addf %34, %38 : vector<21x128xf32>
    %40 = vector.extract_strided_slice %25 {offsets = [3, 0], sizes = [21, 128], strides = [1, 1]} : vector<25x128xf32> to vector<21x128xf32>
    %c3 = arith.constant 3 : index
    %c0_19 = arith.constant 0 : index
    %c0_20 = arith.constant 0 : index
    %41 = vector.load %arg3[%c3, %c0_19, %c0_20] : memref<5x128x128xf32, #tpu.memory_space<vmem>>, vector<1x128x128xf32>
    %42 = vector.shape_cast %41 : vector<1x128x128xf32> to vector<128x128xf32>
    %cst_21 = arith.constant dense<0.000000e+00> : vector<21x128xf32>
    %43 = tpu.matmul %40, %42, %cst_21 {dimension_numbers = #tpu.dot_dimension_numbers<[1], [0], [0], [1], [0, 0, 1, 1], [], []>, precision = #tpu.contract_precision<fp32>} : vector<21x128xf32>, vector<128x128xf32>, vector<21x128xf32> -> vector<21x128xf32>
    %44 = arith.addf %39, %43 : vector<21x128xf32>
    %45 = vector.extract_strided_slice %25 {offsets = [4, 0], sizes = [21, 128], strides = [1, 1]} : vector<25x128xf32> to vector<21x128xf32>
    %c4 = arith.constant 4 : index
    %c0_22 = arith.constant 0 : index
    %c0_23 = arith.constant 0 : index
    %46 = vector.load %arg3[%c4, %c0_22, %c0_23] : memref<5x128x128xf32, #tpu.memory_space<vmem>>, vector<1x128x128xf32>
    %47 = vector.shape_cast %46 : vector<1x128x128xf32> to vector<128x128xf32>
    %cst_24 = arith.constant dense<0.000000e+00> : vector<21x128xf32>
    %48 = tpu.matmul %45, %47, %cst_24 {dimension_numbers = #tpu.dot_dimension_numbers<[1], [0], [0], [1], [0, 0, 1, 1], [], []>, precision = #tpu.contract_precision<fp32>} : vector<21x128xf32>, vector<128x128xf32>, vector<21x128xf32> -> vector<21x128xf32>
    %49 = arith.addf %44, %48 : vector<21x128xf32>
    %c1_25 = arith.constant 1 : index
    %c0_26 = arith.constant 0 : index
    %50 = vector.load %arg4[%c1_25, %c0_26] : memref<2x128xf32, #tpu.memory_space<vmem>>, vector<1x128xf32>
    %51 = vector.broadcast %50 : vector<1x128xf32> to vector<21x128xf32>
    %52 = arith.addf %49, %51 : vector<21x128xf32>
    %cst_27 = arith.constant 0.000000e+00 : f32
    %53 = vector.broadcast %cst_27 : f32 to vector<21x128xf32>
    %54 = arith.maximumf %52, %53 : vector<21x128xf32>
    %c0_28 = arith.constant 0 : index
    %c0_29 = arith.constant 0 : index
    %c0_30 = arith.constant 0 : index
    %55 = vector.load %arg5[%c0_28, %c0_29, %c0_30] : memref<1x21x128xf32, #tpu.memory_space<vmem>>, vector<1x21x128xf32>
    %56 = vector.shape_cast %55 : vector<1x21x128xf32> to vector<21x128xf32>
    %57 = vector.shape_cast %54 : vector<21x128xf32> to vector<1x21x128xf32>
    tpu.vector_store %arg5[%c0_28, %c0_29, %c0_30], %57 {strides = array<i32>} : memref<1x21x128xf32, #tpu.memory_space<vmem>>, vector<1x21x128xf32>,
    return
  }
  func.func @transform_0(%arg0: i32) -> (i32, i32, i32) {
    %c0_i32 = arith.constant 0 : i32
    %c0_i32_0 = arith.constant 0 : i32
    %c0_i32_1 = arith.constant 0 : i32
    return %arg0, %c0_i32, %c0_i32_0 : i32, i32, i32
  }
  func.func @transform_1(%arg0: i32) -> (i32, i32) {
    %c0_i32 = arith.constant 0 : i32
    %c0_i32_0 = arith.constant 0 : i32
    %c0_i32_1 = arith.constant 0 : i32
    return %c0_i32, %c0_i32_0 : i32, i32
  }
  func.func @transform_2(%arg0: i32) -> (i32, i32, i32) {
    %c0_i32 = arith.constant 0 : i32
    %c0_i32_0 = arith.constant 0 : i32
    %c0_i32_1 = arith.constant 0 : i32
    %c0_i32_2 = arith.constant 0 : i32
    return %c0_i32, %c0_i32_0, %c0_i32_1 : i32, i32, i32
  }
  func.func @transform_3(%arg0: i32) -> (i32, i32) {
    %c0_i32 = arith.constant 0 : i32
    %c0_i32_0 = arith.constant 0 : i32
    %c0_i32_1 = arith.constant 0 : i32
    return %c0_i32, %c0_i32_0 : i32, i32
  }
  func.func @transform_4(%arg0: i32) -> (i32, i32, i32) {
    %c0_i32 = arith.constant 0 : i32
    %c0_i32_0 = arith.constant 0 : i32
    %c0_i32_1 = arith.constant 0 : i32
    return %arg0, %c0_i32, %c0_i32_0 : i32, i32, i32
  }
}

</mosaic_0001>

<llo_original>
// kernel: tpu_custom_call.1
$region0: #{tpu_custom_call.1}
  #allocation0 [shape = 'u32[]', space=smem, size = 0x4, offset = 0x4, fixed_abs, tag = 'smem constant byte address 0x4 - core index']
  #allocation1 [shape = 'u32[144,128]{1,0:T(1,128)}', space=vmem, size = 0x12000, scoped, tag = 'internal scratch']
  %s0 = inlined_call_operand.vmem [shape: f32[2,25,18], index: 0, kind: input, shape index: {}]
  %s1 = inlined_call_operand.vmem [shape: f32[16,128], index: 1, kind: input, shape index: {}]
  %s2 = inlined_call_operand.hbm [shape: f32[5,128,128], index: 2, kind: input, shape index: {}]
  %s3 = inlined_call_operand.vmem [shape: f32[2,128], index: 3, kind: input, shape index: {}]
  %s4 = inlined_call_operand.vmem [shape: f32[2,21,128], index: 4, kind: output, shape index: {}]
  %s5 = sld [smem:[#allocation0]]
  $region53: #{tpu_custom_call.1} parent=0
    _
  %s7 = ssub.s32 1, %s5
  %s8 = scalar_select 0, %s7, %s5
  $region1: #{tpu_custom_call.1} parent=0
    #allocation2 [shape = 'u8[327680]{0}', space=vmem, size = 0x50000, scoped, tag = 'input window, operand 2, single buffered']
    #allocation3 [shape = 's32[2]{0}', space=sflag, size = 0x8, scoped, tag = 'scoped memory for tpu_custom_call.1']
    %9 = vsyncpa [#allocation3], 0
    loop: start=0, step=1, limit=4
    $region2: #{tpu_custom_call.1} parent=1 // loop_pre_header
      _
    $region3: #{tpu_custom_call.1} parent=1 // loop_header
      %s11 = sphi 0, %s15
      %p12 = scmp.ge.s32.totalorder %s11, 4
      %s21 = sphi 0, %s23
      %s24 = sphi 0, %s21
      %s25 = sphi 0, %s24
      %s41 = sphi 0, %s25
      %s45 = sphi 0, %s45
      %s47 = sphi 0, %s45
      %s48 = sphi 0, %s47
      %s62 = sphi 0, %s48
      %s66 = sphi 0, %s66
      %s68 = sphi 0, %s66
      %s69 = sphi 0, %s68
      %s83 = sphi 0, %s69
      %s87 = sphi 0, %s87
      %s89 = sphi 0, %s87
      %s90 = sphi 0, %s89
      %s104 = sphi 0, %s90
      %s110 = sphi 0, %s112
      %s113 = sphi 0, %s110
      %s114 = sphi 0, %s113
      %s130 = sphi 0, %s114
    $region4: #{tpu_custom_call.1} parent=1 // loop_header_branch
      %14 = sbr.rel (%p12) target = $region8
    $region5: #{tpu_custom_call.1} parent=1 // loop_body
      %s16 = ssub.s32 %s11, 1
      %s17 = ssub.s32 %s11, 2
      %s18 = sadd.s32 %s11, 1
      %s19 = ssub.s32 %s11, %s18
      %p20 = scmp.eq.s32.totalorder %s19, 0
      %s22 = sadd.s32 %s21, 1
      %s23 = scalar_select %p20, %s21, %s22
      %p26 = pneg %p20
      %p27 = scmp.eq.s32.totalorder %s11, 1
      %p28 = por %p26, %p27
      %p29 = scmp.ne.s32.totalorder %s21, %s24
      %p30 = scmp.eq.s32.totalorder %s11, 0
      %p31 = por %p29, %p30
      %p32 = scmp.ne.s32.totalorder %s21, %s24
      %p33 = scmp.eq.s32.totalorder %s16, 1
      %p34 = por %p32, %p33
      %p35 = scmp.ne.s32.totalorder %s24, %s25
      %p36 = scmp.eq.s32.totalorder %s16, 0
      %p37 = por %p35, %p36
      %p38 = scmp.ne.s32.totalorder %s24, %s25
      %p39 = scmp.eq.s32.totalorder %s17, 1
      %p40 = por %p38, %p39
      %p42 = scmp.ne.s32.totalorder %s25, %s41
      %p43 = scmp.eq.s32.totalorder %s17, 0
      %p44 = por %p42, %p43
      %s46 = sadd.s32 %s45, 1
      %p49 = scmp.eq.s32.totalorder %s11, 1
      %p50 = scmp.ne.s32.totalorder %s45, %s47
      %p51 = scmp.eq.s32.totalorder %s11, 0
      %p52 = por %p50, %p51
      %p53 = scmp.ne.s32.totalorder %s45, %s47
      %p54 = scmp.eq.s32.totalorder %s16, 1
      %p55 = por %p53, %p54
      %p56 = scmp.ne.s32.totalorder %s47, %s48
      %p57 = scmp.eq.s32.totalorder %s16, 0
      %p58 = por %p56, %p57
      %p59 = scmp.ne.s32.totalorder %s47, %s48
      %p60 = scmp.eq.s32.totalorder %s17, 1
      %p61 = por %p59, %p60
      %p63 = scmp.ne.s32.totalorder %s48, %s62
      %p64 = scmp.eq.s32.totalorder %s17, 0
      %p65 = por %p63, %p64
      %s67 = sadd.s32 %s66, 1
      %p70 = scmp.eq.s32.totalorder %s11, 1
      %p71 = scmp.ne.s32.totalorder %s66, %s68
      %p72 = scmp.eq.s32.totalorder %s11, 0
      %p73 = por %p71, %p72
      %p74 = scmp.ne.s32.totalorder %s66, %s68
      %p75 = scmp.eq.s32.totalorder %s16, 1
      %p76 = por %p74, %p75
      %p77 = scmp.ne.s32.totalorder %s68, %s69
      %p78 = scmp.eq.s32.totalorder %s16, 0
      %p79 = por %p77, %p78
      %p80 = scmp.ne.s32.totalorder %s68, %s69
      %p81 = scmp.eq.s32.totalorder %s17, 1
      %p82 = por %p80, %p81
      %p84 = scmp.ne.s32.totalorder %s69, %s83
      %p85 = scmp.eq.s32.totalorder %s17, 0
      %p86 = por %p84, %p85
      %s88 = sadd.s32 %s87, 1
      %p91 = scmp.eq.s32.totalorder %s11, 1
      %p92 = scmp.ne.s32.totalorder %s87, %s89
      %p93 = scmp.eq.s32.totalorder %s11, 0
      %p94 = por %p92, %p93
      %p95 = scmp.ne.s32.totalorder %s87, %s89
      %p96 = scmp.eq.s32.totalorder %s16, 1
      %p97 = por %p95, %p96
      %p98 = scmp.ne.s32.totalorder %s89, %s90
      %p99 = scmp.eq.s32.totalorder %s16, 0
      %p100 = por %p98, %p99
      %p101 = scmp.ne.s32.totalorder %s89, %s90
      %p102 = scmp.eq.s32.totalorder %s17, 1
      %p103 = por %p101, %p102
      %p105 = scmp.ne.s32.totalorder %s90, %s104
      %p106 = scmp.eq.s32.totalorder %s17, 0
      %p107 = por %p105, %p106
      %s108 = ssub.s32 %s11, %s18
      %p109 = scmp.eq.s32.totalorder %s108, 0
      %s111 = sadd.s32 %s110, 1
      %s112 = scalar_select %p109, %s110, %s111
      %p115 = pneg %p109
      %p116 = scmp.eq.s32.totalorder %s11, 1
      %p117 = por %p115, %p116
      %p118 = scmp.ne.s32.totalorder %s110, %s113
      %p119 = scmp.eq.s32.totalorder %s11, 0
      %p120 = por %p118, %p119
      %p121 = scmp.ne.s32.totalorder %s110, %s113
      %p122 = scmp.eq.s32.totalorder %s16, 1
      %p123 = por %p121, %p122
      %p124 = scmp.ne.s32.totalorder %s113, %s114
      %p125 = scmp.eq.s32.totalorder %s16, 0
      %p126 = por %p124, %p125
      %p127 = scmp.ne.s32.totalorder %s113, %s114
      %p128 = scmp.eq.s32.totalorder %s17, 1
      %p129 = por %p127, %p128
      %p131 = scmp.ne.s32.totalorder %s114, %s130
      %p132 = scmp.eq.s32.totalorder %s17, 0
      %p133 = por %p131, %p132
      %p134 = scmp.le.s32.totalorder 1, %s11
      %p135 = scmp.lt.s32.totalorder %s11, 3
      %p136 = pnand %p134, %p135
      %p137 = pneg %p136
      // Predicated region
      $region9: #{tpu_custom_call.1} parent=5 // pred_check
        _
      $region10: #{tpu_custom_call.1} parent=5 // pred_check_branch
        %139 = sbr.rel (%p136) target = $region12
      $region11: #{tpu_custom_call.1} parent=5 // pred_region
        %s140 = ssub.s32 %s11, 1
        // Predicated region
        $region13: #{tpu_custom_call.1} parent=11 // pred_check
          %p141 = pneg %p58
        $region14: #{tpu_custom_call.1} parent=11 // pred_check_branch
          %143 = sbr.rel (%p141) target = $region16
        $region15: #{tpu_custom_call.1} parent=11 // pred_region
          _
        $region16: #{tpu_custom_call.1} parent=11 // pred_fallthru
          _
        // Predicated region
        $region17: #{tpu_custom_call.1} parent=11 // pred_check
          %p144 = pneg %p79
        $region18: #{tpu_custom_call.1} parent=11 // pred_check_branch
          %146 = sbr.rel (%p144) target = $region20
        $region19: #{tpu_custom_call.1} parent=11 // pred_region
          %s148 = ssub.s32 10240, 10240
          %149 = vsyncadd [#allocation3], %s148
          %s150 = sshll.u32 [#allocation2], 4
          %s151 = int_to_ptr.vmem [resolvable:$true] %s150
          %156 = dma.hbm_to_vmem [thread:$0]  %s2, 10240, %s151, [#allocation3], 128, 128, 8
        $region20: #{tpu_custom_call.1} parent=11 // pred_fallthru
          _
        // Predicated region
        $region21: #{tpu_custom_call.1} parent=11 // pred_check
          %p157 = pneg %p100
        $region22: #{tpu_custom_call.1} parent=11 // pred_check_branch
          %159 = sbr.rel (%p157) target = $region24
        $region23: #{tpu_custom_call.1} parent=11 // pred_region
          _
        $region24: #{tpu_custom_call.1} parent=11 // pred_fallthru
          _
      $region12: #{tpu_custom_call.1} parent=5 // pred_fallthru
        _
      %p160 = scmp.lt.s32.totalorder %s11, 2
      // Predicated region
      $region25: #{tpu_custom_call.1} parent=5 // pred_check
        %p161 = pneg %p160
      $region26: #{tpu_custom_call.1} parent=5 // pred_check_branch
        %163 = sbr.rel (%p161) target = $region28
      $region27: #{tpu_custom_call.1} parent=5 // pred_region
        // Predicated region
        $region29: #{tpu_custom_call.1} parent=27 // pred_check
          %p164 = pneg %p31
        $region30: #{tpu_custom_call.1} parent=27 // pred_check_branch
          %166 = sbr.rel (%p164) target = $region32
        $region31: #{tpu_custom_call.1} parent=27 // pred_region
          %p167 = scmp.lt.s32.totalorder %s11, 1
          %s168 = scalar_select %p167, %s11, 1
          %s169 = smul.addr %s168, 4
          %s170 = smul.addr %s169, 8
          %s171 = scalar_lea.vmem %s0, %s170
        $region32: #{tpu_custom_call.1} parent=27 // pred_fallthru
          _
      $region28: #{tpu_custom_call.1} parent=5 // pred_fallthru
        _
      %p172 = scmp.le.s32.totalorder 1, %s11
      %p173 = scmp.lt.s32.totalorder %s11, 3
      %p174 = pnand %p172, %p173
      %p175 = pneg %p174
      // Predicated region
      $region33: #{tpu_custom_call.1} parent=5 // pred_check
        _
      $region34: #{tpu_custom_call.1} parent=5 // pred_check_branch
        %177 = sbr.rel (%p174) target = $region36
      $region35: #{tpu_custom_call.1} parent=5 // pred_region
        %s178 = ssub.s32 %s11, 1
        // Predicated region
        $region37: #{tpu_custom_call.1} parent=35 // pred_check
          %p179 = pneg %p79
        $region38: #{tpu_custom_call.1} parent=35 // pred_check_branch
          %181 = sbr.rel (%p179) target = $region40
        $region39: #{tpu_custom_call.1} parent=35 // pred_region
          %182 = dma.done [#allocation3], 10240
        $region40: #{tpu_custom_call.1} parent=35 // pred_fallthru
          _
        %p183 = scmp.lt.s32.totalorder %s16, 1
        %s184 = scalar_select %p183, %s16, 1
        %s185 = smul.addr %s184, 4
        %s186 = smul.addr %s185, 8
        %s187 = scalar_lea.vmem %s0, %s186
        %p188 = pneg %p37
        %p189 = pneg %p34
        %p190 = pneg %p58
        %p191 = pneg %p55
        %p192 = pneg %p79
        %p193 = pneg %p76
        %p194 = pneg %p100
        %p195 = pneg %p97
        %p196 = pneg %p126
        %p197 = pneg %p123
        %p198 = scmp.lt.s32.totalorder %s16, 1
        %s199 = scalar_select %p198, %s16, 1
        %s200 = smul.addr %s199, 3
        %s201 = smul.addr %s200, 8
        %s202 = scalar_lea.vmem %s4, %s201
        %p203 = scmp.lt.s32.totalorder %s16, 1
        %s204 = scalar_select %p203, %s16, 1
        %s205 = smul.addr %s204, 4
        %s206 = smul.addr %s205, 8
        %s207 = scalar_lea.vmem %s0, %s206
        %p208 = scmp.lt.s32.totalorder %s16, 1
        %s209 = scalar_select %p208, %s16, 1
        %s210 = smul.addr %s209, 3
        %s211 = smul.addr %s210, 8
        %s212 = scalar_lea.vmem %s4, %s211
        %v213 = vld [vmem:[%s207] sm:$0xff]
        %v214 = vld [vmem:[%s207 + $0x8] sm:$0xff]
        %v215 = vld [vmem:[%s207 + $0x10] sm:$0xff]
        %v216 = vld [vmem:[%s207 + $0x18] sm:$0x1]
        %218 = vset.pattern.permute.xlu0 16
        %219 = vperm.xlu0 %218, %v213
        %v220 = vpop.permute.xlu0 %219
        %223 = vset.pattern.permute.xlu0 16
        %224 = vperm.xlu0 %223, %v214
        %v225 = vpop.permute.xlu0 %224
        %228 = vset.pattern.permute.xlu0 16
        %229 = vperm.xlu0 %228, %v215
        %v230 = vpop.permute.xlu0 %229
        %233 = vset.pattern.permute.xlu0 16
        %234 = vperm.xlu0 %233, %v216
        %v235 = vpop.permute.xlu0 %234
        %v237 = vmul.f32 %v220, %v213
        %v238 = vmul.f32 %v225, %v214
        %v239 = vmul.f32 %v230, %v215
        %v240 = vmul.f32 %v235, %v216
        %241 = vset.pattern.permute.xlu0 17
        %242 = vperm.xlu0 %241, %v213
        %v243 = vpop.permute.xlu0 %242
        %245 = vset.pattern.permute.xlu0 17
        %246 = vperm.xlu0 %245, %v214
        %v247 = vpop.permute.xlu0 %246
        %249 = vset.pattern.permute.xlu0 17
        %250 = vperm.xlu0 %249, %v215
        %v251 = vpop.permute.xlu0 %250
        %253 = vset.pattern.permute.xlu0 17
        %254 = vperm.xlu0 %253, %v216
        %v255 = vpop.permute.xlu0 %254
        %v257 = vmul.f32 %v243, %v213
        %v258 = vmul.f32 %v247, %v214
        %v259 = vmul.f32 %v251, %v215
        %v260 = vmul.f32 %v255, %v216
        %265 = vrot.lane.b32.xlu0 %v257, 120
        %v266 = vpop.permute.xlu0 %265
        %267 = vrot.lane.b32.xlu0 %v258, 120
        %v268 = vpop.permute.xlu0 %267
        %269 = vrot.lane.b32.xlu0 %v259, 120
        %v270 = vpop.permute.xlu0 %269
        %271 = vrot.lane.b32.xlu0 %v260, 120
        %v272 = vpop.permute.xlu0 %271
        %v277 = vadd.f32 %v237, %v266
        %v278 = vadd.f32 %v238, %v268
        %v279 = vadd.f32 %v239, %v270
        %v280 = vadd.f32 %v240, %v272
        %281 = vrot.lane.b32.xlu0 %v257, 8
        %v282 = vpop.permute.xlu0 %281
        %283 = vrot.lane.b32.xlu0 %v258, 8
        %v284 = vpop.permute.xlu0 %283
        %285 = vrot.lane.b32.xlu0 %v259, 8
        %v286 = vpop.permute.xlu0 %285
        %287 = vrot.lane.b32.xlu0 %v260, 8
        %v288 = vpop.permute.xlu0 %287
        %v293 = vadd.f32 %v237, %v282
        %v294 = vadd.f32 %v238, %v284
        %v295 = vadd.f32 %v239, %v286
        %v296 = vadd.f32 %v240, %v288
        %v297 = vld [vmem:[%s1] sm:$0xff]
        %v298 = vld [vmem:[%s1 + $0x8] sm:$0xff]
        %303 = vrot.lane.b32.xlu0 %v293, 120
        %v304 = vpop.permute.xlu0 %303
        %305 = vrot.lane.b32.xlu0 %v294, 120
        %v306 = vpop.permute.xlu0 %305
        %307 = vrot.lane.b32.xlu0 %v295, 120
        %v308 = vpop.permute.xlu0 %307
        %309 = vrot.lane.b32.xlu0 %v296, 120
        %v310 = vpop.permute.xlu0 %309
        %vm311 = vcmask 64512
        %v312 = vsel %vm311, %v304, 0
        %v314 = vsel %vm311, %v306, 0
        %v316 = vsel %vm311, %v308, 0
        %v318 = vsel %vm311, %v310, 0
        %320 = vmatprep.subr.mxu0 0.0
        %v321 = vand.u32 %v298, 4294901760
        %322 = vmatpush1.msra.mxu0 %v321
        %323 = vmatprep.subr.mxu0 0.0
        %324 = vmatpush1.msra.mxu0 0.0
        %325 = vmatprep.subr.mxu0 0.0
        %326 = vmatpush1.msra.mxu0 0.0
        %327 = vmatprep.subr.mxu0 0.0
        %328 = vmatpush1.msra.mxu0 0.0
        %329 = vmatprep.subr.mxu0 0.0
        %330 = vmatpush1.msra.mxu0 0.0
        %331 = vmatprep.subr.mxu0 0.0
        %332 = vmatpush1.msra.mxu0 0.0
        %333 = vmatprep.subr.mxu0 0.0
        %334 = vmatpush1.msra.mxu0 0.0
        %335 = vmatprep.subr.mxu0 0.0
        %336 = vmatpush1.msra.mxu0 0.0
        %337 = vmatprep.subr.mxu0 0.0
        %338 = vmatpush1.msra.mxu0 0.0
        %339 = vmatprep.subr.mxu0 0.0
        %340 = vmatpush1.msra.mxu0 0.0
        %341 = vmatprep.subr.mxu0 0.0
        %342 = vmatpush1.msra.mxu0 0.0
        %343 = vmatprep.subr.mxu0 0.0
        %344 = vmatpush1.msra.mxu0 0.0
        %345 = vmatprep.subr.mxu0 0.0
        %346 = vmatpush1.msra.mxu0 0.0
        %347 = vmatprep.subr.mxu0 0.0
        %348 = vmatpush1.msra.mxu0 0.0
        %349 = vmatprep.subr.mxu0 0.0
        %350 = vmatpush1.msra.mxu0 0.0
        %351 = vmatprep.subr.mxu0 0.0
        %352 = vmatpush1.msra.mxu0 0.0
        %353 = vmatprep.subr.mxu0 0.0
        %354 = vmatpush1.msra.mxu0 0.0
        %355 = vmatprep.subr.mxu0 0.0
        %356 = vmatpush1.msra.mxu0 0.0
        %357 = vmatprep.subr.mxu0 0.0
        %358 = vmatpush1.msra.mxu0 0.0
        %359 = vmatprep.subr.mxu0 0.0
        %360 = vmatpush1.msra.mxu0 0.0
        %361 = vmatprep.subr.mxu0 0.0
        %362 = vmatpush1.msra.mxu0 0.0
        %363 = vmatprep.subr.mxu0 0.0
        %364 = vmatpush1.msra.mxu0 0.0
        %365 = vmatprep.subr.mxu0 0.0
        %366 = vmatpush1.msra.mxu0 0.0
        %367 = vmatprep.subr.mxu0 0.0
        %368 = vmatpush1.msra.mxu0 0.0
        %369 = vmatprep.subr.mxu0 0.0
        %370 = vmatpush1.msra.mxu0 0.0
        %371 = vmatprep.subr.mxu0 0.0
        %372 = vmatpush1.msra.mxu0 0.0
        %373 = vmatprep.subr.mxu0 0.0
        %374 = vmatpush1.msra.mxu0 0.0
        %375 = vmatprep.subr.mxu0 0.0
        %376 = vmatpush1.msra.mxu0 0.0
        %377 = vmatprep.subr.mxu0 0.0
        %378 = vmatpush1.msra.mxu0 0.0
        %379 = vmatprep.subr.mxu0 0.0
        %380 = vmatpush1.msra.mxu0 0.0
        %381 = vmatprep.subr.mxu0 0.0
        %382 = vmatpush1.msra.mxu0 0.0
        %383 = vmatprep.subr.mxu0 0.0
        %384 = vmatpush1.msra.mxu0 0.0
        %385 = vmatprep.mubr.f32.mxu0 0.0
        %v386 = vand.u32 %v312, 4294901760
        %v387 = vsub.f32 %v312, %v386
        %v388 = vand.u32 %v387, 4294901760
        %v389 = vsub.f32 %v387, %v388
        %v390 = vand.u32 %v389, 4294901760
        %391 = vmatmul.mubr.f32.gmra.mrb[0].mxu0 %v390
        %v392 = vpop.f32.mrb[0].mxu0
        %v393 = vadd.f32 0.0, %v392
        %v394 = vpop.f32.mrb[0].mxu0
        %395 = vmatprep.mubr.f32.mxu0 0.0
        %v396 = vand.u32 %v314, 4294901760
        %v397 = vsub.f32 %v314, %v396
        %v398 = vand.u32 %v397, 4294901760
        %v399 = vsub.f32 %v397, %v398
        %v400 = vand.u32 %v399, 4294901760
        %401 = vmatmul.mubr.f32.gmra.mrb[0].mxu0 %v400
        %v402 = vpop.f32.mrb[0].mxu0
        %v403 = vadd.f32 0.0, %v402
        %v404 = vpop.f32.mrb[0].mxu0
        %405 = vmatprep.mubr.f32.mxu0 0.0
        %v406 = vand.u32 %v316, 4294901760
        %v407 = vsub.f32 %v316, %v406
        %v408 = vand.u32 %v407, 4294901760
        %v409 = vsub.f32 %v407, %v408
        %v410 = vand.u32 %v409, 4294901760
        %411 = vmatmul.mubr.f32.gmra.mrb[0].mxu0 %v410
        %v412 = vpop.f32.mrb[0].mxu0
        %v413 = vadd.f32 0.0, %v412
        %v414 = vpop.f32.mrb[0].mxu0
        %415 = vmatprep.mubr.f32.mxu0 0.0
        %v416 = vand.u32 %v318, 4294901760
        %v417 = vsub.f32 %v318, %v416
        %v418 = vand.u32 %v417, 4294901760
        %v419 = vsub.f32 %v417, %v418
        %v420 = vand.u32 %v419, 4294901760
        %421 = vmatmul.mubr.f32.gmra.mrb[0].mxu0 %v420
        %v422 = vpop.f32.mrb[0].mxu0
        %v423 = vadd.f32 0.0, %v422
        %v424 = vpop.f32.mrb[0].mxu0
        %425 = vdwg.mxu0
        %426 = vmatprep.subr.mxu0 0.0
        %v427 = vand.u32 %v298, 4294901760
        %v428 = vsub.f32 %v298, %v427
        %v429 = vand.u32 %v428, 4294901760
        %v430 = vsub.f32 %v428, %v429
        %v431 = vand.u32 %v430, 4294901760
        %432 = vmatpush1.msra.mxu0 %v431
        %433 = vmatprep.subr.mxu0 0.0
        %434 = vmatpush1.msra.mxu0 0.0
        %435 = vmatprep.subr.mxu0 0.0
        %436 = vmatpush1.msra.mxu0 0.0
        %437 = vmatprep.subr.mxu0 0.0
        %438 = vmatpush1.msra.mxu0 0.0
        %439 = vmatprep.subr.mxu0 0.0
        %440 = vmatpush1.msra.mxu0 0.0
        %441 = vmatprep.subr.mxu0 0.0
        %442 = vmatpush1.msra.mxu0 0.0
        %443 = vmatprep.subr.mxu0 0.0
        %444 = vmatpush1.msra.mxu0 0.0
        %445 = vmatprep.subr.mxu0 0.0
        %446 = vmatpush1.msra.mxu0 0.0
        %447 = vmatprep.subr.mxu0 0.0
        %448 = vmatpush1.msra.mxu0 0.0
        %449 = vmatprep.subr.mxu0 0.0
        %450 = vmatpush1.msra.mxu0 0.0
        %451 = vmatprep.subr.mxu0 0.0
        %452 = vmatpush1.msra.mxu0 0.0
        %453 = vmatprep.subr.mxu0 0.0
        %454 = vmatpush1.msra.mxu0 0.0
        %455 = vmatprep.subr.mxu0 0.0
        %456 = vmatpush1.msra.mxu0 0.0
        %457 = vmatprep.subr.mxu0 0.0
        %458 = vmatpush1.msra.mxu0 0.0
        %459 = vmatprep.subr.mxu0 0.0
        %460 = vmatpush1.msra.mxu0 0.0
        %461 = vmatprep.subr.mxu0 0.0
        %462 = vmatpush1.msra.mxu0 0.0
        %463 = vmatprep.subr.mxu0 0.0
        %464 = vmatpush1.msra.mxu0 0.0
        %465 = vmatprep.subr.mxu0 0.0
        %466 = vmatpush1.msra.mxu0 0.0
        %467 = vmatprep.subr.mxu0 0.0
        %468 = vmatpush1.msra.mxu0 0.0
        %469 = vmatprep.subr.mxu0 0.0
        %470 = vmatpush1.msra.mxu0 0.0
        %471 = vmatprep.subr.mxu0 0.0
        %472 = vmatpush1.msra.mxu0 0.0
        %473 = vmatprep.subr.mxu0 0.0
        %474 = vmatpush1.msra.mxu0 0.0
        %475 = vmatprep.subr.mxu0 0.0
        %476 = vmatpush1.msra.mxu0 0.0
        %477 = vmatprep.subr.mxu0 0.0
        %478 = vmatpush1.msra.mxu0 0.0
        %479 = vmatprep.subr.mxu0 0.0
        %480 = vmatpush1.msra.mxu0 0.0
        %481 = vmatprep.subr.mxu0 0.0
        %482 = vmatpush1.msra.mxu0 0.0
        %483 = vmatprep.subr.mxu0 0.0
        %484 = vmatpush1.msra.mxu0 0.0
        %485 = vmatprep.subr.mxu0 0.0
        %486 = vmatpush1.msra.mxu0 0.0
        %487 = vmatprep.subr.mxu0 0.0
        %488 = vmatpush1.msra.mxu0 0.0
        %489 = vmatprep.subr.mxu0 0.0
        %490 = vmatpush1.msra.mxu0 0.0
        %491 = vmatprep.subr.mxu0 0.0
        %492 = vmatpush1.msra.mxu0 0.0
        %493 = vmatprep.subr.mxu0 0.0
        %494 = vmatpush1.msra.mxu0 0.0
        %495 = vmatprep.mubr.f32.mxu0 0.0
        %v496 = vand.u32 %v312, 4294901760
        %497 = vmatmul.mubr.f32.gmra.mrb[0].mxu0 %v496
        %v498 = vpop.f32.mrb[0].mxu0
        %v499 = vadd.f32 %v393, %v498
        %v500 = vpop.f32.mrb[0].mxu0
        %501 = vmatprep.mubr.f32.mxu0 0.0
        %v502 = vand.u32 %v314, 4294901760
        %503 = vmatmul.mubr.f32.gmra.mrb[0].mxu0 %v502
        %v504 = vpop.f32.mrb[0].mxu0
        %v505 = vadd.f32 %v403, %v504
        %v506 = vpop.f32.mrb[0].mxu0
        %507 = vmatprep.mubr.f32.mxu0 0.0
        %v508 = vand.u32 %v316, 4294901760
        %509 = vmatmul.mubr.f32.gmra.mrb[0].mxu0 %v508
        %v510 = vpop.f32.mrb[0].mxu0
        %v511 = vadd.f32 %v413, %v510
        %v512 = vpop.f32.mrb[0].mxu0
        %513 = vmatprep.mubr.f32.mxu0 0.0
        %v514 = vand.u32 %v318, 4294901760
        %515 = vmatmul.mubr.f32.gmra.mrb[0].mxu0 %v514
        %v516 = vpop.f32.mrb[0].mxu0
        %v517 = vadd.f32 %v423, %v516
        %v518 = vpop.f32.mrb[0].mxu0
        %519 = vdwg.mxu0
        %520 = vmatprep.subr.mxu0 0.0
        %v521 = vand.u32 %v298, 4294901760
        %v522 = vsub.f32 %v298, %v521
        %523 = vmatpush1.msra.mxu0 %v522
        %524 = vmatprep.subr.mxu0 0.0
        %525 = vmatpush1.msra.mxu0 0.0
        %526 = vmatprep.subr.mxu0 0.0
        %527 = vmatpush1.msra.mxu0 0.0
        %528 = vmatprep.subr.mxu0 0.0
        %529 = vmatpush1.msra.mxu0 0.0
        %530 = vmatprep.subr.mxu0 0.0
        %531 = vmatpush1.msra.mxu0 0.0
        %532 = vmatprep.subr.mxu0 0.0
        %533 = vmatpush1.msra.mxu0 0.0
        %534 = vmatprep.subr.mxu0 0.0
        %535 = vmatpush1.msra.mxu0 0.0
        %536 = vmatprep.subr.mxu0 0.0
        %537 = vmatpush1.msra.mxu0 0.0
        %538 = vmatprep.subr.mxu0 0.0
        %539 = vmatpush1.msra.mxu0 0.0
        %540 = vmatprep.subr.mxu0 0.0
        %541 = vmatpush1.msra.mxu0 0.0
        %542 = vmatprep.subr.mxu0 0.0
        %543 = vmatpush1.msra.mxu0 0.0
        %544 = vmatprep.subr.mxu0 0.0
        %545 = vmatpush1.msra.mxu0 0.0
        %546 = vmatprep.subr.mxu0 0.0
        %547 = vmatpush1.msra.mxu0 0.0
        %548 = vmatprep.subr.mxu0 0.0
        %549 = vmatpush1.msra.mxu0 0.0
        %550 = vmatprep.subr.mxu0 0.0
        %551 = vmatpush1.msra.mxu0 0.0
        %552 = vmatprep.subr.mxu0 0.0
        %553 = vmatpush1.msra.mxu0 0.0
        %554 = vmatprep.subr.mxu0 0.0
        %555 = vmatpush1.msra.mxu0 0.0
        %556 = vmatprep.subr.mxu0 0.0
        %557 = vmatpush1.msra.mxu0 0.0
        %558 = vmatprep.subr.mxu0 0.0
        %559 = vmatpush1.msra.mxu0 0.0
        %560 = vmatprep.subr.mxu0 0.0
        %561 = vmatpush1.msra.mxu0 0.0
        %562 = vmatprep.subr.mxu0 0.0
        %563 = vmatpush1.msra.mxu0 0.0
        %564 = vmatprep.subr.mxu0 0.0
        %565 = vmatpush1.msra.mxu0 0.0
        %566 = vmatprep.subr.mxu0 0.0
        %567 = vmatpush1.msra.mxu0 0.0
        %568 = vmatprep.subr.mxu0 0.0
        %569 = vmatpush1.msra.mxu0 0.0
        %570 = vmatprep.subr.mxu0 0.0
        %571 = vmatpush1.msra.mxu0 0.0
        %572 = vmatprep.subr.mxu0 0.0
        %573 = vmatpush1.msra.mxu0 0.0
        %574 = vmatprep.subr.mxu0 0.0
        %575 = vmatpush1.msra.mxu0 0.0
        %576 = vmatprep.subr.mxu0 0.0
        %577 = vmatpush1.msra.mxu0 0.0
        %578 = vmatprep.subr.mxu0 0.0
        %579 = vmatpush1.msra.mxu0 0.0
        %580 = vmatprep.subr.mxu0 0.0
        %581 = vmatpush1.msra.mxu0 0.0
        %582 = vmatprep.subr.mxu0 0.0
        %583 = vmatpush1.msra.mxu0 0.0
        %584 = vmatprep.subr.mxu0 0.0
        %585 = vmatpush1.msra.mxu0 0.0
        %586 = vmatprep.mubr.f32.mxu0 0.0
        %v587 = vand.u32 %v312, 4294901760
        %v588 = vsub.f32 %v312, %v587
        %589 = vmatmul.mubr.f32.gmra.mrb[0].mxu0 %v588
        %v590 = vpop.f32.mrb[0].mxu0
        %v591 = vadd.f32 %v499, %v590
        %v592 = vpop.f32.mrb[0].mxu0
        %593 = vmatprep.mubr.f32.mxu0 0.0
        %v594 = vand.u32 %v314, 4294901760
        %v595 = vsub.f32 %v314, %v594
        %596 = vmatmul.mubr.f32.gmra.mrb[0].mxu0 %v595
        %v597 = vpop.f32.mrb[0].mxu0
        %v598 = vadd.f32 %v505, %v597
        %v599 = vpop.f32.mrb[0].mxu0
        %600 = vmatprep.mubr.f32.mxu0 0.0
        %v601 = vand.u32 %v316, 4294901760
        %v602 = vsub.f32 %v316, %v601
        %603 = vmatmul.mubr.f32.gmra.mrb[0].mxu0 %v602
        %v604 = vpop.f32.mrb[0].mxu0
        %v605 = vadd.f32 %v511, %v604
        %v606 = vpop.f32.mrb[0].mxu0
        %607 = vmatprep.mubr.f32.mxu0 0.0
        %v608 = vand.u32 %v318, 4294901760
        %v609 = vsub.f32 %v318, %v608
        %610 = vmatmul.mubr.f32.gmra.mrb[0].mxu0 %v609
        %v611 = vpop.f32.mrb[0].mxu0
        %v612 = vadd.f32 %v517, %v611
        %v613 = vpop.f32.mrb[0].mxu0
        %614 = vdwg.mxu0
        %615 = vmatprep.subr.mxu0 0.0
        %v616 = vand.u32 %v298, 4294901760
        %617 = vmatpush1.msra.mxu0 %v616
        %618 = vmatprep.subr.mxu0 0.0
        %619 = vmatpush1.msra.mxu0 0.0
        %620 = vmatprep.subr.mxu0 0.0
        %621 = vmatpush1.msra.mxu0 0.0
        %622 = vmatprep.subr.mxu0 0.0
        %623 = vmatpush1.msra.mxu0 0.0
        %624 = vmatprep.subr.mxu0 0.0
        %625 = vmatpush1.msra.mxu0 0.0
        %626 = vmatprep.subr.mxu0 0.0
        %627 = vmatpush1.msra.mxu0 0.0
        %628 = vmatprep.subr.mxu0 0.0
        %629 = vmatpush1.msra.mxu0 0.0
        %630 = vmatprep.subr.mxu0 0.0
        %631 = vmatpush1.msra.mxu0 0.0
        %632 = vmatprep.subr.mxu0 0.0
        %633 = vmatpush1.msra.mxu0 0.0
        %634 = vmatprep.subr.mxu0 0.0
        %635 = vmatpush1.msra.mxu0 0.0
        %636 = vmatprep.subr.mxu0 0.0
        %637 = vmatpush1.msra.mxu0 0.0
        %638 = vmatprep.subr.mxu0 0.0
        %639 = vmatpush1.msra.mxu0 0.0
        %640 = vmatprep.subr.mxu0 0.0
        %641 = vmatpush1.msra.mxu0 0.0
        %642 = vmatprep.subr.mxu0 0.0
        %643 = vmatpush1.msra.mxu0 0.0
        %644 = vmatprep.subr.mxu0 0.0
        %645 = vmatpush1.msra.mxu0 0.0
        %646 = vmatprep.subr.mxu0 0.0
        %647 = vmatpush1.msra.mxu0 0.0
        %648 = vmatprep.subr.mxu0 0.0
        %649 = vmatpush1.msra.mxu0 0.0
        %650 = vmatprep.subr.mxu0 0.0
        %651 = vmatpush1.msra.mxu0 0.0
        %652 = vmatprep.subr.mxu0 0.0
        %653 = vmatpush1.msra.mxu0 0.0
        %654 = vmatprep.subr.mxu0 0.0
        %655 = vmatpush1.msra.mxu0 0.0
        %656 = vmatprep.subr.mxu0 0.0
        %657 = vmatpush1.msra.mxu0 0.0
        %658 = vmatprep.subr.mxu0 0.0
        %659 = vmatpush1.msra.mxu0 0.0
        %660 = vmatprep.subr.mxu0 0.0
        %661 = vmatpush1.msra.mxu0 0.0
        %662 = vmatprep.subr.mxu0 0.0
        %663 = vmatpush1.msra.mxu0 0.0
        %664 = vmatprep.subr.mxu0 0.0
        %665 = vmatpush1.msra.mxu0 0.0
        %666 = vmatprep.subr.mxu0 0.0
        %667 = vmatpush1.msra.mxu0 0.0
        %668 = vmatprep.subr.mxu0 0.0
        %669 = vmatpush1.msra.mxu0 0.0
        %670 = vmatprep.subr.mxu0 0.0
        %671 = vmatpush1.msra.mxu0 0.0
        %672 = vmatprep.subr.mxu0 0.0
        %673 = vmatpush1.msra.mxu0 0.0
        %674 = vmatprep.subr.mxu0 0.0
        %675 = vmatpush1.msra.mxu0 0.0
        %676 = vmatprep.subr.mxu0 0.0
        %677 = vmatpush1.msra.mxu0 0.0
        %678 = vmatprep.subr.mxu0 0.0
        %679 = vmatpush1.msra.mxu0 0.0
        %680 = vmatprep.mubr.f32.mxu0 0.0
        %v681 = vand.u32 %v312, 4294901760
        %v682 = vsub.f32 %v312, %v681
        %v683 = vand.u32 %v682, 4294901760
        %684 = vmatmul.mubr.f32.gmra.mrb[0].mxu0 %v683
        %v685 = vpop.f32.mrb[0].mxu0
        %v686 = vadd.f32 %v591, %v685
        %v687 = vpop.f32.mrb[0].mxu0
        %688 = vmatprep.mubr.f32.mxu0 0.0
        %v689 = vand.u32 %v314, 4294901760
        %v690 = vsub.f32 %v314, %v689
        %v691 = vand.u32 %v690, 4294901760
        %692 = vmatmul.mubr.f32.gmra.mrb[0].mxu0 %v691
        %v693 = vpop.f32.mrb[0].mxu0
        %v694 = vadd.f32 %v598, %v693
        %v695 = vpop.f32.mrb[0].mxu0
        %696 = vmatprep.mubr.f32.mxu0 0.0
        %v697 = vand.u32 %v316, 4294901760
        %v698 = vsub.f32 %v316, %v697
        %v699 = vand.u32 %v698, 4294901760
        %700 = vmatmul.mubr.f32.gmra.mrb[0].mxu0 %v699
        %v701 = vpop.f32.mrb[0].mxu0
        %v702 = vadd.f32 %v605, %v701
        %v703 = vpop.f32.mrb[0].mxu0
        %704 = vmatprep.mubr.f32.mxu0 0.0
        %v705 = vand.u32 %v318, 4294901760
        %v706 = vsub.f32 %v318, %v705
        %v707 = vand.u32 %v706, 4294901760
        %708 = vmatmul.mubr.f32.gmra.mrb[0].mxu0 %v707
        %v709 = vpop.f32.mrb[0].mxu0
        %v710 = vadd.f32 %v612, %v709
        %v711 = vpop.f32.mrb[0].mxu0
        %712 = vdwg.mxu0
        %713 = vmatprep.subr.mxu0 0.0
        %v714 = vand.u32 %v298, 4294901760
        %v715 = vsub.f32 %v298, %v714
        %v716 = vand.u32 %v715, 4294901760
        %717 = vmatpush1.msra.mxu0 %v716
        %718 = vmatprep.subr.mxu0 0.0
        %719 = vmatpush1.msra.mxu0 0.0
        %720 = vmatprep.subr.mxu0 0.0
        %721 = vmatpush1.msra.mxu0 0.0
        %722 = vmatprep.subr.mxu0 0.0
        %723 = vmatpush1.msra.mxu0 0.0
        %724 = vmatprep.subr.mxu0 0.0
        %725 = vmatpush1.msra.mxu0 0.0
        %726 = vmatprep.subr.mxu0 0.0
        %727 = vmatpush1.msra.mxu0 0.0
        %728 = vmatprep.subr.mxu0 0.0
        %729 = vmatpush1.msra.mxu0 0.0
        %730 = vmatprep.subr.mxu0 0.0
        %731 = vmatpush1.msra.mxu0 0.0
        %732 = vmatprep.subr.mxu0 0.0
        %733 = vmatpush1.msra.mxu0 0.0
        %734 = vmatprep.subr.mxu0 0.0
        %735 = vmatpush1.msra.mxu0 0.0
        %736 = vmatprep.subr.mxu0 0.0
        %737 = vmatpush1.msra.mxu0 0.0
        %738 = vmatprep.subr.mxu0 0.0
        %739 = vmatpush1.msra.mxu0 0.0
        %740 = vmatprep.subr.mxu0 0.0
        %741 = vmatpush1.msra.mxu0 0.0
        %742 = vmatprep.subr.mxu0 0.0
        %743 = vmatpush1.msra.mxu0 0.0
        %744 = vmatprep.subr.mxu0 0.0
        %745 = vmatpush1.msra.mxu0 0.0
        %746 = vmatprep.subr.mxu0 0.0
        %747 = vmatpush1.msra.mxu0 0.0
        %748 = vmatprep.subr.mxu0 0.0
        %749 = vmatpush1.msra.mxu0 0.0
        %750 = vmatprep.subr.mxu0 0.0
        %751 = vmatpush1.msra.mxu0 0.0
        %752 = vmatprep.subr.mxu0 0.0
        %753 = vmatpush1.msra.mxu0 0.0
        %754 = vmatprep.subr.mxu0 0.0
        %755 = vmatpush1.msra.mxu0 0.0
        %756 = vmatprep.subr.mxu0 0.0
        %757 = vmatpush1.msra.mxu0 0.0
        %758 = vmatprep.subr.mxu0 0.0
        %759 = vmatpush1.msra.mxu0 0.0
        %760 = vmatprep.subr.mxu0 0.0
        %761 = vmatpush1.msra.mxu0 0.0
        %762 = vmatprep.subr.mxu0 0.0
        %763 = vmatpush1.msra.mxu0 0.0
        %764 = vmatprep.subr.mxu0 0.0
        %765 = vmatpush1.msra.mxu0 0.0
        %766 = vmatprep.subr.mxu0 0.0
        %767 = vmatpush1.msra.mxu0 0.0
        %768 = vmatprep.subr.mxu0 0.0
        %769 = vmatpush1.msra.mxu0 0.0
        %770 = vmatprep.subr.mxu0 0.0
        %771 = vmatpush1.msra.mxu0 0.0
        %772 = vmatprep.subr.mxu0 0.0
        %773 = vmatpush1.msra.mxu0 0.0
        %774 = vmatprep.subr.mxu0 0.0
        %775 = vmatpush1.msra.mxu0 0.0
        %776 = vmatprep.subr.mxu0 0.0
        %777 = vmatpush1.msra.mxu0 0.0
        %778 = vmatprep.subr.mxu0 0.0
        %779 = vmatpush1.msra.mxu0 0.0
        %780 = vmatprep.mubr.f32.mxu0 0.0
        %v781 = vand.u32 %v312, 4294901760
        %782 = vmatmul.mubr.f32.gmra.mrb[0].mxu0 %v781
        %v783 = vpop.f32.mrb[0].mxu0
        %v784 = vadd.f32 %v686, %v783
        %v785 = vpop.f32.mrb[0].mxu0
        %786 = vmatprep.mubr.f32.mxu0 0.0
        %v787 = vand.u32 %v314, 4294901760
        %788 = vmatmul.mubr.f32.gmra.mrb[0].mxu0 %v787
        %v789 = vpop.f32.mrb[0].mxu0
        %v790 = vadd.f32 %v694, %v789
        %v791 = vpop.f32.mrb[0].mxu0
        %792 = vmatprep.mubr.f32.mxu0 0.0
        %v793 = vand.u32 %v316, 4294901760
        %794 = vmatmul.mubr.f32.gmra.mrb[0].mxu0 %v793
        %v795 = vpop.f32.mrb[0].mxu0
        %v796 = vadd.f32 %v702, %v795
        %v797 = vpop.f32.mrb[0].mxu0
        %798 = vmatprep.mubr.f32.mxu0 0.0
        %v799 = vand.u32 %v318, 4294901760
        %800 = vmatmul.mubr.f32.gmra.mrb[0].mxu0 %v799
        %v801 = vpop.f32.mrb[0].mxu0
        %v802 = vadd.f32 %v710, %v801
        %v803 = vpop.f32.mrb[0].mxu0
        %804 = vdwg.mxu0
        %805 = vmatprep.subr.mxu0 0.0
        %v806 = vand.u32 %v298, 4294901760
        %807 = vmatpush1.msra.mxu0 %v806
        %808 = vmatprep.subr.mxu0 0.0
        %809 = vmatpush1.msra.mxu0 0.0
        %810 = vmatprep.subr.mxu0 0.0
        %811 = vmatpush1.msra.mxu0 0.0
        %812 = vmatprep.subr.mxu0 0.0
        %813 = vmatpush1.msra.mxu0 0.0
        %814 = vmatprep.subr.mxu0 0.0
        %815 = vmatpush1.msra.mxu0 0.0
        %816 = vmatprep.subr.mxu0 0.0
        %817 = vmatpush1.msra.mxu0 0.0
        %818 = vmatprep.subr.mxu0 0.0
        %819 = vmatpush1.msra.mxu0 0.0
        %820 = vmatprep.subr.mxu0 0.0
        %821 = vmatpush1.msra.mxu0 0.0
        %822 = vmatprep.subr.mxu0 0.0
        %823 = vmatpush1.msra.mxu0 0.0
        %824 = vmatprep.subr.mxu0 0.0
        %825 = vmatpush1.msra.mxu0 0.0
        %826 = vmatprep.subr.mxu0 0.0
        %827 = vmatpush1.msra.mxu0 0.0
        %828 = vmatprep.subr.mxu0 0.0
        %829 = vmatpush1.msra.mxu0 0.0
        %830 = vmatprep.subr.mxu0 0.0
        %831 = vmatpush1.msra.mxu0 0.0
        %832 = vmatprep.subr.mxu0 0.0
        %833 = vmatpush1.msra.mxu0 0.0
        %834 = vmatprep.subr.mxu0 0.0
        %835 = vmatpush1.msra.mxu0 0.0
        %836 = vmatprep.subr.mxu0 0.0
        %837 = vmatpush1.msra.mxu0 0.0
        %838 = vmatprep.subr.mxu0 0.0
        %839 = vmatpush1.msra.mxu0 0.0
        %840 = vmatprep.subr.mxu0 0.0
        %841 = vmatpush1.msra.mxu0 0.0
        %842 = vmatprep.subr.mxu0 0.0
        %843 = vmatpush1.msra.mxu0 0.0
        %844 = vmatprep.subr.mxu0 0.0
        %845 = vmatpush1.msra.mxu0 0.0
        %846 = vmatprep.subr.mxu0 0.0
        %847 = vmatpush1.msra.mxu0 0.0
        %848 = vmatprep.subr.mxu0 0.0
        %849 = vmatpush1.msra.mxu0 0.0
        %850 = vmatprep.subr.mxu0 0.0
        %851 = vmatpush1.msra.mxu0 0.0
        %852 = vmatprep.subr.mxu0 0.0
        %853 = vmatpush1.msra.mxu0 0.0
        %854 = vmatprep.subr.mxu0 0.0
        %855 = vmatpush1.msra.mxu0 0.0
        %856 = vmatprep.subr.mxu0 0.0
        %857 = vmatpush1.msra.mxu0 0.0
        %858 = vmatprep.subr.mxu0 0.0
        %859 = vmatpush1.msra.mxu0 0.0
        %860 = vmatprep.subr.mxu0 0.0
        %861 = vmatpush1.msra.mxu0 0.0
        %862 = vmatprep.subr.mxu0 0.0
        %863 = vmatpush1.msra.mxu0 0.0
        %864 = vmatprep.subr.mxu0 0.0
        %865 = vmatpush1.msra.mxu0 0.0
        %866 = vmatprep.subr.mxu0 0.0
        %867 = vmatpush1.msra.mxu0 0.0
        %868 = vmatprep.subr.mxu0 0.0
        %869 = vmatpush1.msra.mxu0 0.0
        %870 = vmatprep.mubr.f32.mxu0 0.0
        %v871 = vand.u32 %v312, 4294901760
        %872 = vmatmul.mubr.f32.gmra.mrb[0].mxu0 %v871
        %v873 = vpop.f32.mrb[0].mxu0
        %v874 = vadd.f32 %v784, %v873
        %v875 = vpop.f32.mrb[0].mxu0
        %876 = vmatprep.mubr.f32.mxu0 0.0
        %v877 = vand.u32 %v314, 4294901760
        %878 = vmatmul.mubr.f32.gmra.mrb[0].mxu0 %v877
        %v879 = vpop.f32.mrb[0].mxu0
        %v880 = vadd.f32 %v790, %v879
        %v881 = vpop.f32.mrb[0].mxu0
        %882 = vmatprep.mubr.f32.mxu0 0.0
        %v883 = vand.u32 %v316, 4294901760
        %884 = vmatmul.mubr.f32.gmra.mrb[0].mxu0 %v883
        %v885 = vpop.f32.mrb[0].mxu0
        %v886 = vadd.f32 %v796, %v885
        %v887 = vpop.f32.mrb[0].mxu0
        %888 = vmatprep.mubr.f32.mxu0 0.0
        %v889 = vand.u32 %v318, 4294901760
        %890 = vmatmul.mubr.f32.gmra.mrb[0].mxu0 %v889
        %v891 = vpop.f32.mrb[0].mxu0
        %v892 = vadd.f32 %v802, %v891
        %v893 = vpop.f32.mrb[0].mxu0
        %894 = vdwg.mxu0
        %v896 = vsel %vm311, %v277, 0
        %v899 = vsel %vm311, %v278, 0
        %v902 = vsel %vm311, %v279, 0
        %v905 = vsel %vm311, %v280, 0
        %907 = vmatprep.subr.mxu0 0.0
        %v908 = vand.u32 %v297, 4294901760
        %909 = vmatpush1.msra.mxu0 %v908
        %910 = vmatprep.subr.mxu0 0.0
        %911 = vmatpush1.msra.mxu0 0.0
        %912 = vmatprep.subr.mxu0 0.0
        %913 = vmatpush1.msra.mxu0 0.0
        %914 = vmatprep.subr.mxu0 0.0
        %915 = vmatpush1.msra.mxu0 0.0
        %916 = vmatprep.subr.mxu0 0.0
        %917 = vmatpush1.msra.mxu0 0.0
        %918 = vmatprep.subr.mxu0 0.0
        %919 = vmatpush1.msra.mxu0 0.0
        %920 = vmatprep.subr.mxu0 0.0
        %921 = vmatpush1.msra.mxu0 0.0
        %922 = vmatprep.subr.mxu0 0.0
        %923 = vmatpush1.msra.mxu0 0.0
        %924 = vmatprep.subr.mxu0 0.0
        %925 = vmatpush1.msra.mxu0 0.0
        %926 = vmatprep.subr.mxu0 0.0
        %927 = vmatpush1.msra.mxu0 0.0
        %928 = vmatprep.subr.mxu0 0.0
        %929 = vmatpush1.msra.mxu0 0.0
        %930 = vmatprep.subr.mxu0 0.0
        %931 = vmatpush1.msra.mxu0 0.0
        %932 = vmatprep.subr.mxu0 0.0
        %933 = vmatpush1.msra.mxu0 0.0
        %934 = vmatprep.subr.mxu0 0.0
        %935 = vmatpush1.msra.mxu0 0.0
        %936 = vmatprep.subr.mxu0 0.0
        %937 = vmatpush1.msra.mxu0 0.0
        %938 = vmatprep.subr.mxu0 0.0
        %939 = vmatpush1.msra.mxu0 0.0
        %940 = vmatprep.subr.mxu0 0.0
        %941 = vmatpush1.msra.mxu0 0.0
        %942 = vmatprep.subr.mxu0 0.0
        %943 = vmatpush1.msra.mxu0 0.0
        %944 = vmatprep.subr.mxu0 0.0
        %945 = vmatpush1.msra.mxu0 0.0
        %946 = vmatprep.subr.mxu0 0.0
        %947 = vmatpush1.msra.mxu0 0.0
        %948 = vmatprep.subr.mxu0 0.0
        %949 = vmatpush1.msra.mxu0 0.0
        %950 = vmatprep.subr.mxu0 0.0
        %951 = vmatpush1.msra.mxu0 0.0
        %952 = vmatprep.subr.mxu0 0.0
        %953 = vmatpush1.msra.mxu0 0.0
        %954 = vmatprep.subr.mxu0 0.0
        %955 = vmatpush1.msra.mxu0 0.0
        %956 = vmatprep.subr.mxu0 0.0
        %957 = vmatpush1.msra.mxu0 0.0
        %958 = vmatprep.subr.mxu0 0.0
        %959 = vmatpush1.msra.mxu0 0.0
        %960 = vmatprep.subr.mxu0 0.0
        %961 = vmatpush1.msra.mxu0 0.0
        %962 = vmatprep.subr.mxu0 0.0
        %963 = vmatpush1.msra.mxu0 0.0
        %964 = vmatprep.subr.mxu0 0.0
        %965 = vmatpush1.msra.mxu0 0.0
        %966 = vmatprep.subr.mxu0 0.0
        %967 = vmatpush1.msra.mxu0 0.0
        %968 = vmatprep.subr.mxu0 0.0
        %969 = vmatpush1.msra.mxu0 0.0
        %970 = vmatprep.subr.mxu0 0.0
        %971 = vmatpush1.msra.mxu0 0.0
        %972 = vmatprep.mubr.f32.mxu0 0.0
        %v973 = vand.u32 %v896, 4294901760
        %v974 = vsub.f32 %v896, %v973
        %v975 = vand.u32 %v974, 4294901760
        %v976 = vsub.f32 %v974, %v975
        %v977 = vand.u32 %v976, 4294901760
        %978 = vmatmul.mubr.f32.gmra.mrb[0].mxu0 %v977
        %v979 = vpop.f32.mrb[0].mxu0
        %v980 = vadd.f32 %v874, %v979
        %v981 = vpop.f32.mrb[0].mxu0
        %982 = vmatprep.mubr.f32.mxu0 0.0
        %v983 = vand.u32 %v899, 4294901760
        %v984 = vsub.f32 %v899, %v983
        %v985 = vand.u32 %v984, 4294901760
        %v986 = vsub.f32 %v984, %v985
        %v987 = vand.u32 %v986, 4294901760
        %988 = vmatmul.mubr.f32.gmra.mrb[0].mxu0 %v987
        %v989 = vpop.f32.mrb[0].mxu0
        %v990 = vadd.f32 %v880, %v989
        %v991 = vpop.f32.mrb[0].mxu0
        %992 = vmatprep.mubr.f32.mxu0 0.0
        %v993 = vand.u32 %v902, 4294901760
        %v994 = vsub.f32 %v902, %v993
        %v995 = vand.u32 %v994, 4294901760
        %v996 = vsub.f32 %v994, %v995
        %v997 = vand.u32 %v996, 4294901760
        %998 = vmatmul.mubr.f32.gmra.mrb[0].mxu0 %v997
        %v999 = vpop.f32.mrb[0].mxu0
        %v1000 = vadd.f32 %v886, %v999
        %v1001 = vpop.f32.mrb[0].mxu0
        %1002 = vmatprep.mubr.f32.mxu0 0.0
        %v1003 = vand.u32 %v905, 4294901760
        %v1004 = vsub.f32 %v905, %v1003
        %v1005 = vand.u32 %v1004, 4294901760
        %v1006 = vsub.f32 %v1004, %v1005
        %v1007 = vand.u32 %v1006, 4294901760
        %1008 = vmatmul.mubr.f32.gmra.mrb[0].mxu0 %v1007
        %v1009 = vpop.f32.mrb[0].mxu0
        %v1010 = vadd.f32 %v892, %v1009
        %v1011 = vpop.f32.mrb[0].mxu0
        %1012 = vdwg.mxu0
        %1013 = vmatprep.subr.mxu0 0.0
        %v1014 = vand.u32 %v297, 4294901760
        %v1015 = vsub.f32 %v297, %v1014
        %v1016 = vand.u32 %v1015, 4294901760
        %v1017 = vsub.f32 %v1015, %v1016
        %v1018 = vand.u32 %v1017, 4294901760
        %1019 = vmatpush1.msra.mxu0 %v1018
        %1020 = vmatprep.subr.mxu0 0.0
        %1021 = vmatpush1.msra.mxu0 0.0
        %1022 = vmatprep.subr.mxu0 0.0
        %1023 = vmatpush1.msra.mxu0 0.0
        %1024 = vmatprep.subr.mxu0 0.0
        %1025 = vmatpush1.msra.mxu0 0.0
        %1026 = vmatprep.subr.mxu0 0.0
        %1027 = vmatpush1.msra.mxu0 0.0
        %1028 = vmatprep.subr.mxu0 0.0
        %1029 = vmatpush1.msra.mxu0 0.0
        %1030 = vmatprep.subr.mxu0 0.0
        %1031 = vmatpush1.msra.mxu0 0.0
        %1032 = vmatprep.subr.mxu0 0.0
        %1033 = vmatpush1.msra.mxu0 0.0
        %1034 = vmatprep.subr.mxu0 0.0
        %1035 = vmatpush1.msra.mxu0 0.0
        %1036 = vmatprep.subr.mxu0 0.0
        %1037 = vmatpush1.msra.mxu0 0.0
        %1038 = vmatprep.subr.mxu0 0.0
        %1039 = vmatpush1.msra.mxu0 0.0
        %1040 = vmatprep.subr.mxu0 0.0
        %1041 = vmatpush1.msra.mxu0 0.0
        %1042 = vmatprep.subr.mxu0 0.0
        %1043 = vmatpush1.msra.mxu0 0.0
        %1044 = vmatprep.subr.mxu0 0.0
        %1045 = vmatpush1.msra.mxu0 0.0
        %1046 = vmatprep.subr.mxu0 0.0
        %1047 = vmatpush1.msra.mxu0 0.0
        %1048 = vmatprep.subr.mxu0 0.0
        %1049 = vmatpush1.msra.mxu0 0.0
        %1050 = vmatprep.subr.mxu0 0.0
        %1051 = vmatpush1.msra.mxu0 0.0
        %1052 = vmatprep.subr.mxu0 0.0
        %1053 = vmatpush1.msra.mxu0 0.0
        %1054 = vmatprep.subr.mxu0 0.0
        %1055 = vmatpush1.msra.mxu0 0.0
        %1056 = vmatprep.subr.mxu0 0.0
        %1057 = vmatpush1.msra.mxu0 0.0
        %1058 = vmatprep.subr.mxu0 0.0
        %1059 = vmatpush1.msra.mxu0 0.0
        %1060 = vmatprep.subr.mxu0 0.0
        %1061 = vmatpush1.msra.mxu0 0.0
        %1062 = vmatprep.subr.mxu0 0.0
        %1063 = vmatpush1.msra.mxu0 0.0
        %1064 = vmatprep.subr.mxu0 0.0
        %1065 = vmatpush1.msra.mxu0 0.0
        %1066 = vmatprep.subr.mxu0 0.0
        %1067 = vmatpush1.msra.mxu0 0.0
        %1068 = vmatprep.subr.mxu0 0.0
        %1069 = vmatpush1.msra.mxu0 0.0
        %1070 = vmatprep.subr.mxu0 0.0
        %1071 = vmatpush1.msra.mxu0 0.0
        %1072 = vmatprep.subr.mxu0 0.0
        %1073 = vmatpush1.msra.mxu0 0.0
        %1074 = vmatprep.subr.mxu0 0.0
        %1075 = vmatpush1.msra.mxu0 0.0
        %1076 = vmatprep.subr.mxu0 0.0
        %1077 = vmatpush1.msra.mxu0 0.0
        %1078 = vmatprep.subr.mxu0 0.0
        %1079 = vmatpush1.msra.mxu0 0.0
        %1080 = vmatprep.subr.mxu0 0.0
        %1081 = vmatpush1.msra.mxu0 0.0
        %1082 = vmatprep.mubr.f32.mxu0 0.0
        %v1083 = vand.u32 %v896, 4294901760
        %1084 = vmatmul.mubr.f32.gmra.mrb[0].mxu0 %v1083
        %v1085 = vpop.f32.mrb[0].mxu0
        %v1086 = vadd.f32 %v980, %v1085
        %v1087 = vpop.f32.mrb[0].mxu0
        %1088 = vmatprep.mubr.f32.mxu0 0.0
        %v1089 = vand.u32 %v899, 4294901760
        %1090 = vmatmul.mubr.f32.gmra.mrb[0].mxu0 %v1089
        %v1091 = vpop.f32.mrb[0].mxu0
        %v1092 = vadd.f32 %v990, %v1091
        %v1093 = vpop.f32.mrb[0].mxu0
        %1094 = vmatprep.mubr.f32.mxu0 0.0
        %v1095 = vand.u32 %v902, 4294901760
        %1096 = vmatmul.mubr.f32.gmra.mrb[0].mxu0 %v1095
        %v1097 = vpop.f32.mrb[0].mxu0
        %v1098 = vadd.f32 %v1000, %v1097
        %v1099 = vpop.f32.mrb[0].mxu0
        %1100 = vmatprep.mubr.f32.mxu0 0.0
        %v1101 = vand.u32 %v905, 4294901760
        %1102 = vmatmul.mubr.f32.gmra.mrb[0].mxu0 %v1101
        %v1103 = vpop.f32.mrb[0].mxu0
        %v1104 = vadd.f32 %v1010, %v1103
        %v1105 = vpop.f32.mrb[0].mxu0
        %1106 = vdwg.mxu0
        %1107 = vmatprep.subr.mxu0 0.0
        %v1108 = vand.u32 %v297, 4294901760
        %v1109 = vsub.f32 %v297, %v1108
        %1110 = vmatpush1.msra.mxu0 %v1109
        %1111 = vmatprep.subr.mxu0 0.0
        %1112 = vmatpush1.msra.mxu0 0.0
        %1113 = vmatprep.subr.mxu0 0.0
        %1114 = vmatpush1.msra.mxu0 0.0
        %1115 = vmatprep.subr.mxu0 0.0
        %1116 = vmatpush1.msra.mxu0 0.0
        %1117 = vmatprep.subr.mxu0 0.0
        %1118 = vmatpush1.msra.mxu0 0.0
        %1119 = vmatprep.subr.mxu0 0.0
        %1120 = vmatpush1.msra.mxu0 0.0
        %1121 = vmatprep.subr.mxu0 0.0
        %1122 = vmatpush1.msra.mxu0 0.0
        %1123 = vmatprep.subr.mxu0 0.0
        %1124 = vmatpush1.msra.mxu0 0.0
        %1125 = vmatprep.subr.mxu0 0.0
        %1126 = vmatpush1.msra.mxu0 0.0
        %1127 = vmatprep.subr.mxu0 0.0
        %1128 = vmatpush1.msra.mxu0 0.0
        %1129 = vmatprep.subr.mxu0 0.0
        %1130 = vmatpush1.msra.mxu0 0.0
        %1131 = vmatprep.subr.mxu0 0.0
        %1132 = vmatpush1.msra.mxu0 0.0
        %1133 = vmatprep.subr.mxu0 0.0
        %1134 = vmatpush1.msra.mxu0 0.0
        %1135 = vmatprep.subr.mxu0 0.0
        %1136 = vmatpush1.msra.mxu0 0.0
        %1137 = vmatprep.subr.mxu0 0.0
        %1138 = vmatpush1.msra.mxu0 0.0
        %1139 = vmatprep.subr.mxu0 0.0
        %1140 = vmatpush1.msra.mxu0 0.0
        %1141 = vmatprep.subr.mxu0 0.0
        %1142 = vmatpush1.msra.mxu0 0.0
        %1143 = vmatprep.subr.mxu0 0.0
        %1144 = vmatpush1.msra.mxu0 0.0
        %1145 = vmatprep.subr.mxu0 0.0
        %1146 = vmatpush1.msra.mxu0 0.0
        %1147 = vmatprep.subr.mxu0 0.0
        %1148 = vmatpush1.msra.mxu0 0.0
        %1149 = vmatprep.subr.mxu0 0.0
        %1150 = vmatpush1.msra.mxu0 0.0
        %1151 = vmatprep.subr.mxu0 0.0
        %1152 = vmatpush1.msra.mxu0 0.0
        %1153 = vmatprep.subr.mxu0 0.0
        %1154 = vmatpush1.msra.mxu0 0.0
        %1155 = vmatprep.subr.mxu0 0.0
        %1156 = vmatpush1.msra.mxu0 0.0
        %1157 = vmatprep.subr.mxu0 0.0
        %1158 = vmatpush1.msra.mxu0 0.0
        %1159 = vmatprep.subr.mxu0 0.0
        %1160 = vmatpush1.msra.mxu0 0.0
        %1161 = vmatprep.subr.mxu0 0.0
        %1162 = vmatpush1.msra.mxu0 0.0
        %1163 = vmatprep.subr.mxu0 0.0
        %1164 = vmatpush1.msra.mxu0 0.0
        %1165 = vmatprep.subr.mxu0 0.0
        %1166 = vmatpush1.msra.mxu0 0.0
        %1167 = vmatprep.subr.mxu0 0.0
        %1168 = vmatpush1.msra.mxu0 0.0
        %1169 = vmatprep.subr.mxu0 0.0
        %1170 = vmatpush1.msra.mxu0 0.0
        %1171 = vmatprep.subr.mxu0 0.0
        %1172 = vmatpush1.msra.mxu0 0.0
        %1173 = vmatprep.mubr.f32.mxu0 0.0
        %v1174 = vand.u32 %v896, 4294901760
        %v1175 = vsub.f32 %v896, %v1174
        %1176 = vmatmul.mubr.f32.gmra.mrb[0].mxu0 %v1175
        %v1177 = vpop.f32.mrb[0].mxu0
        %v1178 = vadd.f32 %v1086, %v1177
        %v1179 = vpop.f32.mrb[0].mxu0
        %1180 = vmatprep.mubr.f32.mxu0 0.0
        %v1181 = vand.u32 %v899, 4294901760
        %v1182 = vsub.f32 %v899, %v1181
        %1183 = vmatmul.mubr.f32.gmra.mrb[0].mxu0 %v1182
        %v1184 = vpop.f32.mrb[0].mxu0
        %v1185 = vadd.f32 %v1092, %v1184
        %v1186 = vpop.f32.mrb[0].mxu0
        %1187 = vmatprep.mubr.f32.mxu0 0.0
        %v1188 = vand.u32 %v902, 4294901760
        %v1189 = vsub.f32 %v902, %v1188
        %1190 = vmatmul.mubr.f32.gmra.mrb[0].mxu0 %v1189
        %v1191 = vpop.f32.mrb[0].mxu0
        %v1192 = vadd.f32 %v1098, %v1191
        %v1193 = vpop.f32.mrb[0].mxu0
        %1194 = vmatprep.mubr.f32.mxu0 0.0
        %v1195 = vand.u32 %v905, 4294901760
        %v1196 = vsub.f32 %v905, %v1195
        %1197 = vmatmul.mubr.f32.gmra.mrb[0].mxu0 %v1196
        %v1198 = vpop.f32.mrb[0].mxu0
        %v1199 = vadd.f32 %v1104, %v1198
        %v1200 = vpop.f32.mrb[0].mxu0
        %1201 = vdwg.mxu0
        %1202 = vmatprep.subr.mxu0 0.0
        %v1203 = vand.u32 %v297, 4294901760
        %1204 = vmatpush1.msra.mxu0 %v1203
        %1205 = vmatprep.subr.mxu0 0.0
        %1206 = vmatpush1.msra.mxu0 0.0
        %1207 = vmatprep.subr.mxu0 0.0
        %1208 = vmatpush1.msra.mxu0 0.0
        %1209 = vmatprep.subr.mxu0 0.0
        %1210 = vmatpush1.msra.mxu0 0.0
        %1211 = vmatprep.subr.mxu0 0.0
        %1212 = vmatpush1.msra.mxu0 0.0
        %1213 = vmatprep.subr.mxu0 0.0
        %1214 = vmatpush1.msra.mxu0 0.0
        %1215 = vmatprep.subr.mxu0 0.0
        %1216 = vmatpush1.msra.mxu0 0.0
        %1217 = vmatprep.subr.mxu0 0.0
        %1218 = vmatpush1.msra.mxu0 0.0
        %1219 = vmatprep.subr.mxu0 0.0
        %1220 = vmatpush1.msra.mxu0 0.0
        %1221 = vmatprep.subr.mxu0 0.0
        %1222 = vmatpush1.msra.mxu0 0.0
        %1223 = vmatprep.subr.mxu0 0.0
        %1224 = vmatpush1.msra.mxu0 0.0
        %1225 = vmatprep.subr.mxu0 0.0
        %1226 = vmatpush1.msra.mxu0 0.0
        %1227 = vmatprep.subr.mxu0 0.0
        %1228 = vmatpush1.msra.mxu0 0.0
        %1229 = vmatprep.subr.mxu0 0.0
        %1230 = vmatpush1.msra.mxu0 0.0
        %1231 = vmatprep.subr.mxu0 0.0
        %1232 = vmatpush1.msra.mxu0 0.0
        %1233 = vmatprep.subr.mxu0 0.0
        %1234 = vmatpush1.msra.mxu0 0.0
        %1235 = vmatprep.subr.mxu0 0.0
        %1236 = vmatpush1.msra.mxu0 0.0
        %1237 = vmatprep.subr.mxu0 0.0
        %1238 = vmatpush1.msra.mxu0 0.0
        %1239 = vmatprep.subr.mxu0 0.0
        %1240 = vmatpush1.msra.mxu0 0.0
        %1241 = vmatprep.subr.mxu0 0.0
        %1242 = vmatpush1.msra.mxu0 0.0
        %1243 = vmatprep.subr.mxu0 0.0
        %1244 = vmatpush1.msra.mxu0 0.0
        %1245 = vmatprep.subr.mxu0 0.0
        %1246 = vmatpush1.msra.mxu0 0.0
        %1247 = vmatprep.subr.mxu0 0.0
        %1248 = vmatpush1.msra.mxu0 0.0
        %1249 = vmatprep.subr.mxu0 0.0
        %1250 = vmatpush1.msra.mxu0 0.0
        %1251 = vmatprep.subr.mxu0 0.0
        %1252 = vmatpush1.msra.mxu0 0.0
        %1253 = vmatprep.subr.mxu0 0.0
        %1254 = vmatpush1.msra.mxu0 0.0
        %1255 = vmatprep.subr.mxu0 0.0
        %1256 = vmatpush1.msra.mxu0 0.0
        %1257 = vmatprep.subr.mxu0 0.0
        %1258 = vmatpush1.msra.mxu0 0.0
        %1259 = vmatprep.subr.mxu0 0.0
        %1260 = vmatpush1.msra.mxu0 0.0
        %1261 = vmatprep.subr.mxu0 0.0
        %1262 = vmatpush1.msra.mxu0 0.0
        %1263 = vmatprep.subr.mxu0 0.0
        %1264 = vmatpush1.msra.mxu0 0.0
        %1265 = vmatprep.subr.mxu0 0.0
        %1266 = vmatpush1.msra.mxu0 0.0
        %1267 = vmatprep.mubr.f32.mxu0 0.0
        %v1268 = vand.u32 %v896, 4294901760
        %v1269 = vsub.f32 %v896, %v1268
        %v1270 = vand.u32 %v1269, 4294901760
        %1271 = vmatmul.mubr.f32.gmra.mrb[0].mxu0 %v1270
        %v1272 = vpop.f32.mrb[0].mxu0
        %v1273 = vadd.f32 %v1178, %v1272
        %v1274 = vpop.f32.mrb[0].mxu0
        %1275 = vmatprep.mubr.f32.mxu0 0.0
        %v1276 = vand.u32 %v899, 4294901760
        %v1277 = vsub.f32 %v899, %v1276
        %v1278 = vand.u32 %v1277, 4294901760
        %1279 = vmatmul.mubr.f32.gmra.mrb[0].mxu0 %v1278
        %v1280 = vpop.f32.mrb[0].mxu0
        %v1281 = vadd.f32 %v1185, %v1280
        %v1282 = vpop.f32.mrb[0].mxu0
        %1283 = vmatprep.mubr.f32.mxu0 0.0
        %v1284 = vand.u32 %v902, 4294901760
        %v1285 = vsub.f32 %v902, %v1284
        %v1286 = vand.u32 %v1285, 4294901760
        %1287 = vmatmul.mubr.f32.gmra.mrb[0].mxu0 %v1286
        %v1288 = vpop.f32.mrb[0].mxu0
        %v1289 = vadd.f32 %v1192, %v1288
        %v1290 = vpop.f32.mrb[0].mxu0
        %1291 = vmatprep.mubr.f32.mxu0 0.0
        %v1292 = vand.u32 %v905, 4294901760
        %v1293 = vsub.f32 %v905, %v1292
        %v1294 = vand.u32 %v1293, 4294901760
        %1295 = vmatmul.mubr.f32.gmra.mrb[0].mxu0 %v1294
        %v1296 = vpop.f32.mrb[0].mxu0
        %v1297 = vadd.f32 %v1199, %v1296
        %v1298 = vpop.f32.mrb[0].mxu0
        %1299 = vdwg.mxu0
        %1300 = vmatprep.subr.mxu0 0.0
        %v1301 = vand.u32 %v297, 4294901760
        %v1302 = vsub.f32 %v297, %v1301
        %v1303 = vand.u32 %v1302, 4294901760
        %1304 = vmatpush1.msra.mxu0 %v1303
        %1305 = vmatprep.subr.mxu0 0.0
        %1306 = vmatpush1.msra.mxu0 0.0
        %1307 = vmatprep.subr.mxu0 0.0
        %1308 = vmatpush1.msra.mxu0 0.0
        %1309 = vmatprep.subr.mxu0 0.0
        %1310 = vmatpush1.msra.mxu0 0.0
        %1311 = vmatprep.subr.mxu0 0.0
        %1312 = vmatpush1.msra.mxu0 0.0
        %1313 = vmatprep.subr.mxu0 0.0
        %1314 = vmatpush1.msra.mxu0 0.0
        %1315 = vmatprep.subr.mxu0 0.0
        %1316 = vmatpush1.msra.mxu0 0.0
        %1317 = vmatprep.subr.mxu0 0.0
        %1318 = vmatpush1.msra.mxu0 0.0
        %1319 = vmatprep.subr.mxu0 0.0
        %1320 = vmatpush1.msra.mxu0 0.0
        %1321 = vmatprep.subr.mxu0 0.0
        %1322 = vmatpush1.msra.mxu0 0.0
        %1323 = vmatprep.subr.mxu0 0.0
        %1324 = vmatpush1.msra.mxu0 0.0
        %1325 = vmatprep.subr.mxu0 0.0
        %1326 = vmatpush1.msra.mxu0 0.0
        %1327 = vmatprep.subr.mxu0 0.0
        %1328 = vmatpush1.msra.mxu0 0.0
        %1329 = vmatprep.subr.mxu0 0.0
        %1330 = vmatpush1.msra.mxu0 0.0
        %1331 = vmatprep.subr.mxu0 0.0
        %1332 = vmatpush1.msra.mxu0 0.0
        %1333 = vmatprep.subr.mxu0 0.0
        %1334 = vmatpush1.msra.mxu0 0.0
        %1335 = vmatprep.subr.mxu0 0.0
        %1336 = vmatpush1.msra.mxu0 0.0
        %1337 = vmatprep.subr.mxu0 0.0
        %1338 = vmatpush1.msra.mxu0 0.0
        %1339 = vmatprep.subr.mxu0 0.0
        %1340 = vmatpush1.msra.mxu0 0.0
        %1341 = vmatprep.subr.mxu0 0.0
        %1342 = vmatpush1.msra.mxu0 0.0
        %1343 = vmatprep.subr.mxu0 0.0
        %1344 = vmatpush1.msra.mxu0 0.0
        %1345 = vmatprep.subr.mxu0 0.0
        %1346 = vmatpush1.msra.mxu0 0.0
        %1347 = vmatprep.subr.mxu0 0.0
        %1348 = vmatpush1.msra.mxu0 0.0
        %1349 = vmatprep.subr.mxu0 0.0
        %1350 = vmatpush1.msra.mxu0 0.0
        %1351 = vmatprep.subr.mxu0 0.0
        %1352 = vmatpush1.msra.mxu0 0.0
        %1353 = vmatprep.subr.mxu0 0.0
        %1354 = vmatpush1.msra.mxu0 0.0
        %1355 = vmatprep.subr.mxu0 0.0
        %1356 = vmatpush1.msra.mxu0 0.0
        %1357 = vmatprep.subr.mxu0 0.0
        %1358 = vmatpush1.msra.mxu0 0.0
        %1359 = vmatprep.subr.mxu0 0.0
        %1360 = vmatpush1.msra.mxu0 0.0
        %1361 = vmatprep.subr.mxu0 0.0
        %1362 = vmatpush1.msra.mxu0 0.0
        %1363 = vmatprep.subr.mxu0 0.0
        %1364 = vmatpush1.msra.mxu0 0.0
        %1365 = vmatprep.subr.mxu0 0.0
        %1366 = vmatpush1.msra.mxu0 0.0
        %1367 = vmatprep.mubr.f32.mxu0 0.0
        %v1368 = vand.u32 %v896, 4294901760
        %1369 = vmatmul.mubr.f32.gmra.mrb[0].mxu0 %v1368
        %v1370 = vpop.f32.mrb[0].mxu0
        %v1371 = vadd.f32 %v1273, %v1370
        %v1372 = vpop.f32.mrb[0].mxu0
        %1373 = vmatprep.mubr.f32.mxu0 0.0
        %v1374 = vand.u32 %v899, 4294901760
        %1375 = vmatmul.mubr.f32.gmra.mrb[0].mxu0 %v1374
        %v1376 = vpop.f32.mrb[0].mxu0
        %v1377 = vadd.f32 %v1281, %v1376
        %v1378 = vpop.f32.mrb[0].mxu0
        %1379 = vmatprep.mubr.f32.mxu0 0.0
        %v1380 = vand.u32 %v902, 4294901760
        %1381 = vmatmul.mubr.f32.gmra.mrb[0].mxu0 %v1380
        %v1382 = vpop.f32.mrb[0].mxu0
        %v1383 = vadd.f32 %v1289, %v1382
        %v1384 = vpop.f32.mrb[0].mxu0
        %1385 = vmatprep.mubr.f32.mxu0 0.0
        %v1386 = vand.u32 %v905, 4294901760
        %1387 = vmatmul.mubr.f32.gmra.mrb[0].mxu0 %v1386
        %v1388 = vpop.f32.mrb[0].mxu0
        %v1389 = vadd.f32 %v1297, %v1388
        %v1390 = vpop.f32.mrb[0].mxu0
        %1391 = vdwg.mxu0
        %1392 = vmatprep.subr.mxu0 0.0
        %v1393 = vand.u32 %v297, 4294901760
        %1394 = vmatpush1.msra.mxu0 %v1393
        %1395 = vmatprep.subr.mxu0 0.0
        %1396 = vmatpush1.msra.mxu0 0.0
        %1397 = vmatprep.subr.mxu0 0.0
        %1398 = vmatpush1.msra.mxu0 0.0
        %1399 = vmatprep.subr.mxu0 0.0
        %1400 = vmatpush1.msra.mxu0 0.0
        %1401 = vmatprep.subr.mxu0 0.0
        %1402 = vmatpush1.msra.mxu0 0.0
        %1403 = vmatprep.subr.mxu0 0.0
        %1404 = vmatpush1.msra.mxu0 0.0
        %1405 = vmatprep.subr.mxu0 0.0
        %1406 = vmatpush1.msra.mxu0 0.0
        %1407 = vmatprep.subr.mxu0 0.0
        %1408 = vmatpush1.msra.mxu0 0.0
        %1409 = vmatprep.subr.mxu0 0.0
        %1410 = vmatpush1.msra.mxu0 0.0
        %1411 = vmatprep.subr.mxu0 0.0
        %1412 = vmatpush1.msra.mxu0 0.0
        %1413 = vmatprep.subr.mxu0 0.0
        %1414 = vmatpush1.msra.mxu0 0.0
        %1415 = vmatprep.subr.mxu0 0.0
        %1416 = vmatpush1.msra.mxu0 0.0
        %1417 = vmatprep.subr.mxu0 0.0
        %1418 = vmatpush1.msra.mxu0 0.0
        %1419 = vmatprep.subr.mxu0 0.0
        %1420 = vmatpush1.msra.mxu0 0.0
        %1421 = vmatprep.subr.mxu0 0.0
        %1422 = vmatpush1.msra.mxu0 0.0
        %1423 = vmatprep.subr.mxu0 0.0
        %1424 = vmatpush1.msra.mxu0 0.0
        %1425 = vmatprep.subr.mxu0 0.0
        %1426 = vmatpush1.msra.mxu0 0.0
        %1427 = vmatprep.subr.mxu0 0.0
        %1428 = vmatpush1.msra.mxu0 0.0
        %1429 = vmatprep.subr.mxu0 0.0
        %1430 = vmatpush1.msra.mxu0 0.0
        %1431 = vmatprep.subr.mxu0 0.0
        %1432 = vmatpush1.msra.mxu0 0.0
        %1433 = vmatprep.subr.mxu0 0.0
        %1434 = vmatpush1.msra.mxu0 0.0
        %1435 = vmatprep.subr.mxu0 0.0
        %1436 = vmatpush1.msra.mxu0 0.0
        %1437 = vmatprep.subr.mxu0 0.0
        %1438 = vmatpush1.msra.mxu0 0.0
        %1439 = vmatprep.subr.mxu0 0.0
        %1440 = vmatpush1.msra.mxu0 0.0
        %1441 = vmatprep.subr.mxu0 0.0
        %1442 = vmatpush1.msra.mxu0 0.0
        %1443 = vmatprep.subr.mxu0 0.0
        %1444 = vmatpush1.msra.mxu0 0.0
        %1445 = vmatprep.subr.mxu0 0.0
        %1446 = vmatpush1.msra.mxu0 0.0
        %1447 = vmatprep.subr.mxu0 0.0
        %1448 = vmatpush1.msra.mxu0 0.0
        %1449 = vmatprep.subr.mxu0 0.0
        %1450 = vmatpush1.msra.mxu0 0.0
        %1451 = vmatprep.subr.mxu0 0.0
        %1452 = vmatpush1.msra.mxu0 0.0
        %1453 = vmatprep.subr.mxu0 0.0
        %1454 = vmatpush1.msra.mxu0 0.0
        %1455 = vmatprep.subr.mxu0 0.0
        %1456 = vmatpush1.msra.mxu0 0.0
        %1457 = vmatprep.mubr.f32.mxu0 0.0
        %v1458 = vand.u32 %v896, 4294901760
        %1459 = vmatmul.mubr.f32.gmra.mrb[0].mxu0 %v1458
        %v1460 = vpop.f32.mrb[0].mxu0
        %v1461 = vadd.f32 %v1371, %v1460
        %v1462 = vpop.f32.mrb[0].mxu0
        %1463 = vmatprep.mubr.f32.mxu0 0.0
        %v1464 = vand.u32 %v899, 4294901760
        %1465 = vmatmul.mubr.f32.gmra.mrb[0].mxu0 %v1464
        %v1466 = vpop.f32.mrb[0].mxu0
        %v1467 = vadd.f32 %v1377, %v1466
        %v1468 = vpop.f32.mrb[0].mxu0
        %1469 = vmatprep.mubr.f32.mxu0 0.0
        %v1470 = vand.u32 %v902, 4294901760
        %1471 = vmatmul.mubr.f32.gmra.mrb[0].mxu0 %v1470
        %v1472 = vpop.f32.mrb[0].mxu0
        %v1473 = vadd.f32 %v1383, %v1472
        %v1474 = vpop.f32.mrb[0].mxu0
        %1475 = vmatprep.mubr.f32.mxu0 0.0
        %v1476 = vand.u32 %v905, 4294901760
        %1477 = vmatmul.mubr.f32.gmra.mrb[0].mxu0 %v1476
        %v1478 = vpop.f32.mrb[0].mxu0
        %v1479 = vadd.f32 %v1389, %v1478
        %v1480 = vpop.f32.mrb[0].mxu0
        %1481 = vdwg.mxu0
        %v1482 = vld [vmem:[%s3] sm:$0x1]
        %v1483 = vlaneseq
        %v1484 = vshrl.u32 %v1483, 7
        %v1485 = vsub.s32 0, %v1484
        %v1486 = vrot.slane %v1482, %v1485
        %v1487 = vadd.f32 %v1461, %v1486
        %v1488 = vadd.f32 %v1467, %v1486
        %v1489 = vadd.f32 %v1473, %v1486
        %v1490 = vadd.f32 %v1479, %v1486
        %v1491 = vmax.f32 %v1487, 0.0
        %v1492 = vmax.f32 %v1488, 0.0
        %v1493 = vmax.f32 %v1489, 0.0
        %v1494 = vmax.f32 %v1490, 0.0
        %v1495 = vld [vmem:[#allocation2] sm:$0xff]
        %v1496 = vld [vmem:[#allocation2 + $0x8] sm:$0xff]
        %v1497 = vld [vmem:[#allocation2 + $0x10] sm:$0xff]
        %v1498 = vld [vmem:[#allocation2 + $0x18] sm:$0xff]
        %v1499 = vld [vmem:[#allocation2 + $0x20] sm:$0xff]
        %v1500 = vld [vmem:[#allocation2 + $0x28] sm:$0xff]
        %v1501 = vld [vmem:[#allocation2 + $0x30] sm:$0xff]
        %v1502 = vld [vmem:[#allocation2 + $0x38] sm:$0xff]
        %v1503 = vld [vmem:[#allocation2 + $0x40] sm:$0xff]
        %v1504 = vld [vmem:[#allocation2 + $0x48] sm:$0xff]
        %v1505 = vld [vmem:[#allocation2 + $0x50] sm:$0xff]
        %v1506 = vld [vmem:[#allocation2 + $0x58] sm:$0xff]
        %v1507 = vld [vmem:[#allocation2 + $0x60] sm:$0xff]
        %v1508 = vld [vmem:[#allocation2 + $0x68] sm:$0xff]
        %v1509 = vld [vmem:[#allocation2 + $0x70] sm:$0xff]
        %v1510 = vld [vmem:[#allocation2 + $0x78] sm:$0xff]
        %s1511 = scalar_lea.vmem [#allocation2], 128
        %v1512 = vld [vmem:[%s1511] sm:$0xff]
        %v1513 = vld [vmem:[%s1511 + $0x8] sm:$0xff]
        %v1514 = vld [vmem:[%s1511 + $0x10] sm:$0xff]
        %v1515 = vld [vmem:[%s1511 + $0x18] sm:$0xff]
        %v1516 = vld [vmem:[%s1511 + $0x20] sm:$0xff]
        %v1517 = vld [vmem:[%s1511 + $0x28] sm:$0xff]
        %v1518 = vld [vmem:[%s1511 + $0x30] sm:$0xff]
        %v1519 = vld [vmem:[%s1511 + $0x38] sm:$0xff]
        %v1520 = vld [vmem:[%s1511 + $0x40] sm:$0xff]
        %v1521 = vld [vmem:[%s1511 + $0x48] sm:$0xff]
        %v1522 = vld [vmem:[%s1511 + $0x50] sm:$0xff]
        %v1523 = vld [vmem:[%s1511 + $0x58] sm:$0xff]
        %v1524 = vld [vmem:[%s1511 + $0x60] sm:$0xff]
        %v1525 = vld [vmem:[%s1511 + $0x68] sm:$0xff]
        %v1526 = vld [vmem:[%s1511 + $0x70] sm:$0xff]
        %v1527 = vld [vmem:[%s1511 + $0x78] sm:$0xff]
        %vm1531 = vcmask 1046528
        %v1532 = vrot.slane %v1491, 1
        %v1533 = vrot.slane %v1492, 1
        %v1534 = vsel %vm1531, %v1532, %v1533
        %v1535 = vrot.slane %v1493, 1
        %v1536 = vsel %vm1531, %v1533, %v1535
        %1540 = vmatprep.subr.mxu0 0.0
        %v1541 = vand.u32 %v1512, 4294901760
        %1542 = vmatpush1.msra.mxu0 %v1541
        %1543 = vmatprep.subr.mxu0 0.0
        %v1544 = vand.u32 %v1513, 4294901760
        %1545 = vmatpush1.msra.mxu0 %v1544
        %1546 = vmatprep.subr.mxu0 0.0
        %v1547 = vand.u32 %v1514, 4294901760
        %1548 = vmatpush1.msra.mxu0 %v1547
        %1549 = vmatprep.subr.mxu0 0.0
        %v1550 = vand.u32 %v1515, 4294901760
        %1551 = vmatpush1.msra.mxu0 %v1550
        %1552 = vmatprep.subr.mxu0 0.0
        %v1553 = vand.u32 %v1516, 4294901760
        %1554 = vmatpush1.msra.mxu0 %v1553
        %1555 = vmatprep.subr.mxu0 0.0
        %v1556 = vand.u32 %v1517, 4294901760
        %1557 = vmatpush1.msra.mxu0 %v1556
        %1558 = vmatprep.subr.mxu0 0.0
        %v1559 = vand.u32 %v1518, 4294901760
        %1560 = vmatpush1.msra.mxu0 %v1559
        %1561 = vmatprep.subr.mxu0 0.0
        %v1562 = vand.u32 %v1519, 4294901760
        %1563 = vmatpush1.msra.mxu0 %v1562
        %1564 = vmatprep.subr.mxu0 0.0
        %v1565 = vand.u32 %v1520, 4294901760
        %1566 = vmatpush1.msra.mxu0 %v1565
        %1567 = vmatprep.subr.mxu0 0.0
        %v1568 = vand.u32 %v1521, 4294901760
        %1569 = vmatpush1.msra.mxu0 %v1568
        %1570 = vmatprep.subr.mxu0 0.0
        %v1571 = vand.u32 %v1522, 4294901760
        %1572 = vmatpush1.msra.mxu0 %v1571
        %1573 = vmatprep.subr.mxu0 0.0
        %v1574 = vand.u32 %v1523, 4294901760
        %1575 = vmatpush1.msra.mxu0 %v1574
        %1576 = vmatprep.subr.mxu0 0.0
        %v1577 = vand.u32 %v1524, 4294901760
        %1578 = vmatpush1.msra.mxu0 %v1577
        %1579 = vmatprep.subr.mxu0 0.0
        %v1580 = vand.u32 %v1525, 4294901760
        %1581 = vmatpush1.msra.mxu0 %v1580
        %1582 = vmatprep.subr.mxu0 0.0
        %v1583 = vand.u32 %v1526, 4294901760
        %1584 = vmatpush1.msra.mxu0 %v1583
        %1585 = vmatprep.subr.mxu0 0.0
        %v1586 = vand.u32 %v1527, 4294901760
        %1587 = vmatpush1.msra.mxu0 %v1586
        %1588 = vmatprep.subr.mxu0 0.0
        %1589 = vmatpush1.msra.mxu0 0.0
        %1590 = vmatprep.subr.mxu0 0.0
        %1591 = vmatpush1.msra.mxu0 0.0
        %1592 = vmatprep.subr.mxu0 0.0
        %1593 = vmatpush1.msra.mxu0 0.0
        %1594 = vmatprep.subr.mxu0 0.0
        %1595 = vmatpush1.msra.mxu0 0.0
        %1596 = vmatprep.subr.mxu0 0.0
        %1597 = vmatpush1.msra.mxu0 0.0
        %1598 = vmatprep.subr.mxu0 0.0
        %1599 = vmatpush1.msra.mxu0 0.0
        %1600 = vmatprep.subr.mxu0 0.0
        %1601 = vmatpush1.msra.mxu0 0.0
        %1602 = vmatprep.subr.mxu0 0.0
        %1603 = vmatpush1.msra.mxu0 0.0
        %1604 = vmatprep.subr.mxu0 0.0
        %1605 = vmatpush1.msra.mxu0 0.0
        %1606 = vmatprep.subr.mxu0 0.0
        %1607 = vmatpush1.msra.mxu0 0.0
        %1608 = vmatprep.subr.mxu0 0.0
        %1609 = vmatpush1.msra.mxu0 0.0
        %1610 = vmatprep.subr.mxu0 0.0
        %1611 = vmatpush1.msra.mxu0 0.0
        %1612 = vmatprep.subr.mxu0 0.0
        %1613 = vmatpush1.msra.mxu0 0.0
        %1614 = vmatprep.subr.mxu0 0.0
        %1615 = vmatpush1.msra.mxu0 0.0
        %1616 = vmatprep.subr.mxu0 0.0
        %1617 = vmatpush1.msra.mxu0 0.0
        %1618 = vmatprep.subr.mxu0 0.0
        %1619 = vmatpush1.msra.mxu0 0.0
        %1620 = vmatprep.mubr.f32.mxu0 0.0
        %v1621 = vand.u32 %v1534, 4294901760
        %v1622 = vsub.f32 %v1534, %v1621
        %v1623 = vand.u32 %v1622, 4294901760
        %v1624 = vsub.f32 %v1622, %v1623
        %v1625 = vand.u32 %v1624, 4294901760
        %1626 = vmatmul.mubr.f32.gmra.mrb[0].mxu0 %v1625
        %v1627 = vpop.f32.mrb[0].mxu0
        %v1628 = vadd.f32 0.0, %v1627
        %v1629 = vpop.f32.mrb[0].mxu0
        %1630 = vmatprep.mubr.f32.mxu0 0.0
        %v1631 = vand.u32 %v1536, 4294901760
        %v1632 = vsub.f32 %v1536, %v1631
        %v1633 = vand.u32 %v1632, 4294901760
        %v1634 = vsub.f32 %v1632, %v1633
        %v1635 = vand.u32 %v1634, 4294901760
        %1636 = vmatmul.mubr.f32.gmra.mrb[0].mxu0 %v1635
        %v1637 = vpop.f32.mrb[0].mxu0
        %v1638 = vadd.f32 0.0, %v1637
        %v1639 = vpop.f32.mrb[0].mxu0
        %1640 = vmatprep.mubr.f32.mxu0 0.0
        %v1641 = vand.u32 %v1535, 4294901760
        %v1642 = vsub.f32 %v1535, %v1641
        %v1643 = vand.u32 %v1642, 4294901760
        %v1644 = vsub.f32 %v1642, %v1643
        %v1645 = vand.u32 %v1644, 4294901760
        %1646 = vmatmul.mubr.f32.gmra.mrb[0].mxu0 %v1645
        %v1647 = vpop.f32.mrb[0].mxu0
        %v1648 = vadd.f32 0.0, %v1647
        %v1649 = vpop.f32.mrb[0].mxu0
        %1650 = vdwg.mxu0
        %1651 = vmatprep.subr.mxu0 0.0
        %v1652 = vand.u32 %v1512, 4294901760
        %v1653 = vsub.f32 %v1512, %v1652
        %v1654 = vand.u32 %v1653, 4294901760
        %v1655 = vsub.f32 %v1653, %v1654
        %v1656 = vand.u32 %v1655, 4294901760
        %1657 = vmatpush1.msra.mxu0 %v1656
        %1658 = vmatprep.subr.mxu0 0.0
        %v1659 = vand.u32 %v1513, 4294901760
        %v1660 = vsub.f32 %v1513, %v1659
        %v1661 = vand.u32 %v1660, 4294901760
        %v1662 = vsub.f32 %v1660, %v1661
        %v1663 = vand.u32 %v1662, 4294901760
        %1664 = vmatpush1.msra.mxu0 %v1663
        %1665 = vmatprep.subr.mxu0 0.0
        %v1666 = vand.u32 %v1514, 4294901760
        %v1667 = vsub.f32 %v1514, %v1666
        %v1668 = vand.u32 %v1667, 4294901760
        %v1669 = vsub.f32 %v1667, %v1668
        %v1670 = vand.u32 %v1669, 4294901760
        %1671 = vmatpush1.msra.mxu0 %v1670
        %1672 = vmatprep.subr.mxu0 0.0
        %v1673 = vand.u32 %v1515, 4294901760
        %v1674 = vsub.f32 %v1515, %v1673
        %v1675 = vand.u32 %v1674, 4294901760
        %v1676 = vsub.f32 %v1674, %v1675
        %v1677 = vand.u32 %v1676, 4294901760
        %1678 = vmatpush1.msra.mxu0 %v1677
        %1679 = vmatprep.subr.mxu0 0.0
        %v1680 = vand.u32 %v1516, 4294901760
        %v1681 = vsub.f32 %v1516, %v1680
        %v1682 = vand.u32 %v1681, 4294901760
        %v1683 = vsub.f32 %v1681, %v1682
        %v1684 = vand.u32 %v1683, 4294901760
        %1685 = vmatpush1.msra.mxu0 %v1684
        %1686 = vmatprep.subr.mxu0 0.0
        %v1687 = vand.u32 %v1517, 4294901760
        %v1688 = vsub.f32 %v1517, %v1687
        %v1689 = vand.u32 %v1688, 4294901760
        %v1690 = vsub.f32 %v1688, %v1689
        %v1691 = vand.u32 %v1690, 4294901760
        %1692 = vmatpush1.msra.mxu0 %v1691
        %1693 = vmatprep.subr.mxu0 0.0
        %v1694 = vand.u32 %v1518, 4294901760
        %v1695 = vsub.f32 %v1518, %v1694
        %v1696 = vand.u32 %v1695, 4294901760
        %v1697 = vsub.f32 %v1695, %v1696
        %v1698 = vand.u32 %v1697, 4294901760
        %1699 = vmatpush1.msra.mxu0 %v1698
        %1700 = vmatprep.subr.mxu0 0.0
        %v1701 = vand.u32 %v1519, 4294901760
        %v1702 = vsub.f32 %v1519, %v1701
        %v1703 = vand.u32 %v1702, 4294901760
        %v1704 = vsub.f32 %v1702, %v1703
        %v1705 = vand.u32 %v1704, 4294901760
        %1706 = vmatpush1.msra.mxu0 %v1705
        %1707 = vmatprep.subr.mxu0 0.0
        %v1708 = vand.u32 %v1520, 4294901760
        %v1709 = vsub.f32 %v1520, %v1708
        %v1710 = vand.u32 %v1709, 4294901760
        %v1711 = vsub.f32 %v1709, %v1710
        %v1712 = vand.u32 %v1711, 4294901760
        %1713 = vmatpush1.msra.mxu0 %v1712
        %1714 = vmatprep.subr.mxu0 0.0
        %v1715 = vand.u32 %v1521, 4294901760
        %v1716 = vsub.f32 %v1521, %v1715
        %v1717 = vand.u32 %v1716, 4294901760
        %v1718 = vsub.f32 %v1716, %v1717
        %v1719 = vand.u32 %v1718, 4294901760
        %1720 = vmatpush1.msra.mxu0 %v1719
        %1721 = vmatprep.subr.mxu0 0.0
        %v1722 = vand.u32 %v1522, 4294901760
        %v1723 = vsub.f32 %v1522, %v1722
        %v1724 = vand.u32 %v1723, 4294901760
        %v1725 = vsub.f32 %v1723, %v1724
        %v1726 = vand.u32 %v1725, 4294901760
        %1727 = vmatpush1.msra.mxu0 %v1726
        %1728 = vmatprep.subr.mxu0 0.0
        %v1729 = vand.u32 %v1523, 4294901760
        %v1730 = vsub.f32 %v1523, %v1729
        %v1731 = vand.u32 %v1730, 4294901760
        %v1732 = vsub.f32 %v1730, %v1731
        %v1733 = vand.u32 %v1732, 4294901760
        %1734 = vmatpush1.msra.mxu0 %v1733
        %1735 = vmatprep.subr.mxu0 0.0
        %v1736 = vand.u32 %v1524, 4294901760
        %v1737 = vsub.f32 %v1524, %v1736
        %v1738 = vand.u32 %v1737, 4294901760
        %v1739 = vsub.f32 %v1737, %v1738
        %v1740 = vand.u32 %v1739, 4294901760
        %1741 = vmatpush1.msra.mxu0 %v1740
        %1742 = vmatprep.subr.mxu0 0.0
        %v1743 = vand.u32 %v1525, 4294901760
        %v1744 = vsub.f32 %v1525, %v1743
        %v1745 = vand.u32 %v1744, 4294901760
        %v1746 = vsub.f32 %v1744, %v1745
        %v1747 = vand.u32 %v1746, 4294901760
        %1748 = vmatpush1.msra.mxu0 %v1747
        %1749 = vmatprep.subr.mxu0 0.0
        %v1750 = vand.u32 %v1526, 4294901760
        %v1751 = vsub.f32 %v1526, %v1750
        %v1752 = vand.u32 %v1751, 4294901760
        %v1753 = vsub.f32 %v1751, %v1752
        %v1754 = vand.u32 %v1753, 4294901760
        %1755 = vmatpush1.msra.mxu0 %v1754
        %1756 = vmatprep.subr.mxu0 0.0
        %v1757 = vand.u32 %v1527, 4294901760
        %v1758 = vsub.f32 %v1527, %v1757
        %v1759 = vand.u32 %v1758, 4294901760
        %v1760 = vsub.f32 %v1758, %v1759
        %v1761 = vand.u32 %v1760, 4294901760
        %1762 = vmatpush1.msra.mxu0 %v1761
        %1763 = vmatprep.subr.mxu0 0.0
        %1764 = vmatpush1.msra.mxu0 0.0
        %1765 = vmatprep.subr.mxu0 0.0
        %1766 = vmatpush1.msra.mxu0 0.0
        %1767 = vmatprep.subr.mxu0 0.0
        %1768 = vmatpush1.msra.mxu0 0.0
        %1769 = vmatprep.subr.mxu0 0.0
        %1770 = vmatpush1.msra.mxu0 0.0
        %1771 = vmatprep.subr.mxu0 0.0
        %1772 = vmatpush1.msra.mxu0 0.0
        %1773 = vmatprep.subr.mxu0 0.0
        %1774 = vmatpush1.msra.mxu0 0.0
        %1775 = vmatprep.subr.mxu0 0.0
        %1776 = vmatpush1.msra.mxu0 0.0
        %1777 = vmatprep.subr.mxu0 0.0
        %1778 = vmatpush1.msra.mxu0 0.0
        %1779 = vmatprep.subr.mxu0 0.0
        %1780 = vmatpush1.msra.mxu0 0.0
        %1781 = vmatprep.subr.mxu0 0.0
        %1782 = vmatpush1.msra.mxu0 0.0
        %1783 = vmatprep.subr.mxu0 0.0
        %1784 = vmatpush1.msra.mxu0 0.0
        %1785 = vmatprep.subr.mxu0 0.0
        %1786 = vmatpush1.msra.mxu0 0.0
        %1787 = vmatprep.subr.mxu0 0.0
        %1788 = vmatpush1.msra.mxu0 0.0
        %1789 = vmatprep.subr.mxu0 0.0
        %1790 = vmatpush1.msra.mxu0 0.0
        %1791 = vmatprep.subr.mxu0 0.0
        %1792 = vmatpush1.msra.mxu0 0.0
        %1793 = vmatprep.subr.mxu0 0.0
        %1794 = vmatpush1.msra.mxu0 0.0
        %1795 = vmatprep.mubr.f32.mxu0 0.0
        %v1796 = vand.u32 %v1534, 4294901760
        %1797 = vmatmul.mubr.f32.gmra.mrb[0].mxu0 %v1796
        %v1798 = vpop.f32.mrb[0].mxu0
        %v1799 = vadd.f32 %v1628, %v1798
        %v1800 = vpop.f32.mrb[0].mxu0
        %1801 = vmatprep.mubr.f32.mxu0 0.0
        %v1802 = vand.u32 %v1536, 4294901760
        %1803 = vmatmul.mubr.f32.gmra.mrb[0].mxu0 %v1802
        %v1804 = vpop.f32.mrb[0].mxu0
        %v1805 = vadd.f32 %v1638, %v1804
        %v1806 = vpop.f32.mrb[0].mxu0
        %1807 = vmatprep.mubr.f32.mxu0 0.0
        %v1808 = vand.u32 %v1535, 4294901760
        %1809 = vmatmul.mubr.f32.gmra.mrb[0].mxu0 %v1808
        %v1810 = vpop.f32.mrb[0].mxu0
        %v1811 = vadd.f32 %v1648, %v1810
        %v1812 = vpop.f32.mrb[0].mxu0
        %1813 = vdwg.mxu0
        %1814 = vmatprep.subr.mxu0 0.0
        %v1815 = vand.u32 %v1512, 4294901760
        %v1816 = vsub.f32 %v1512, %v1815
        %1817 = vmatpush1.msra.mxu0 %v1816
        %1818 = vmatprep.subr.mxu0 0.0
        %v1819 = vand.u32 %v1513, 4294901760
        %v1820 = vsub.f32 %v1513, %v1819
        %1821 = vmatpush1.msra.mxu0 %v1820
        %1822 = vmatprep.subr.mxu0 0.0
        %v1823 = vand.u32 %v1514, 4294901760
        %v1824 = vsub.f32 %v1514, %v1823
        %1825 = vmatpush1.msra.mxu0 %v1824
        %1826 = vmatprep.subr.mxu0 0.0
        %v1827 = vand.u32 %v1515, 4294901760
        %v1828 = vsub.f32 %v1515, %v1827
        %1829 = vmatpush1.msra.mxu0 %v1828
        %1830 = vmatprep.subr.mxu0 0.0
        %v1831 = vand.u32 %v1516, 4294901760
        %v1832 = vsub.f32 %v1516, %v1831
        %1833 = vmatpush1.msra.mxu0 %v1832
        %1834 = vmatprep.subr.mxu0 0.0
        %v1835 = vand.u32 %v1517, 4294901760
        %v1836 = vsub.f32 %v1517, %v1835
        %1837 = vmatpush1.msra.mxu0 %v1836
        %1838 = vmatprep.subr.mxu0 0.0
        %v1839 = vand.u32 %v1518, 4294901760
        %v1840 = vsub.f32 %v1518, %v1839
        %1841 = vmatpush1.msra.mxu0 %v1840
        %1842 = vmatprep.subr.mxu0 0.0
        %v1843 = vand.u32 %v1519, 4294901760
        %v1844 = vsub.f32 %v1519, %v1843
        %1845 = vmatpush1.msra.mxu0 %v1844
        %1846 = vmatprep.subr.mxu0 0.0
        %v1847 = vand.u32 %v1520, 4294901760
        %v1848 = vsub.f32 %v1520, %v1847
        %1849 = vmatpush1.msra.mxu0 %v1848
        %1850 = vmatprep.subr.mxu0 0.0
        %v1851 = vand.u32 %v1521, 4294901760
        %v1852 = vsub.f32 %v1521, %v1851
        %1853 = vmatpush1.msra.mxu0 %v1852
        %1854 = vmatprep.subr.mxu0 0.0
        %v1855 = vand.u32 %v1522, 4294901760
        %v1856 = vsub.f32 %v1522, %v1855
        %1857 = vmatpush1.msra.mxu0 %v1856
        %1858 = vmatprep.subr.mxu0 0.0
        %v1859 = vand.u32 %v1523, 4294901760
        %v1860 = vsub.f32 %v1523, %v1859
        %1861 = vmatpush1.msra.mxu0 %v1860
        %1862 = vmatprep.subr.mxu0 0.0
        %v1863 = vand.u32 %v1524, 4294901760
        %v1864 = vsub.f32 %v1524, %v1863
        %1865 = vmatpush1.msra.mxu0 %v1864
        %1866 = vmatprep.subr.mxu0 0.0
        %v1867 = vand.u32 %v1525, 4294901760
        %v1868 = vsub.f32 %v1525, %v1867
        %1869 = vmatpush1.msra.mxu0 %v1868
        %1870 = vmatprep.subr.mxu0 0.0
        %v1871 = vand.u32 %v1526, 4294901760
        %v1872 = vsub.f32 %v1526, %v1871
        %1873 = vmatpush1.msra.mxu0 %v1872
        %1874 = vmatprep.subr.mxu0 0.0
        %v1875 = vand.u32 %v1527, 4294901760
        %v1876 = vsub.f32 %v1527, %v1875
        %1877 = vmatpush1.msra.mxu0 %v1876
        %1878 = vmatprep.subr.mxu0 0.0
        %1879 = vmatpush1.msra.mxu0 0.0
        %1880 = vmatprep.subr.mxu0 0.0
        %1881 = vmatpush1.msra.mxu0 0.0
        %1882 = vmatprep.subr.mxu0 0.0
        %1883 = vmatpush1.msra.mxu0 0.0
        %1884 = vmatprep.subr.mxu0 0.0
        %1885 = vmatpush1.msra.mxu0 0.0
        %1886 = vmatprep.subr.mxu0 0.0
        %1887 = vmatpush1.msra.mxu0 0.0
        %1888 = vmatprep.subr.mxu0 0.0
        %1889 = vmatpush1.msra.mxu0 0.0
        %1890 = vmatprep.subr.mxu0 0.0
        %1891 = vmatpush1.msra.mxu0 0.0
        %1892 = vmatprep.subr.mxu0 0.0
        %1893 = vmatpush1.msra.mxu0 0.0
        %1894 = vmatprep.subr.mxu0 0.0
        %1895 = vmatpush1.msra.mxu0 0.0
        %1896 = vmatprep.subr.mxu0 0.0
        %1897 = vmatpush1.msra.mxu0 0.0
        %1898 = vmatprep.subr.mxu0 0.0
        %1899 = vmatpush1.msra.mxu0 0.0
        %1900 = vmatprep.subr.mxu0 0.0
        %1901 = vmatpush1.msra.mxu0 0.0
        %1902 = vmatprep.subr.mxu0 0.0
        %1903 = vmatpush1.msra.mxu0 0.0
        %1904 = vmatprep.subr.mxu0 0.0
        %1905 = vmatpush1.msra.mxu0 0.0
        %1906 = vmatprep.subr.mxu0 0.0
        %1907 = vmatpush1.msra.mxu0 0.0
        %1908 = vmatprep.subr.mxu0 0.0
        %1909 = vmatpush1.msra.mxu0 0.0
        %1910 = vmatprep.mubr.f32.mxu0 0.0
        %v1911 = vand.u32 %v1534, 4294901760
        %v1912 = vsub.f32 %v1534, %v1911
        %1913 = vmatmul.mubr.f32.gmra.mrb[0].mxu0 %v1912
        %v1914 = vpop.f32.mrb[0].mxu0
        %v1915 = vadd.f32 %v1799, %v1914
        %v1916 = vpop.f32.mrb[0].mxu0
        %1917 = vmatprep.mubr.f32.mxu0 0.0
        %v1918 = vand.u32 %v1536, 4294901760
        %v1919 = vsub.f32 %v1536, %v1918
        %1920 = vmatmul.mubr.f32.gmra.mrb[0].mxu0 %v1919
        %v1921 = vpop.f32.mrb[0].mxu0
        %v1922 = vadd.f32 %v1805, %v1921
        %v1923 = vpop.f32.mrb[0].mxu0
        %1924 = vmatprep.mubr.f32.mxu0 0.0
        %v1925 = vand.u32 %v1535, 4294901760
        %v1926 = vsub.f32 %v1535, %v1925
        %1927 = vmatmul.mubr.f32.gmra.mrb[0].mxu0 %v1926
        %v1928 = vpop.f32.mrb[0].mxu0
        %v1929 = vadd.f32 %v1811, %v1928
        %v1930 = vpop.f32.mrb[0].mxu0
        %1931 = vdwg.mxu0
        %1932 = vmatprep.subr.mxu0 0.0
        %v1933 = vand.u32 %v1512, 4294901760
        %1934 = vmatpush1.msra.mxu0 %v1933
        %1935 = vmatprep.subr.mxu0 0.0
        %v1936 = vand.u32 %v1513, 4294901760
        %1937 = vmatpush1.msra.mxu0 %v1936
        %1938 = vmatprep.subr.mxu0 0.0
        %v1939 = vand.u32 %v1514, 4294901760
        %1940 = vmatpush1.msra.mxu0 %v1939
        %1941 = vmatprep.subr.mxu0 0.0
        %v1942 = vand.u32 %v1515, 4294901760
        %1943 = vmatpush1.msra.mxu0 %v1942
        %1944 = vmatprep.subr.mxu0 0.0
        %v1945 = vand.u32 %v1516, 4294901760
        %1946 = vmatpush1.msra.mxu0 %v1945
        %1947 = vmatprep.subr.mxu0 0.0
        %v1948 = vand.u32 %v1517, 4294901760
        %1949 = vmatpush1.msra.mxu0 %v1948
        %1950 = vmatprep.subr.mxu0 0.0
        %v1951 = vand.u32 %v1518, 4294901760
        %1952 = vmatpush1.msra.mxu0 %v1951
        %1953 = vmatprep.subr.mxu0 0.0
        %v1954 = vand.u32 %v1519, 4294901760
        %1955 = vmatpush1.msra.mxu0 %v1954
        %1956 = vmatprep.subr.mxu0 0.0
        %v1957 = vand.u32 %v1520, 4294901760
        %1958 = vmatpush1.msra.mxu0 %v1957
        %1959 = vmatprep.subr.mxu0 0.0
        %v1960 = vand.u32 %v1521, 4294901760
        %1961 = vmatpush1.msra.mxu0 %v1960
        %1962 = vmatprep.subr.mxu0 0.0
        %v1963 = vand.u32 %v1522, 4294901760
        %1964 = vmatpush1.msra.mxu0 %v1963
        %1965 = vmatprep.subr.mxu0 0.0
        %v1966 = vand.u32 %v1523, 4294901760
        %1967 = vmatpush1.msra.mxu0 %v1966
        %1968 = vmatprep.subr.mxu0 0.0
        %v1969 = vand.u32 %v1524, 4294901760
        %1970 = vmatpush1.msra.mxu0 %v1969
        %1971 = vmatprep.subr.mxu0 0.0
        %v1972 = vand.u32 %v1525, 4294901760
        %1973 = vmatpush1.msra.mxu0 %v1972
        %1974 = vmatprep.subr.mxu0 0.0
        %v1975 = vand.u32 %v1526, 4294901760
        %1976 = vmatpush1.msra.mxu0 %v1975
        %1977 = vmatprep.subr.mxu0 0.0
        %v1978 = vand.u32 %v1527, 4294901760
        %1979 = vmatpush1.msra.mxu0 %v1978
        %1980 = vmatprep.subr.mxu0 0.0
        %1981 = vmatpush1.msra.mxu0 0.0
        %1982 = vmatprep.subr.mxu0 0.0
        %1983 = vmatpush1.msra.mxu0 0.0
        %1984 = vmatprep.subr.mxu0 0.0
        %1985 = vmatpush1.msra.mxu0 0.0
        %1986 = vmatprep.subr.mxu0 0.0
        %1987 = vmatpush1.msra.mxu0 0.0
        %1988 = vmatprep.subr.mxu0 0.0
        %1989 = vmatpush1.msra.mxu0 0.0
        %1990 = vmatprep.subr.mxu0 0.0
        %1991 = vmatpush1.msra.mxu0 0.0
        %1992 = vmatprep.subr.mxu0 0.0
        %1993 = vmatpush1.msra.mxu0 0.0
        %1994 = vmatprep.subr.mxu0 0.0
        %1995 = vmatpush1.msra.mxu0 0.0
        %1996 = vmatprep.subr.mxu0 0.0
        %1997 = vmatpush1.msra.mxu0 0.0
        %1998 = vmatprep.subr.mxu0 0.0
        %1999 = vmatpush1.msra.mxu0 0.0
        %2000 = vmatprep.subr.mxu0 0.0
        %2001 = vmatpush1.msra.mxu0 0.0
        %2002 = vmatprep.subr.mxu0 0.0
        %2003 = vmatpush1.msra.mxu0 0.0
        %2004 = vmatprep.subr.mxu0 0.0
        %2005 = vmatpush1.msra.mxu0 0.0
        %2006 = vmatprep.subr.mxu0 0.0
        %2007 = vmatpush1.msra.mxu0 0.0
        %2008 = vmatprep.subr.mxu0 0.0
        %2009 = vmatpush1.msra.mxu0 0.0
        %2010 = vmatprep.subr.mxu0 0.0
        %2011 = vmatpush1.msra.mxu0 0.0
        %2012 = vmatprep.mubr.f32.mxu0 0.0
        %v2013 = vand.u32 %v1534, 4294901760
        %v2014 = vsub.f32 %v1534, %v2013
        %v2015 = vand.u32 %v2014, 4294901760
        %2016 = vmatmul.mubr.f32.gmra.mrb[0].mxu0 %v2015
        %v2017 = vpop.f32.mrb[0].mxu0
        %v2018 = vadd.f32 %v1915, %v2017
        %v2019 = vpop.f32.mrb[0].mxu0
        %2020 = vmatprep.mubr.f32.mxu0 0.0
        %v2021 = vand.u32 %v1536, 4294901760
        %v2022 = vsub.f32 %v1536, %v2021
        %v2023 = vand.u32 %v2022, 4294901760
        %2024 = vmatmul.mubr.f32.gmra.mrb[0].mxu0 %v2023
        %v2025 = vpop.f32.mrb[0].mxu0
        %v2026 = vadd.f32 %v1922, %v2025
        %v2027 = vpop.f32.mrb[0].mxu0
        %2028 = vmatprep.mubr.f32.mxu0 0.0
        %v2029 = vand.u32 %v1535, 4294901760
        %v2030 = vsub.f32 %v1535, %v2029
        %v2031 = vand.u32 %v2030, 4294901760
        %2032 = vmatmul.mubr.f32.gmra.mrb[0].mxu0 %v2031
        %v2033 = vpop.f32.mrb[0].mxu0
        %v2034 = vadd.f32 %v1929, %v2033
        %v2035 = vpop.f32.mrb[0].mxu0
        %2036 = vdwg.mxu0
        %2037 = vmatprep.subr.mxu0 0.0
        %v2038 = vand.u32 %v1512, 4294901760
        %v2039 = vsub.f32 %v1512, %v2038
        %v2040 = vand.u32 %v2039, 4294901760
        %2041 = vmatpush1.msra.mxu0 %v2040
        %2042 = vmatprep.subr.mxu0 0.0
        %v2043 = vand.u32 %v1513, 4294901760
        %v2044 = vsub.f32 %v1513, %v2043
        %v2045 = vand.u32 %v2044, 4294901760
        %2046 = vmatpush1.msra.mxu0 %v2045
        %2047 = vmatprep.subr.mxu0 0.0
        %v2048 = vand.u32 %v1514, 4294901760
        %v2049 = vsub.f32 %v1514, %v2048
        %v2050 = vand.u32 %v2049, 4294901760
        %2051 = vmatpush1.msra.mxu0 %v2050
        %2052 = vmatprep.subr.mxu0 0.0
        %v2053 = vand.u32 %v1515, 4294901760
        %v2054 = vsub.f32 %v1515, %v2053
        %v2055 = vand.u32 %v2054, 4294901760
        %2056 = vmatpush1.msra.mxu0 %v2055
        %2057 = vmatprep.subr.mxu0 0.0
        %v2058 = vand.u32 %v1516, 4294901760
        %v2059 = vsub.f32 %v1516, %v2058
        %v2060 = vand.u32 %v2059, 4294901760
        %2061 = vmatpush1.msra.mxu0 %v2060
        %2062 = vmatprep.subr.mxu0 0.0
        %v2063 = vand.u32 %v1517, 4294901760
        %v2064 = vsub.f32 %v1517, %v2063
        %v2065 = vand.u32 %v2064, 4294901760
        %2066 = vmatpush1.msra.mxu0 %v2065
        %2067 = vmatprep.subr.mxu0 0.0
        %v2068 = vand.u32 %v1518, 4294901760
        %v2069 = vsub.f32 %v1518, %v2068
        %v2070 = vand.u32 %v2069, 4294901760
        %2071 = vmatpush1.msra.mxu0 %v2070
        %2072 = vmatprep.subr.mxu0 0.0
        %v2073 = vand.u32 %v1519, 4294901760
        %v2074 = vsub.f32 %v1519, %v2073
        %v2075 = vand.u32 %v2074, 4294901760
        %2076 = vmatpush1.msra.mxu0 %v2075
        %2077 = vmatprep.subr.mxu0 0.0
        %v2078 = vand.u32 %v1520, 4294901760
        %v2079 = vsub.f32 %v1520, %v2078
        %v2080 = vand.u32 %v2079, 4294901760
        %2081 = vmatpush1.msra.mxu0 %v2080
        %2082 = vmatprep.subr.mxu0 0.0
        %v2083 = vand.u32 %v1521, 4294901760
        %v2084 = vsub.f32 %v1521, %v2083
        %v2085 = vand.u32 %v2084, 4294901760
        %2086 = vmatpush1.msra.mxu0 %v2085
        %2087 = vmatprep.subr.mxu0 0.0
        %v2088 = vand.u32 %v1522, 4294901760
        %v2089 = vsub.f32 %v1522, %v2088
        %v2090 = vand.u32 %v2089, 4294901760
        %2091 = vmatpush1.msra.mxu0 %v2090
        %2092 = vmatprep.subr.mxu0 0.0
        %v2093 = vand.u32 %v1523, 4294901760
        %v2094 = vsub.f32 %v1523, %v2093
        %v2095 = vand.u32 %v2094, 4294901760
        %2096 = vmatpush1.msra.mxu0 %v2095
        %2097 = vmatprep.subr.mxu0 0.0
        %v2098 = vand.u32 %v1524, 4294901760
        %v2099 = vsub.f32 %v1524, %v2098
        %v2100 = vand.u32 %v2099, 4294901760
        %2101 = vmatpush1.msra.mxu0 %v2100
        %2102 = vmatprep.subr.mxu0 0.0
        %v2103 = vand.u32 %v1525, 4294901760
        %v2104 = vsub.f32 %v1525, %v2103
        %v2105 = vand.u32 %v2104, 4294901760
        %2106 = vmatpush1.msra.mxu0 %v2105
        %2107 = vmatprep.subr.mxu0 0.0
        %v2108 = vand.u32 %v1526, 4294901760
        %v2109 = vsub.f32 %v1526, %v2108
        %v2110 = vand.u32 %v2109, 4294901760
        %2111 = vmatpush1.msra.mxu0 %v2110
        %2112 = vmatprep.subr.mxu0 0.0
        %v2113 = vand.u32 %v1527, 4294901760
        %v2114 = vsub.f32 %v1527, %v2113
        %v2115 = vand.u32 %v2114, 4294901760
        %2116 = vmatpush1.msra.mxu0 %v2115
        %2117 = vmatprep.subr.mxu0 0.0
        %2118 = vmatpush1.msra.mxu0 0.0
        %2119 = vmatprep.subr.mxu0 0.0
        %2120 = vmatpush1.msra.mxu0 0.0
        %2121 = vmatprep.subr.mxu0 0.0
        %2122 = vmatpush1.msra.mxu0 0.0
        %2123 = vmatprep.subr.mxu0 0.0
        %2124 = vmatpush1.msra.mxu0 0.0
        %2125 = vmatprep.subr.mxu0 0.0
        %2126 = vmatpush1.msra.mxu0 0.0
        %2127 = vmatprep.subr.mxu0 0.0
        %2128 = vmatpush1.msra.mxu0 0.0
        %2129 = vmatprep.subr.mxu0 0.0
        %2130 = vmatpush1.msra.mxu0 0.0
        %2131 = vmatprep.subr.mxu0 0.0
        %2132 = vmatpush1.msra.mxu0 0.0
        %2133 = vmatprep.subr.mxu0 0.0
        %2134 = vmatpush1.msra.mxu0 0.0
        %2135 = vmatprep.subr.mxu0 0.0
        %2136 = vmatpush1.msra.mxu0 0.0
        %2137 = vmatprep.subr.mxu0 0.0
        %2138 = vmatpush1.msra.mxu0 0.0
        %2139 = vmatprep.subr.mxu0 0.0
        %2140 = vmatpush1.msra.mxu0 0.0
        %2141 = vmatprep.subr.mxu0 0.0
        %2142 = vmatpush1.msra.mxu0 0.0
        %2143 = vmatprep.subr.mxu0 0.0
        %2144 = vmatpush1.msra.mxu0 0.0
        %2145 = vmatprep.subr.mxu0 0.0
        %2146 = vmatpush1.msra.mxu0 0.0
        %2147 = vmatprep.subr.mxu0 0.0
        %2148 = vmatpush1.msra.mxu0 0.0
        %2149 = vmatprep.mubr.f32.mxu0 0.0
        %v2150 = vand.u32 %v1534, 4294901760
        %2151 = vmatmul.mubr.f32.gmra.mrb[0].mxu0 %v2150
        %v2152 = vpop.f32.mrb[0].mxu0
        %v2153 = vadd.f32 %v2018, %v2152
        %v2154 = vpop.f32.mrb[0].mxu0
        %2155 = vmatprep.mubr.f32.mxu0 0.0
        %v2156 = vand.u32 %v1536, 4294901760
        %2157 = vmatmul.mubr.f32.gmra.mrb[0].mxu0 %v2156
        %v2158 = vpop.f32.mrb[0].mxu0
        %v2159 = vadd.f32 %v2026, %v2158
        %v2160 = vpop.f32.mrb[0].mxu0
        %2161 = vmatprep.mubr.f32.mxu0 0.0
        %v2162 = vand.u32 %v1535, 4294901760
        %2163 = vmatmul.mubr.f32.gmra.mrb[0].mxu0 %v2162
        %v2164 = vpop.f32.mrb[0].mxu0
        %v2165 = vadd.f32 %v2034, %v2164
        %v2166 = vpop.f32.mrb[0].mxu0
        %2167 = vdwg.mxu0
        %2168 = vmatprep.subr.mxu0 0.0
        %v2169 = vand.u32 %v1512, 4294901760
        %2170 = vmatpush1.msra.mxu0 %v2169
        %2171 = vmatprep.subr.mxu0 0.0
        %v2172 = vand.u32 %v1513, 4294901760
        %2173 = vmatpush1.msra.mxu0 %v2172
        %2174 = vmatprep.subr.mxu0 0.0
        %v2175 = vand.u32 %v1514, 4294901760
        %2176 = vmatpush1.msra.mxu0 %v2175
        %2177 = vmatprep.subr.mxu0 0.0
        %v2178 = vand.u32 %v1515, 4294901760
        %2179 = vmatpush1.msra.mxu0 %v2178
        %2180 = vmatprep.subr.mxu0 0.0
        %v2181 = vand.u32 %v1516, 4294901760
        %2182 = vmatpush1.msra.mxu0 %v2181
        %2183 = vmatprep.subr.mxu0 0.0
        %v2184 = vand.u32 %v1517, 4294901760
        %2185 = vmatpush1.msra.mxu0 %v2184
        %2186 = vmatprep.subr.mxu0 0.0
        %v2187 = vand.u32 %v1518, 4294901760
        %2188 = vmatpush1.msra.mxu0 %v2187
        %2189 = vmatprep.subr.mxu0 0.0
        %v2190 = vand.u32 %v1519, 4294901760
        %2191 = vmatpush1.msra.mxu0 %v2190
        %2192 = vmatprep.subr.mxu0 0.0
        %v2193 = vand.u32 %v1520, 4294901760
        %2194 = vmatpush1.msra.mxu0 %v2193
        %2195 = vmatprep.subr.mxu0 0.0
        %v2196 = vand.u32 %v1521, 4294901760
        %2197 = vmatpush1.msra.mxu0 %v2196
        %2198 = vmatprep.subr.mxu0 0.0
        %v2199 = vand.u32 %v1522, 4294901760
        %2200 = vmatpush1.msra.mxu0 %v2199
        %2201 = vmatprep.subr.mxu0 0.0
        %v2202 = vand.u32 %v1523, 4294901760
        %2203 = vmatpush1.msra.mxu0 %v2202
        %2204 = vmatprep.subr.mxu0 0.0
        %v2205 = vand.u32 %v1524, 4294901760
        %2206 = vmatpush1.msra.mxu0 %v2205
        %2207 = vmatprep.subr.mxu0 0.0
        %v2208 = vand.u32 %v1525, 4294901760
        %2209 = vmatpush1.msra.mxu0 %v2208
        %2210 = vmatprep.subr.mxu0 0.0
        %v2211 = vand.u32 %v1526, 4294901760
        %2212 = vmatpush1.msra.mxu0 %v2211
        %2213 = vmatprep.subr.mxu0 0.0
        %v2214 = vand.u32 %v1527, 4294901760
        %2215 = vmatpush1.msra.mxu0 %v2214
        %2216 = vmatprep.subr.mxu0 0.0
        %2217 = vmatpush1.msra.mxu0 0.0
        %2218 = vmatprep.subr.mxu0 0.0
        %2219 = vmatpush1.msra.mxu0 0.0
        %2220 = vmatprep.subr.mxu0 0.0
        %2221 = vmatpush1.msra.mxu0 0.0
        %2222 = vmatprep.subr.mxu0 0.0
        %2223 = vmatpush1.msra.mxu0 0.0
        %2224 = vmatprep.subr.mxu0 0.0
        %2225 = vmatpush1.msra.mxu0 0.0
        %2226 = vmatprep.subr.mxu0 0.0
        %2227 = vmatpush1.msra.mxu0 0.0
        %2228 = vmatprep.subr.mxu0 0.0
        %2229 = vmatpush1.msra.mxu0 0.0
        %2230 = vmatprep.subr.mxu0 0.0
        %2231 = vmatpush1.msra.mxu0 0.0
        %2232 = vmatprep.subr.mxu0 0.0
        %2233 = vmatpush1.msra.mxu0 0.0
        %2234 = vmatprep.subr.mxu0 0.0
        %2235 = vmatpush1.msra.mxu0 0.0
        %2236 = vmatprep.subr.mxu0 0.0
        %2237 = vmatpush1.msra.mxu0 0.0
        %2238 = vmatprep.subr.mxu0 0.0
        %2239 = vmatpush1.msra.mxu0 0.0
        %2240 = vmatprep.subr.mxu0 0.0
        %2241 = vmatpush1.msra.mxu0 0.0
        %2242 = vmatprep.subr.mxu0 0.0
        %2243 = vmatpush1.msra.mxu0 0.0
        %2244 = vmatprep.subr.mxu0 0.0
        %2245 = vmatpush1.msra.mxu0 0.0
        %2246 = vmatprep.subr.mxu0 0.0
        %2247 = vmatpush1.msra.mxu0 0.0
        %2248 = vmatprep.mubr.f32.mxu0 0.0
        %v2249 = vand.u32 %v1534, 4294901760
        %2250 = vmatmul.mubr.f32.gmra.mrb[0].mxu0 %v2249
        %v2251 = vpop.f32.mrb[0].mxu0
        %v2252 = vadd.f32 %v2153, %v2251
        %v2253 = vpop.f32.mrb[0].mxu0
        %2254 = vmatprep.mubr.f32.mxu0 0.0
        %v2255 = vand.u32 %v1536, 4294901760
        %2256 = vmatmul.mubr.f32.gmra.mrb[0].mxu0 %v2255
        %v2257 = vpop.f32.mrb[0].mxu0
        %v2258 = vadd.f32 %v2159, %v2257
        %v2259 = vpop.f32.mrb[0].mxu0
        %2260 = vmatprep.mubr.f32.mxu0 0.0
        %v2261 = vand.u32 %v1535, 4294901760
        %2262 = vmatmul.mubr.f32.gmra.mrb[0].mxu0 %v2261
        %v2263 = vpop.f32.mrb[0].mxu0
        %v2264 = vadd.f32 %v2165, %v2263
        %v2265 = vpop.f32.mrb[0].mxu0
        %2266 = vdwg.mxu0
        %2267 = vmatprep.subr.mxu0 0.0
        %v2268 = vand.u32 %v1495, 4294901760
        %2269 = vmatpush1.msra.mxu0 %v2268
        %2270 = vmatprep.subr.mxu0 0.0
        %v2271 = vand.u32 %v1496, 4294901760
        %2272 = vmatpush1.msra.mxu0 %v2271
        %2273 = vmatprep.subr.mxu0 0.0
        %v2274 = vand.u32 %v1497, 4294901760
        %2275 = vmatpush1.msra.mxu0 %v2274
        %2276 = vmatprep.subr.mxu0 0.0
        %v2277 = vand.u32 %v1498, 4294901760
        %2278 = vmatpush1.msra.mxu0 %v2277
        %2279 = vmatprep.subr.mxu0 0.0
        %v2280 = vand.u32 %v1499, 4294901760
        %2281 = vmatpush1.msra.mxu0 %v2280
        %2282 = vmatprep.subr.mxu0 0.0
        %v2283 = vand.u32 %v1500, 4294901760
        %2284 = vmatpush1.msra.mxu0 %v2283
        %2285 = vmatprep.subr.mxu0 0.0
        %v2286 = vand.u32 %v1501, 4294901760
        %2287 = vmatpush1.msra.mxu0 %v2286
        %2288 = vmatprep.subr.mxu0 0.0
        %v2289 = vand.u32 %v1502, 4294901760
        %2290 = vmatpush1.msra.mxu0 %v2289
        %2291 = vmatprep.subr.mxu0 0.0
        %v2292 = vand.u32 %v1503, 4294901760
        %2293 = vmatpush1.msra.mxu0 %v2292
        %2294 = vmatprep.subr.mxu0 0.0
        %v2295 = vand.u32 %v1504, 4294901760
        %2296 = vmatpush1.msra.mxu0 %v2295
        %2297 = vmatprep.subr.mxu0 0.0
        %v2298 = vand.u32 %v1505, 4294901760
        %2299 = vmatpush1.msra.mxu0 %v2298
        %2300 = vmatprep.subr.mxu0 0.0
        %v2301 = vand.u32 %v1506, 4294901760
        %2302 = vmatpush1.msra.mxu0 %v2301
        %2303 = vmatprep.subr.mxu0 0.0
        %v2304 = vand.u32 %v1507, 4294901760
        %2305 = vmatpush1.msra.mxu0 %v2304
        %2306 = vmatprep.subr.mxu0 0.0
        %v2307 = vand.u32 %v1508, 4294901760
        %2308 = vmatpush1.msra.mxu0 %v2307
        %2309 = vmatprep.subr.mxu0 0.0
        %v2310 = vand.u32 %v1509, 4294901760
        %2311 = vmatpush1.msra.mxu0 %v2310
        %2312 = vmatprep.subr.mxu0 0.0
        %v2313 = vand.u32 %v1510, 4294901760
        %2314 = vmatpush1.msra.mxu0 %v2313
        %2315 = vmatprep.subr.mxu0 0.0
        %2316 = vmatpush1.msra.mxu0 0.0
        %2317 = vmatprep.subr.mxu0 0.0
        %2318 = vmatpush1.msra.mxu0 0.0
        %2319 = vmatprep.subr.mxu0 0.0
        %2320 = vmatpush1.msra.mxu0 0.0
        %2321 = vmatprep.subr.mxu0 0.0
        %2322 = vmatpush1.msra.mxu0 0.0
        %2323 = vmatprep.subr.mxu0 0.0
        %2324 = vmatpush1.msra.mxu0 0.0
        %2325 = vmatprep.subr.mxu0 0.0
        %2326 = vmatpush1.msra.mxu0 0.0
        %2327 = vmatprep.subr.mxu0 0.0
        %2328 = vmatpush1.msra.mxu0 0.0
        %2329 = vmatprep.subr.mxu0 0.0
        %2330 = vmatpush1.msra.mxu0 0.0
        %2331 = vmatprep.subr.mxu0 0.0
        %2332 = vmatpush1.msra.mxu0 0.0
        %2333 = vmatprep.subr.mxu0 0.0
        %2334 = vmatpush1.msra.mxu0 0.0
        %2335 = vmatprep.subr.mxu0 0.0
        %2336 = vmatpush1.msra.mxu0 0.0
        %2337 = vmatprep.subr.mxu0 0.0
        %2338 = vmatpush1.msra.mxu0 0.0
        %2339 = vmatprep.subr.mxu0 0.0
        %2340 = vmatpush1.msra.mxu0 0.0
        %2341 = vmatprep.subr.mxu0 0.0
        %2342 = vmatpush1.msra.mxu0 0.0
        %2343 = vmatprep.subr.mxu0 0.0
        %2344 = vmatpush1.msra.mxu0 0.0
        %2345 = vmatprep.subr.mxu0 0.0
        %2346 = vmatpush1.msra.mxu0 0.0
        %2347 = vmatprep.mubr.f32.mxu0 0.0
        %v2348 = vand.u32 %v1491, 4294901760
        %v2349 = vsub.f32 %v1491, %v2348
        %v2350 = vand.u32 %v2349, 4294901760
        %v2351 = vsub.f32 %v2349, %v2350
        %v2352 = vand.u32 %v2351, 4294901760
        %2353 = vmatmul.mubr.f32.gmra.mrb[0].mxu0 %v2352
        %v2354 = vpop.f32.mrb[0].mxu0
        %v2355 = vadd.f32 %v2252, %v2354
        %v2356 = vpop.f32.mrb[0].mxu0
        %2357 = vmatprep.mubr.f32.mxu0 0.0
        %v2358 = vand.u32 %v1492, 4294901760
        %v2359 = vsub.f32 %v1492, %v2358
        %v2360 = vand.u32 %v2359, 4294901760
        %v2361 = vsub.f32 %v2359, %v2360
        %v2362 = vand.u32 %v2361, 4294901760
        %2363 = vmatmul.mubr.f32.gmra.mrb[0].mxu0 %v2362
        %v2364 = vpop.f32.mrb[0].mxu0
        %v2365 = vadd.f32 %v2258, %v2364
        %v2366 = vpop.f32.mrb[0].mxu0
        %2367 = vmatprep.mubr.f32.mxu0 0.0
        %v2368 = vand.u32 %v1493, 4294901760
        %v2369 = vsub.f32 %v1493, %v2368
        %v2370 = vand.u32 %v2369, 4294901760
        %v2371 = vsub.f32 %v2369, %v2370
        %v2372 = vand.u32 %v2371, 4294901760
        %2373 = vmatmul.mubr.f32.gmra.mrb[0].mxu0 %v2372
        %v2374 = vpop.f32.mrb[0].mxu0
        %v2375 = vadd.f32 %v2264, %v2374
        %v2376 = vpop.f32.mrb[0].mxu0
        %2377 = vdwg.mxu0
        %2378 = vmatprep.subr.mxu0 0.0
        %v2379 = vand.u32 %v1495, 4294901760
        %v2380 = vsub.f32 %v1495, %v2379
        %v2381 = vand.u32 %v2380, 4294901760
        %v2382 = vsub.f32 %v2380, %v2381
        %v2383 = vand.u32 %v2382, 4294901760
        %2384 = vmatpush1.msra.mxu0 %v2383
        %2385 = vmatprep.subr.mxu0 0.0
        %v2386 = vand.u32 %v1496, 4294901760
        %v2387 = vsub.f32 %v1496, %v2386
        %v2388 = vand.u32 %v2387, 4294901760
        %v2389 = vsub.f32 %v2387, %v2388
        %v2390 = vand.u32 %v2389, 4294901760
        %2391 = vmatpush1.msra.mxu0 %v2390
        %2392 = vmatprep.subr.mxu0 0.0
        %v2393 = vand.u32 %v1497, 4294901760
        %v2394 = vsub.f32 %v1497, %v2393
        %v2395 = vand.u32 %v2394, 4294901760
        %v2396 = vsub.f32 %v2394, %v2395
        %v2397 = vand.u32 %v2396, 4294901760
        %2398 = vmatpush1.msra.mxu0 %v2397
        %2399 = vmatprep.subr.mxu0 0.0
        %v2400 = vand.u32 %v1498, 4294901760
        %v2401 = vsub.f32 %v1498, %v2400
        %v2402 = vand.u32 %v2401, 4294901760
        %v2403 = vsub.f32 %v2401, %v2402
        %v2404 = vand.u32 %v2403, 4294901760
        %2405 = vmatpush1.msra.mxu0 %v2404
        %2406 = vmatprep.subr.mxu0 0.0
        %v2407 = vand.u32 %v1499, 4294901760
        %v2408 = vsub.f32 %v1499, %v2407
        %v2409 = vand.u32 %v2408, 4294901760
        %v2410 = vsub.f32 %v2408, %v2409
        %v2411 = vand.u32 %v2410, 4294901760
        %2412 = vmatpush1.msra.mxu0 %v2411
        %2413 = vmatprep.subr.mxu0 0.0
        %v2414 = vand.u32 %v1500, 4294901760
        %v2415 = vsub.f32 %v1500, %v2414
        %v2416 = vand.u32 %v2415, 4294901760
        %v2417 = vsub.f32 %v2415, %v2416
        %v2418 = vand.u32 %v2417, 4294901760
        %2419 = vmatpush1.msra.mxu0 %v2418
        %2420 = vmatprep.subr.mxu0 0.0
        %v2421 = vand.u32 %v1501, 4294901760
        %v2422 = vsub.f32 %v1501, %v2421
        %v2423 = vand.u32 %v2422, 4294901760
        %v2424 = vsub.f32 %v2422, %v2423
        %v2425 = vand.u32 %v2424, 4294901760
        %2426 = vmatpush1.msra.mxu0 %v2425
        %2427 = vmatprep.subr.mxu0 0.0
        %v2428 = vand.u32 %v1502, 4294901760
        %v2429 = vsub.f32 %v1502, %v2428
        %v2430 = vand.u32 %v2429, 4294901760
        %v2431 = vsub.f32 %v2429, %v2430
        %v2432 = vand.u32 %v2431, 4294901760
        %2433 = vmatpush1.msra.mxu0 %v2432
        %2434 = vmatprep.subr.mxu0 0.0
        %v2435 = vand.u32 %v1503, 4294901760
        %v2436 = vsub.f32 %v1503, %v2435
        %v2437 = vand.u32 %v2436, 4294901760
        %v2438 = vsub.f32 %v2436, %v2437
        %v2439 = vand.u32 %v2438, 4294901760
        %2440 = vmatpush1.msra.mxu0 %v2439
        %2441 = vmatprep.subr.mxu0 0.0
        %v2442 = vand.u32 %v1504, 4294901760
        %v2443 = vsub.f32 %v1504, %v2442
        %v2444 = vand.u32 %v2443, 4294901760
        %v2445 = vsub.f32 %v2443, %v2444
        %v2446 = vand.u32 %v2445, 4294901760
        %2447 = vmatpush1.msra.mxu0 %v2446
        %2448 = vmatprep.subr.mxu0 0.0
        %v2449 = vand.u32 %v1505, 4294901760
        %v2450 = vsub.f32 %v1505, %v2449
        %v2451 = vand.u32 %v2450, 4294901760
        %v2452 = vsub.f32 %v2450, %v2451
        %v2453 = vand.u32 %v2452, 4294901760
        %2454 = vmatpush1.msra.mxu0 %v2453
        %2455 = vmatprep.subr.mxu0 0.0
        %v2456 = vand.u32 %v1506, 4294901760
        %v2457 = vsub.f32 %v1506, %v2456
        %v2458 = vand.u32 %v2457, 4294901760
        %v2459 = vsub.f32 %v2457, %v2458
        %v2460 = vand.u32 %v2459, 4294901760
        %2461 = vmatpush1.msra.mxu0 %v2460
        %2462 = vmatprep.subr.mxu0 0.0
        %v2463 = vand.u32 %v1507, 4294901760
        %v2464 = vsub.f32 %v1507, %v2463
        %v2465 = vand.u32 %v2464, 4294901760
        %v2466 = vsub.f32 %v2464, %v2465
        %v2467 = vand.u32 %v2466, 4294901760
        %2468 = vmatpush1.msra.mxu0 %v2467
        %2469 = vmatprep.subr.mxu0 0.0
        %v2470 = vand.u32 %v1508, 4294901760
        %v2471 = vsub.f32 %v1508, %v2470
        %v2472 = vand.u32 %v2471, 4294901760
        %v2473 = vsub.f32 %v2471, %v2472
        %v2474 = vand.u32 %v2473, 4294901760
        %2475 = vmatpush1.msra.mxu0 %v2474
        %2476 = vmatprep.subr.mxu0 0.0
        %v2477 = vand.u32 %v1509, 4294901760
        %v2478 = vsub.f32 %v1509, %v2477
        %v2479 = vand.u32 %v2478, 4294901760
        %v2480 = vsub.f32 %v2478, %v2479
        %v2481 = vand.u32 %v2480, 4294901760
        %2482 = vmatpush1.msra.mxu0 %v2481
        %2483 = vmatprep.subr.mxu0 0.0
        %v2484 = vand.u32 %v1510, 4294901760
        %v2485 = vsub.f32 %v1510, %v2484
        %v2486 = vand.u32 %v2485, 4294901760
        %v2487 = vsub.f32 %v2485, %v2486
        %v2488 = vand.u32 %v2487, 4294901760
        %2489 = vmatpush1.msra.mxu0 %v2488
        %2490 = vmatprep.subr.mxu0 0.0
        %2491 = vmatpush1.msra.mxu0 0.0
        %2492 = vmatprep.subr.mxu0 0.0
        %2493 = vmatpush1.msra.mxu0 0.0
        %2494 = vmatprep.subr.mxu0 0.0
        %2495 = vmatpush1.msra.mxu0 0.0
        %2496 = vmatprep.subr.mxu0 0.0
        %2497 = vmatpush1.msra.mxu0 0.0
        %2498 = vmatprep.subr.mxu0 0.0
        %2499 = vmatpush1.msra.mxu0 0.0
        %2500 = vmatprep.subr.mxu0 0.0
        %2501 = vmatpush1.msra.mxu0 0.0
        %2502 = vmatprep.subr.mxu0 0.0
        %2503 = vmatpush1.msra.mxu0 0.0
        %2504 = vmatprep.subr.mxu0 0.0
        %2505 = vmatpush1.msra.mxu0 0.0
        %2506 = vmatprep.subr.mxu0 0.0
        %2507 = vmatpush1.msra.mxu0 0.0
        %2508 = vmatprep.subr.mxu0 0.0
        %2509 = vmatpush1.msra.mxu0 0.0
        %2510 = vmatprep.subr.mxu0 0.0
        %2511 = vmatpush1.msra.mxu0 0.0
        %2512 = vmatprep.subr.mxu0 0.0
        %2513 = vmatpush1.msra.mxu0 0.0
        %2514 = vmatprep.subr.mxu0 0.0
        %2515 = vmatpush1.msra.mxu0 0.0
        %2516 = vmatprep.subr.mxu0 0.0
        %2517 = vmatpush1.msra.mxu0 0.0
        %2518 = vmatprep.subr.mxu0 0.0
        %2519 = vmatpush1.msra.mxu0 0.0
        %2520 = vmatprep.subr.mxu0 0.0
        %2521 = vmatpush1.msra.mxu0 0.0
        %2522 = vmatprep.mubr.f32.mxu0 0.0
        %v2523 = vand.u32 %v1491, 4294901760
        %2524 = vmatmul.mubr.f32.gmra.mrb[0].mxu0 %v2523
        %v2525 = vpop.f32.mrb[0].mxu0
        %v2526 = vadd.f32 %v2355, %v2525
        %v2527 = vpop.f32.mrb[0].mxu0
        %2528 = vmatprep.mubr.f32.mxu0 0.0
        %v2529 = vand.u32 %v1492, 4294901760
        %2530 = vmatmul.mubr.f32.gmra.mrb[0].mxu0 %v2529
        %v2531 = vpop.f32.mrb[0].mxu0
        %v2532 = vadd.f32 %v2365, %v2531
        %v2533 = vpop.f32.mrb[0].mxu0
        %2534 = vmatprep.mubr.f32.mxu0 0.0
        %v2535 = vand.u32 %v1493, 4294901760
        %2536 = vmatmul.mubr.f32.gmra.mrb[0].mxu0 %v2535
        %v2537 = vpop.f32.mrb[0].mxu0
        %v2538 = vadd.f32 %v2375, %v2537
        %v2539 = vpop.f32.mrb[0].mxu0
        %2540 = vdwg.mxu0
        %2541 = vmatprep.subr.mxu0 0.0
        %v2542 = vand.u32 %v1495, 4294901760
        %v2543 = vsub.f32 %v1495, %v2542
        %2544 = vmatpush1.msra.mxu0 %v2543
        %2545 = vmatprep.subr.mxu0 0.0
        %v2546 = vand.u32 %v1496, 4294901760
        %v2547 = vsub.f32 %v1496, %v2546
        %2548 = vmatpush1.msra.mxu0 %v2547
        %2549 = vmatprep.subr.mxu0 0.0
        %v2550 = vand.u32 %v1497, 4294901760
        %v2551 = vsub.f32 %v1497, %v2550
        %2552 = vmatpush1.msra.mxu0 %v2551
        %2553 = vmatprep.subr.mxu0 0.0
        %v2554 = vand.u32 %v1498, 4294901760
        %v2555 = vsub.f32 %v1498, %v2554
        %2556 = vmatpush1.msra.mxu0 %v2555
        %2557 = vmatprep.subr.mxu0 0.0
        %v2558 = vand.u32 %v1499, 4294901760
        %v2559 = vsub.f32 %v1499, %v2558
        %2560 = vmatpush1.msra.mxu0 %v2559
        %2561 = vmatprep.subr.mxu0 0.0
        %v2562 = vand.u32 %v1500, 4294901760
        %v2563 = vsub.f32 %v1500, %v2562
        %2564 = vmatpush1.msra.mxu0 %v2563
        %2565 = vmatprep.subr.mxu0 0.0
        %v2566 = vand.u32 %v1501, 4294901760
        %v2567 = vsub.f32 %v1501, %v2566
        %2568 = vmatpush1.msra.mxu0 %v2567
        %2569 = vmatprep.subr.mxu0 0.0
        %v2570 = vand.u32 %v1502, 4294901760
        %v2571 = vsub.f32 %v1502, %v2570
        %2572 = vmatpush1.msra.mxu0 %v2571
        %2573 = vmatprep.subr.mxu0 0.0
        %v2574 = vand.u32 %v1503, 4294901760
        %v2575 = vsub.f32 %v1503, %v2574
        %2576 = vmatpush1.msra.mxu0 %v2575
        %2577 = vmatprep.subr.mxu0 0.0
        %v2578 = vand.u32 %v1504, 4294901760
        %v2579 = vsub.f32 %v1504, %v2578
        %2580 = vmatpush1.msra.mxu0 %v2579
        %2581 = vmatprep.subr.mxu0 0.0
        %v2582 = vand.u32 %v1505, 4294901760
        %v2583 = vsub.f32 %v1505, %v2582
        %2584 = vmatpush1.msra.mxu0 %v2583
        %2585 = vmatprep.subr.mxu0 0.0
        %v2586 = vand.u32 %v1506, 4294901760
        %v2587 = vsub.f32 %v1506, %v2586
        %2588 = vmatpush1.msra.mxu0 %v2587
        %2589 = vmatprep.subr.mxu0 0.0
        %v2590 = vand.u32 %v1507, 4294901760
        %v2591 = vsub.f32 %v1507, %v2590
        %2592 = vmatpush1.msra.mxu0 %v2591
        %2593 = vmatprep.subr.mxu0 0.0
        %v2594 = vand.u32 %v1508, 4294901760
        %v2595 = vsub.f32 %v1508, %v2594
        %2596 = vmatpush1.msra.mxu0 %v2595
        %2597 = vmatprep.subr.mxu0 0.0
        %v2598 = vand.u32 %v1509, 4294901760
        %v2599 = vsub.f32 %v1509, %v2598
        %2600 = vmatpush1.msra.mxu0 %v2599
        %2601 = vmatprep.subr.mxu0 0.0
        %v2602 = vand.u32 %v1510, 4294901760
        %v2603 = vsub.f32 %v1510, %v2602
        %2604 = vmatpush1.msra.mxu0 %v2603
        %2605 = vmatprep.subr.mxu0 0.0
        %2606 = vmatpush1.msra.mxu0 0.0
        %2607 = vmatprep.subr.mxu0 0.0
        %2608 = vmatpush1.msra.mxu0 0.0
        %2609 = vmatprep.subr.mxu0 0.0
        %2610 = vmatpush1.msra.mxu0 0.0
        %2611 = vmatprep.subr.mxu0 0.0
        %2612 = vmatpush1.msra.mxu0 0.0
        %2613 = vmatprep.subr.mxu0 0.0
        %2614 = vmatpush1.msra.mxu0 0.0
        %2615 = vmatprep.subr.mxu0 0.0
        %2616 = vmatpush1.msra.mxu0 0.0
        %2617 = vmatprep.subr.mxu0 0.0
        %2618 = vmatpush1.msra.mxu0 0.0
        %2619 = vmatprep.subr.mxu0 0.0
        %2620 = vmatpush1.msra.mxu0 0.0
        %2621 = vmatprep.subr.mxu0 0.0
        %2622 = vmatpush1.msra.mxu0 0.0
        %2623 = vmatprep.subr.mxu0 0.0
        %2624 = vmatpush1.msra.mxu0 0.0
        %2625 = vmatprep.subr.mxu0 0.0
        %2626 = vmatpush1.msra.mxu0 0.0
        %2627 = vmatprep.subr.mxu0 0.0
        %2628 = vmatpush1.msra.mxu0 0.0
        %2629 = vmatprep.subr.mxu0 0.0
        %2630 = vmatpush1.msra.mxu0 0.0
        %2631 = vmatprep.subr.mxu0 0.0
        %2632 = vmatpush1.msra.mxu0 0.0
        %2633 = vmatprep.subr.mxu0 0.0
        %2634 = vmatpush1.msra.mxu0 0.0
        %2635 = vmatprep.subr.mxu0 0.0
        %2636 = vmatpush1.msra.mxu0 0.0
        %2637 = vmatprep.mubr.f32.mxu0 0.0
        %v2638 = vand.u32 %v1491, 4294901760
        %v2639 = vsub.f32 %v1491, %v2638
        %2640 = vmatmul.mubr.f32.gmra.mrb[0].mxu0 %v2639
        %v2641 = vpop.f32.mrb[0].mxu0
        %v2642 = vadd.f32 %v2526, %v2641
        %v2643 = vpop.f32.mrb[0].mxu0
        %2644 = vmatprep.mubr.f32.mxu0 0.0
        %v2645 = vand.u32 %v1492, 4294901760
        %v2646 = vsub.f32 %v1492, %v2645
        %2647 = vmatmul.mubr.f32.gmra.mrb[0].mxu0 %v2646
        %v2648 = vpop.f32.mrb[0].mxu0
        %v2649 = vadd.f32 %v2532, %v2648
        %v2650 = vpop.f32.mrb[0].mxu0
        %2651 = vmatprep.mubr.f32.mxu0 0.0
        %v2652 = vand.u32 %v1493, 4294901760
        %v2653 = vsub.f32 %v1493, %v2652
        %2654 = vmatmul.mubr.f32.gmra.mrb[0].mxu0 %v2653
        %v2655 = vpop.f32.mrb[0].mxu0
        %v2656 = vadd.f32 %v2538, %v2655
        %v2657 = vpop.f32.mrb[0].mxu0
        %2658 = vdwg.mxu0
        %2659 = vmatprep.subr.mxu0 0.0
        %v2660 = vand.u32 %v1495, 4294901760
        %2661 = vmatpush1.msra.mxu0 %v2660
        %2662 = vmatprep.subr.mxu0 0.0
        %v2663 = vand.u32 %v1496, 4294901760
        %2664 = vmatpush1.msra.mxu0 %v2663
        %2665 = vmatprep.subr.mxu0 0.0
        %v2666 = vand.u32 %v1497, 4294901760
        %2667 = vmatpush1.msra.mxu0 %v2666
        %2668 = vmatprep.subr.mxu0 0.0
        %v2669 = vand.u32 %v1498, 4294901760
        %2670 = vmatpush1.msra.mxu0 %v2669
        %2671 = vmatprep.subr.mxu0 0.0
        %v2672 = vand.u32 %v1499, 4294901760
        %2673 = vmatpush1.msra.mxu0 %v2672
        %2674 = vmatprep.subr.mxu0 0.0
        %v2675 = vand.u32 %v1500, 4294901760
        %2676 = vmatpush1.msra.mxu0 %v2675
        %2677 = vmatprep.subr.mxu0 0.0
        %v2678 = vand.u32 %v1501, 4294901760
        %2679 = vmatpush1.msra.mxu0 %v2678
        %2680 = vmatprep.subr.mxu0 0.0
        %v2681 = vand.u32 %v1502, 4294901760
        %2682 = vmatpush1.msra.mxu0 %v2681
        %2683 = vmatprep.subr.mxu0 0.0
        %v2684 = vand.u32 %v1503, 4294901760
        %2685 = vmatpush1.msra.mxu0 %v2684
        %2686 = vmatprep.subr.mxu0 0.0
        %v2687 = vand.u32 %v1504, 4294901760
        %2688 = vmatpush1.msra.mxu0 %v2687
        %2689 = vmatprep.subr.mxu0 0.0
        %v2690 = vand.u32 %v1505, 4294901760
        %2691 = vmatpush1.msra.mxu0 %v2690
        %2692 = vmatprep.subr.mxu0 0.0
        %v2693 = vand.u32 %v1506, 4294901760
        %2694 = vmatpush1.msra.mxu0 %v2693
        %2695 = vmatprep.subr.mxu0 0.0
        %v2696 = vand.u32 %v1507, 4294901760
        %2697 = vmatpush1.msra.mxu0 %v2696
        %2698 = vmatprep.subr.mxu0 0.0
        %v2699 = vand.u32 %v1508, 4294901760
        %2700 = vmatpush1.msra.mxu0 %v2699
        %2701 = vmatprep.subr.mxu0 0.0
        %v2702 = vand.u32 %v1509, 4294901760
        %2703 = vmatpush1.msra.mxu0 %v2702
        %2704 = vmatprep.subr.mxu0 0.0
        %v2705 = vand.u32 %v1510, 4294901760
        %2706 = vmatpush1.msra.mxu0 %v2705
        %2707 = vmatprep.subr.mxu0 0.0
        %2708 = vmatpush1.msra.mxu0 0.0
        %2709 = vmatprep.subr.mxu0 0.0
        %2710 = vmatpush1.msra.mxu0 0.0
        %2711 = vmatprep.subr.mxu0 0.0
        %2712 = vmatpush1.msra.mxu0 0.0
        %2713 = vmatprep.subr.mxu0 0.0
        %2714 = vmatpush1.msra.mxu0 0.0
        %2715 = vmatprep.subr.mxu0 0.0
        %2716 = vmatpush1.msra.mxu0 0.0
        %2717 = vmatprep.subr.mxu0 0.0
        %2718 = vmatpush1.msra.mxu0 0.0
        %2719 = vmatprep.subr.mxu0 0.0
        %2720 = vmatpush1.msra.mxu0 0.0
        %2721 = vmatprep.subr.mxu0 0.0
        %2722 = vmatpush1.msra.mxu0 0.0
        %2723 = vmatprep.subr.mxu0 0.0
        %2724 = vmatpush1.msra.mxu0 0.0
        %2725 = vmatprep.subr.mxu0 0.0
        %2726 = vmatpush1.msra.mxu0 0.0
        %2727 = vmatprep.subr.mxu0 0.0
        %2728 = vmatpush1.msra.mxu0 0.0
        %2729 = vmatprep.subr.mxu0 0.0
        %2730 = vmatpush1.msra.mxu0 0.0
        %2731 = vmatprep.subr.mxu0 0.0
        %2732 = vmatpush1.msra.mxu0 0.0
        %2733 = vmatprep.subr.mxu0 0.0
        %2734 = vmatpush1.msra.mxu0 0.0
        %2735 = vmatprep.subr.mxu0 0.0
        %2736 = vmatpush1.msra.mxu0 0.0
        %2737 = vmatprep.subr.mxu0 0.0
        %2738 = vmatpush1.msra.mxu0 0.0
        %2739 = vmatprep.mubr.f32.mxu0 0.0
        %v2740 = vand.u32 %v1491, 4294901760
        %v2741 = vsub.f32 %v1491, %v2740
        %v2742 = vand.u32 %v2741, 4294901760
        %2743 = vmatmul.mubr.f32.gmra.mrb[0].mxu0 %v2742
        %v2744 = vpop.f32.mrb[0].mxu0
        %v2745 = vadd.f32 %v2642, %v2744
        %v2746 = vpop.f32.mrb[0].mxu0
        %2747 = vmatprep.mubr.f32.mxu0 0.0
        %v2748 = vand.u32 %v1492, 4294901760
        %v2749 = vsub.f32 %v1492, %v2748
        %v2750 = vand.u32 %v2749, 4294901760
        %2751 = vmatmul.mubr.f32.gmra.mrb[0].mxu0 %v2750
        %v2752 = vpop.f32.mrb[0].mxu0
        %v2753 = vadd.f32 %v2649, %v2752
        %v2754 = vpop.f32.mrb[0].mxu0
        %2755 = vmatprep.mubr.f32.mxu0 0.0
        %v2756 = vand.u32 %v1493, 4294901760
        %v2757 = vsub.f32 %v1493, %v2756
        %v2758 = vand.u32 %v2757, 4294901760
        %2759 = vmatmul.mubr.f32.gmra.mrb[0].mxu0 %v2758
        %v2760 = vpop.f32.mrb[0].mxu0
        %v2761 = vadd.f32 %v2656, %v2760
        %v2762 = vpop.f32.mrb[0].mxu0
        %2763 = vdwg.mxu0
        %2764 = vmatprep.subr.mxu0 0.0
        %v2765 = vand.u32 %v1495, 4294901760
        %v2766 = vsub.f32 %v1495, %v2765
        %v2767 = vand.u32 %v2766, 4294901760
        %2768 = vmatpush1.msra.mxu0 %v2767
        %2769 = vmatprep.subr.mxu0 0.0
        %v2770 = vand.u32 %v1496, 4294901760
        %v2771 = vsub.f32 %v1496, %v2770
        %v2772 = vand.u32 %v2771, 4294901760
        %2773 = vmatpush1.msra.mxu0 %v2772
        %2774 = vmatprep.subr.mxu0 0.0
        %v2775 = vand.u32 %v1497, 4294901760
        %v2776 = vsub.f32 %v1497, %v2775
        %v2777 = vand.u32 %v2776, 4294901760
        %2778 = vmatpush1.msra.mxu0 %v2777
        %2779 = vmatprep.subr.mxu0 0.0
        %v2780 = vand.u32 %v1498, 4294901760
        %v2781 = vsub.f32 %v1498, %v2780
        %v2782 = vand.u32 %v2781, 4294901760
        %2783 = vmatpush1.msra.mxu0 %v2782
        %2784 = vmatprep.subr.mxu0 0.0
        %v2785 = vand.u32 %v1499, 4294901760
        %v2786 = vsub.f32 %v1499, %v2785
        %v2787 = vand.u32 %v2786, 4294901760
        %2788 = vmatpush1.msra.mxu0 %v2787
        %2789 = vmatprep.subr.mxu0 0.0
        %v2790 = vand.u32 %v1500, 4294901760
        %v2791 = vsub.f32 %v1500, %v2790
        %v2792 = vand.u32 %v2791, 4294901760
        %2793 = vmatpush1.msra.mxu0 %v2792
        %2794 = vmatprep.subr.mxu0 0.0
        %v2795 = vand.u32 %v1501, 4294901760
        %v2796 = vsub.f32 %v1501, %v2795
        %v2797 = vand.u32 %v2796, 4294901760
        %2798 = vmatpush1.msra.mxu0 %v2797
        %2799 = vmatprep.subr.mxu0 0.0
        %v2800 = vand.u32 %v1502, 4294901760
        %v2801 = vsub.f32 %v1502, %v2800
        %v2802 = vand.u32 %v2801, 4294901760
        %2803 = vmatpush1.msra.mxu0 %v2802
        %2804 = vmatprep.subr.mxu0 0.0
        %v2805 = vand.u32 %v1503, 4294901760
        %v2806 = vsub.f32 %v1503, %v2805
        %v2807 = vand.u32 %v2806, 4294901760
        %2808 = vmatpush1.msra.mxu0 %v2807
        %2809 = vmatprep.subr.mxu0 0.0
        %v2810 = vand.u32 %v1504, 4294901760
        %v2811 = vsub.f32 %v1504, %v2810
        %v2812 = vand.u32 %v2811, 4294901760
        %2813 = vmatpush1.msra.mxu0 %v2812
        %2814 = vmatprep.subr.mxu0 0.0
        %v2815 = vand.u32 %v1505, 4294901760
        %v2816 = vsub.f32 %v1505, %v2815
        %v2817 = vand.u32 %v2816, 4294901760
        %2818 = vmatpush1.msra.mxu0 %v2817
        %2819 = vmatprep.subr.mxu0 0.0
        %v2820 = vand.u32 %v1506, 4294901760
        %v2821 = vsub.f32 %v1506, %v2820
        %v2822 = vand.u32 %v2821, 4294901760
        %2823 = vmatpush1.msra.mxu0 %v2822
        %2824 = vmatprep.subr.mxu0 0.0
        %v2825 = vand.u32 %v1507, 4294901760
        %v2826 = vsub.f32 %v1507, %v2825
        %v2827 = vand.u32 %v2826, 4294901760
        %2828 = vmatpush1.msra.mxu0 %v2827
        %2829 = vmatprep.subr.mxu0 0.0
        %v2830 = vand.u32 %v1508, 4294901760
        %v2831 = vsub.f32 %v1508, %v2830
        %v2832 = vand.u32 %v2831, 4294901760
        %2833 = vmatpush1.msra.mxu0 %v2832
        %2834 = vmatprep.subr.mxu0 0.0
        %v2835 = vand.u32 %v1509, 4294901760
        %v2836 = vsub.f32 %v1509, %v2835
        %v2837 = vand.u32 %v2836, 4294901760
        %2838 = vmatpush1.msra.mxu0 %v2837
        %2839 = vmatprep.subr.mxu0 0.0
        %v2840 = vand.u32 %v1510, 4294901760
        %v2841 = vsub.f32 %v1510, %v2840
        %v2842 = vand.u32 %v2841, 4294901760
        %2843 = vmatpush1.msra.mxu0 %v2842
        %2844 = vmatprep.subr.mxu0 0.0
        %2845 = vmatpush1.msra.mxu0 0.0
        %2846 = vmatprep.subr.mxu0 0.0
        %2847 = vmatpush1.msra.mxu0 0.0
        %2848 = vmatprep.subr.mxu0 0.0
        %2849 = vmatpush1.msra.mxu0 0.0
        %2850 = vmatprep.subr.mxu0 0.0
        %2851 = vmatpush1.msra.mxu0 0.0
        %2852 = vmatprep.subr.mxu0 0.0
        %2853 = vmatpush1.msra.mxu0 0.0
        %2854 = vmatprep.subr.mxu0 0.0
        %2855 = vmatpush1.msra.mxu0 0.0
        %2856 = vmatprep.subr.mxu0 0.0
        %2857 = vmatpush1.msra.mxu0 0.0
        %2858 = vmatprep.subr.mxu0 0.0
        %2859 = vmatpush1.msra.mxu0 0.0
        %2860 = vmatprep.subr.mxu0 0.0
        %2861 = vmatpush1.msra.mxu0 0.0
        %2862 = vmatprep.subr.mxu0 0.0
        %2863 = vmatpush1.msra.mxu0 0.0
        %2864 = vmatprep.subr.mxu0 0.0
        %2865 = vmatpush1.msra.mxu0 0.0
        %2866 = vmatprep.subr.mxu0 0.0
        %2867 = vmatpush1.msra.mxu0 0.0
        %2868 = vmatprep.subr.mxu0 0.0
        %2869 = vmatpush1.msra.mxu0 0.0
        %2870 = vmatprep.subr.mxu0 0.0
        %2871 = vmatpush1.msra.mxu0 0.0
        %2872 = vmatprep.subr.mxu0 0.0
        %2873 = vmatpush1.msra.mxu0 0.0
        %2874 = vmatprep.subr.mxu0 0.0
        %2875 = vmatpush1.msra.mxu0 0.0
        %2876 = vmatprep.mubr.f32.mxu0 0.0
        %v2877 = vand.u32 %v1491, 4294901760
        %2878 = vmatmul.mubr.f32.gmra.mrb[0].mxu0 %v2877
        %v2879 = vpop.f32.mrb[0].mxu0
        %v2880 = vadd.f32 %v2745, %v2879
        %v2881 = vpop.f32.mrb[0].mxu0
        %2882 = vmatprep.mubr.f32.mxu0 0.0
        %v2883 = vand.u32 %v1492, 4294901760
        %2884 = vmatmul.mubr.f32.gmra.mrb[0].mxu0 %v2883
        %v2885 = vpop.f32.mrb[0].mxu0
        %v2886 = vadd.f32 %v2753, %v2885
        %v2887 = vpop.f32.mrb[0].mxu0
        %2888 = vmatprep.mubr.f32.mxu0 0.0
        %v2889 = vand.u32 %v1493, 4294901760
        %2890 = vmatmul.mubr.f32.gmra.mrb[0].mxu0 %v2889
        %v2891 = vpop.f32.mrb[0].mxu0
        %v2892 = vadd.f32 %v2761, %v2891
        %v2893 = vpop.f32.mrb[0].mxu0
        %2894 = vdwg.mxu0
        %2895 = vmatprep.subr.mxu0 0.0
        %v2896 = vand.u32 %v1495, 4294901760
        %2897 = vmatpush1.msra.mxu0 %v2896
        %2898 = vmatprep.subr.mxu0 0.0
        %v2899 = vand.u32 %v1496, 4294901760
        %2900 = vmatpush1.msra.mxu0 %v2899
        %2901 = vmatprep.subr.mxu0 0.0
        %v2902 = vand.u32 %v1497, 4294901760
        %2903 = vmatpush1.msra.mxu0 %v2902
        %2904 = vmatprep.subr.mxu0 0.0
        %v2905 = vand.u32 %v1498, 4294901760
        %2906 = vmatpush1.msra.mxu0 %v2905
        %2907 = vmatprep.subr.mxu0 0.0
        %v2908 = vand.u32 %v1499, 4294901760
        %2909 = vmatpush1.msra.mxu0 %v2908
        %2910 = vmatprep.subr.mxu0 0.0
        %v2911 = vand.u32 %v1500, 4294901760
        %2912 = vmatpush1.msra.mxu0 %v2911
        %2913 = vmatprep.subr.mxu0 0.0
        %v2914 = vand.u32 %v1501, 4294901760
        %2915 = vmatpush1.msra.mxu0 %v2914
        %2916 = vmatprep.subr.mxu0 0.0
        %v2917 = vand.u32 %v1502, 4294901760
        %2918 = vmatpush1.msra.mxu0 %v2917
        %2919 = vmatprep.subr.mxu0 0.0
        %v2920 = vand.u32 %v1503, 4294901760
        %2921 = vmatpush1.msra.mxu0 %v2920
        %2922 = vmatprep.subr.mxu0 0.0
        %v2923 = vand.u32 %v1504, 4294901760
        %2924 = vmatpush1.msra.mxu0 %v2923
        %2925 = vmatprep.subr.mxu0 0.0
        %v2926 = vand.u32 %v1505, 4294901760
        %2927 = vmatpush1.msra.mxu0 %v2926
        %2928 = vmatprep.subr.mxu0 0.0
        %v2929 = vand.u32 %v1506, 4294901760
        %2930 = vmatpush1.msra.mxu0 %v2929
        %2931 = vmatprep.subr.mxu0 0.0
        %v2932 = vand.u32 %v1507, 4294901760
        %2933 = vmatpush1.msra.mxu0 %v2932
        %2934 = vmatprep.subr.mxu0 0.0
        %v2935 = vand.u32 %v1508, 4294901760
        %2936 = vmatpush1.msra.mxu0 %v2935
        %2937 = vmatprep.subr.mxu0 0.0
        %v2938 = vand.u32 %v1509, 4294901760
        %2939 = vmatpush1.msra.mxu0 %v2938
        %2940 = vmatprep.subr.mxu0 0.0
        %v2941 = vand.u32 %v1510, 4294901760
        %2942 = vmatpush1.msra.mxu0 %v2941
        %2943 = vmatprep.subr.mxu0 0.0
        %2944 = vmatpush1.msra.mxu0 0.0
        %2945 = vmatprep.subr.mxu0 0.0
        %2946 = vmatpush1.msra.mxu0 0.0
        %2947 = vmatprep.subr.mxu0 0.0
        %2948 = vmatpush1.msra.mxu0 0.0
        %2949 = vmatprep.subr.mxu0 0.0
        %2950 = vmatpush1.msra.mxu0 0.0
        %2951 = vmatprep.subr.mxu0 0.0
        %2952 = vmatpush1.msra.mxu0 0.0
        %2953 = vmatprep.subr.mxu0 0.0
        %2954 = vmatpush1.msra.mxu0 0.0
        %2955 = vmatprep.subr.mxu0 0.0
        %2956 = vmatpush1.msra.mxu0 0.0
        %2957 = vmatprep.subr.mxu0 0.0
        %2958 = vmatpush1.msra.mxu0 0.0
        %2959 = vmatprep.subr.mxu0 0.0
        %2960 = vmatpush1.msra.mxu0 0.0
        %2961 = vmatprep.subr.mxu0 0.0
        %2962 = vmatpush1.msra.mxu0 0.0
        %2963 = vmatprep.subr.mxu0 0.0
        %2964 = vmatpush1.msra.mxu0 0.0
        %2965 = vmatprep.subr.mxu0 0.0
        %2966 = vmatpush1.msra.mxu0 0.0
        %2967 = vmatprep.subr.mxu0 0.0
        %2968 = vmatpush1.msra.mxu0 0.0
        %2969 = vmatprep.subr.mxu0 0.0
        %2970 = vmatpush1.msra.mxu0 0.0
        %2971 = vmatprep.subr.mxu0 0.0
        %2972 = vmatpush1.msra.mxu0 0.0
        %2973 = vmatprep.subr.mxu0 0.0
        %2974 = vmatpush1.msra.mxu0 0.0
        %2975 = vmatprep.mubr.f32.mxu0 0.0
        %v2976 = vand.u32 %v1491, 4294901760
        %2977 = vmatmul.mubr.f32.gmra.mrb[0].mxu0 %v2976
        %v2978 = vpop.f32.mrb[0].mxu0
        %v2979 = vadd.f32 %v2880, %v2978
        %v2980 = vpop.f32.mrb[0].mxu0
        %2981 = vmatprep.mubr.f32.mxu0 0.0
        %v2982 = vand.u32 %v1492, 4294901760
        %2983 = vmatmul.mubr.f32.gmra.mrb[0].mxu0 %v2982
        %v2984 = vpop.f32.mrb[0].mxu0
        %v2985 = vadd.f32 %v2886, %v2984
        %v2986 = vpop.f32.mrb[0].mxu0
        %2987 = vmatprep.mubr.f32.mxu0 0.0
        %v2988 = vand.u32 %v1493, 4294901760
        %2989 = vmatmul.mubr.f32.gmra.mrb[0].mxu0 %v2988
        %v2990 = vpop.f32.mrb[0].mxu0
        %v2991 = vadd.f32 %v2892, %v2990
        %v2992 = vpop.f32.mrb[0].mxu0
        %2993 = vdwg.mxu0
        %s2994 = scalar_lea.vmem [#allocation2], 256
        %v2995 = vld [vmem:[%s2994] sm:$0xff]
        %v2996 = vld [vmem:[%s2994 + $0x8] sm:$0xff]
        %v2997 = vld [vmem:[%s2994 + $0x10] sm:$0xff]
        %v2998 = vld [vmem:[%s2994 + $0x18] sm:$0xff]
        %v2999 = vld [vmem:[%s2994 + $0x20] sm:$0xff]
        %v3000 = vld [vmem:[%s2994 + $0x28] sm:$0xff]
        %v3001 = vld [vmem:[%s2994 + $0x30] sm:$0xff]
        %v3002 = vld [vmem:[%s2994 + $0x38] sm:$0xff]
        %v3003 = vld [vmem:[%s2994 + $0x40] sm:$0xff]
        %v3004 = vld [vmem:[%s2994 + $0x48] sm:$0xff]
        %v3005 = vld [vmem:[%s2994 + $0x50] sm:$0xff]
        %v3006 = vld [vmem:[%s2994 + $0x58] sm:$0xff]
        %v3007 = vld [vmem:[%s2994 + $0x60] sm:$0xff]
        %v3008 = vld [vmem:[%s2994 + $0x68] sm:$0xff]
        %v3009 = vld [vmem:[%s2994 + $0x70] sm:$0xff]
        %v3010 = vld [vmem:[%s2994 + $0x78] sm:$0xff]
        %vm3011 = vcmask 1045504
        %v3012 = vrot.slane %v1491, 2
        %v3013 = vrot.slane %v1492, 2
        %v3014 = vsel %vm3011, %v3012, %v3013
        %v3015 = vrot.slane %v1493, 2
        %v3016 = vsel %vm3011, %v3013, %v3015
        %3020 = vmatprep.subr.mxu0 0.0
        %v3021 = vand.u32 %v2995, 4294901760
        %3022 = vmatpush1.msra.mxu0 %v3021
        %3023 = vmatprep.subr.mxu0 0.0
        %v3024 = vand.u32 %v2996, 4294901760
        %3025 = vmatpush1.msra.mxu0 %v3024
        %3026 = vmatprep.subr.mxu0 0.0
        %v3027 = vand.u32 %v2997, 4294901760
        %3028 = vmatpush1.msra.mxu0 %v3027
        %3029 = vmatprep.subr.mxu0 0.0
        %v3030 = vand.u32 %v2998, 4294901760
        %3031 = vmatpush1.msra.mxu0 %v3030
        %3032 = vmatprep.subr.mxu0 0.0
        %v3033 = vand.u32 %v2999, 4294901760
        %3034 = vmatpush1.msra.mxu0 %v3033
        %3035 = vmatprep.subr.mxu0 0.0
        %v3036 = vand.u32 %v3000, 4294901760
        %3037 = vmatpush1.msra.mxu0 %v3036
        %3038 = vmatprep.subr.mxu0 0.0
        %v3039 = vand.u32 %v3001, 4294901760
        %3040 = vmatpush1.msra.mxu0 %v3039
        %3041 = vmatprep.subr.mxu0 0.0
        %v3042 = vand.u32 %v3002, 4294901760
        %3043 = vmatpush1.msra.mxu0 %v3042
        %3044 = vmatprep.subr.mxu0 0.0
        %v3045 = vand.u32 %v3003, 4294901760
        %3046 = vmatpush1.msra.mxu0 %v3045
        %3047 = vmatprep.subr.mxu0 0.0
        %v3048 = vand.u32 %v3004, 4294901760
        %3049 = vmatpush1.msra.mxu0 %v3048
        %3050 = vmatprep.subr.mxu0 0.0
        %v3051 = vand.u32 %v3005, 4294901760
        %3052 = vmatpush1.msra.mxu0 %v3051
        %3053 = vmatprep.subr.mxu0 0.0
        %v3054 = vand.u32 %v3006, 4294901760
        %3055 = vmatpush1.msra.mxu0 %v3054
        %3056 = vmatprep.subr.mxu0 0.0
        %v3057 = vand.u32 %v3007, 4294901760
        %3058 = vmatpush1.msra.mxu0 %v3057
        %3059 = vmatprep.subr.mxu0 0.0
        %v3060 = vand.u32 %v3008, 4294901760
        %3061 = vmatpush1.msra.mxu0 %v3060
        %3062 = vmatprep.subr.mxu0 0.0
        %v3063 = vand.u32 %v3009, 4294901760
        %3064 = vmatpush1.msra.mxu0 %v3063
        %3065 = vmatprep.subr.mxu0 0.0
        %v3066 = vand.u32 %v3010, 4294901760
        %3067 = vmatpush1.msra.mxu0 %v3066
        %3068 = vmatprep.subr.mxu0 0.0
        %3069 = vmatpush1.msra.mxu0 0.0
        %3070 = vmatprep.subr.mxu0 0.0
        %3071 = vmatpush1.msra.mxu0 0.0
        %3072 = vmatprep.subr.mxu0 0.0
        %3073 = vmatpush1.msra.mxu0 0.0
        %3074 = vmatprep.subr.mxu0 0.0
        %3075 = vmatpush1.msra.mxu0 0.0
        %3076 = vmatprep.subr.mxu0 0.0
        %3077 = vmatpush1.msra.mxu0 0.0
        %3078 = vmatprep.subr.mxu0 0.0
        %3079 = vmatpush1.msra.mxu0 0.0
        %3080 = vmatprep.subr.mxu0 0.0
        %3081 = vmatpush1.msra.mxu0 0.0
        %3082 = vmatprep.subr.mxu0 0.0
        %3083 = vmatpush1.msra.mxu0 0.0
        %3084 = vmatprep.subr.mxu0 0.0
        %3085 = vmatpush1.msra.mxu0 0.0
        %3086 = vmatprep.subr.mxu0 0.0
        %3087 = vmatpush1.msra.mxu0 0.0
        %3088 = vmatprep.subr.mxu0 0.0
        %3089 = vmatpush1.msra.mxu0 0.0
        %3090 = vmatprep.subr.mxu0 0.0
        %3091 = vmatpush1.msra.mxu0 0.0
        %3092 = vmatprep.subr.mxu0 0.0
        %3093 = vmatpush1.msra.mxu0 0.0
        %3094 = vmatprep.subr.mxu0 0.0
        %3095 = vmatpush1.msra.mxu0 0.0
        %3096 = vmatprep.subr.mxu0 0.0
        %3097 = vmatpush1.msra.mxu0 0.0
        %3098 = vmatprep.subr.mxu0 0.0
        %3099 = vmatpush1.msra.mxu0 0.0
        %3100 = vmatprep.mubr.f32.mxu0 0.0
        %v3101 = vand.u32 %v3014, 4294901760
        %v3102 = vsub.f32 %v3014, %v3101
        %v3103 = vand.u32 %v3102, 4294901760
        %v3104 = vsub.f32 %v3102, %v3103
        %v3105 = vand.u32 %v3104, 4294901760
        %3106 = vmatmul.mubr.f32.gmra.mrb[0].mxu0 %v3105
        %v3107 = vpop.f32.mrb[0].mxu0
        %v3108 = vadd.f32 0.0, %v3107
        %v3109 = vpop.f32.mrb[0].mxu0
        %3110 = vmatprep.mubr.f32.mxu0 0.0
        %v3111 = vand.u32 %v3016, 4294901760
        %v3112 = vsub.f32 %v3016, %v3111
        %v3113 = vand.u32 %v3112, 4294901760
        %v3114 = vsub.f32 %v3112, %v3113
        %v3115 = vand.u32 %v3114, 4294901760
        %3116 = vmatmul.mubr.f32.gmra.mrb[0].mxu0 %v3115
        %v3117 = vpop.f32.mrb[0].mxu0
        %v3118 = vadd.f32 0.0, %v3117
        %v3119 = vpop.f32.mrb[0].mxu0
        %3120 = vmatprep.mubr.f32.mxu0 0.0
        %v3121 = vand.u32 %v3015, 4294901760
        %v3122 = vsub.f32 %v3015, %v3121
        %v3123 = vand.u32 %v3122, 4294901760
        %v3124 = vsub.f32 %v3122, %v3123
        %v3125 = vand.u32 %v3124, 4294901760
        %3126 = vmatmul.mubr.f32.gmra.mrb[0].mxu0 %v3125
        %v3127 = vpop.f32.mrb[0].mxu0
        %v3128 = vadd.f32 0.0, %v3127
        %v3129 = vpop.f32.mrb[0].mxu0
        %3130 = vdwg.mxu0
        %3131 = vmatprep.subr.mxu0 0.0
        %v3132 = vand.u32 %v2995, 4294901760
        %v3133 = vsub.f32 %v2995, %v3132
        %v3134 = vand.u32 %v3133, 4294901760
        %v3135 = vsub.f32 %v3133, %v3134
        %v3136 = vand.u32 %v3135, 4294901760
        %3137 = vmatpush1.msra.mxu0 %v3136
        %3138 = vmatprep.subr.mxu0 0.0
        %v3139 = vand.u32 %v2996, 4294901760
        %v3140 = vsub.f32 %v2996, %v3139
        %v3141 = vand.u32 %v3140, 4294901760
        %v3142 = vsub.f32 %v3140, %v3141
        %v3143 = vand.u32 %v3142, 4294901760
        %3144 = vmatpush1.msra.mxu0 %v3143
        %3145 = vmatprep.subr.mxu0 0.0
        %v3146 = vand.u32 %v2997, 4294901760
        %v3147 = vsub.f32 %v2997, %v3146
        %v3148 = vand.u32 %v3147, 4294901760
        %v3149 = vsub.f32 %v3147, %v3148
        %v3150 = vand.u32 %v3149, 4294901760
        %3151 = vmatpush1.msra.mxu0 %v3150
        %3152 = vmatprep.subr.mxu0 0.0
        %v3153 = vand.u32 %v2998, 4294901760
        %v3154 = vsub.f32 %v2998, %v3153
        %v3155 = vand.u32 %v3154, 4294901760
        %v3156 = vsub.f32 %v3154, %v3155
        %v3157 = vand.u32 %v3156, 4294901760
        %3158 = vmatpush1.msra.mxu0 %v3157
        %3159 = vmatprep.subr.mxu0 0.0
        %v3160 = vand.u32 %v2999, 4294901760
        %v3161 = vsub.f32 %v2999, %v3160
        %v3162 = vand.u32 %v3161, 4294901760
        %v3163 = vsub.f32 %v3161, %v3162
        %v3164 = vand.u32 %v3163, 4294901760
        %3165 = vmatpush1.msra.mxu0 %v3164
        %3166 = vmatprep.subr.mxu0 0.0
        %v3167 = vand.u32 %v3000, 4294901760
        %v3168 = vsub.f32 %v3000, %v3167
        %v3169 = vand.u32 %v3168, 4294901760
        %v3170 = vsub.f32 %v3168, %v3169
        %v3171 = vand.u32 %v3170, 4294901760
        %3172 = vmatpush1.msra.mxu0 %v3171
        %3173 = vmatprep.subr.mxu0 0.0
        %v3174 = vand.u32 %v3001, 4294901760
        %v3175 = vsub.f32 %v3001, %v3174
        %v3176 = vand.u32 %v3175, 4294901760
        %v3177 = vsub.f32 %v3175, %v3176
        %v3178 = vand.u32 %v3177, 4294901760
        %3179 = vmatpush1.msra.mxu0 %v3178
        %3180 = vmatprep.subr.mxu0 0.0
        %v3181 = vand.u32 %v3002, 4294901760
        %v3182 = vsub.f32 %v3002, %v3181
        %v3183 = vand.u32 %v3182, 4294901760
        %v3184 = vsub.f32 %v3182, %v3183
        %v3185 = vand.u32 %v3184, 4294901760
        %3186 = vmatpush1.msra.mxu0 %v3185
        %3187 = vmatprep.subr.mxu0 0.0
        %v3188 = vand.u32 %v3003, 4294901760
        %v3189 = vsub.f32 %v3003, %v3188
        %v3190 = vand.u32 %v3189, 4294901760
        %v3191 = vsub.f32 %v3189, %v3190
        %v3192 = vand.u32 %v3191, 4294901760
        %3193 = vmatpush1.msra.mxu0 %v3192
        %3194 = vmatprep.subr.mxu0 0.0
        %v3195 = vand.u32 %v3004, 4294901760
        %v3196 = vsub.f32 %v3004, %v3195
        %v3197 = vand.u32 %v3196, 4294901760
        %v3198 = vsub.f32 %v3196, %v3197
        %v3199 = vand.u32 %v3198, 4294901760
        %3200 = vmatpush1.msra.mxu0 %v3199
        %3201 = vmatprep.subr.mxu0 0.0
        %v3202 = vand.u32 %v3005, 4294901760
        %v3203 = vsub.f32 %v3005, %v3202
        %v3204 = vand.u32 %v3203, 4294901760
        %v3205 = vsub.f32 %v3203, %v3204
        %v3206 = vand.u32 %v3205, 4294901760
        %3207 = vmatpush1.msra.mxu0 %v3206
        %3208 = vmatprep.subr.mxu0 0.0
        %v3209 = vand.u32 %v3006, 4294901760
        %v3210 = vsub.f32 %v3006, %v3209
        %v3211 = vand.u32 %v3210, 4294901760
        %v3212 = vsub.f32 %v3210, %v3211
        %v3213 = vand.u32 %v3212, 4294901760
        %3214 = vmatpush1.msra.mxu0 %v3213
        %3215 = vmatprep.subr.mxu0 0.0
        %v3216 = vand.u32 %v3007, 4294901760
        %v3217 = vsub.f32 %v3007, %v3216
        %v3218 = vand.u32 %v3217, 4294901760
        %v3219 = vsub.f32 %v3217, %v3218
        %v3220 = vand.u32 %v3219, 4294901760
        %3221 = vmatpush1.msra.mxu0 %v3220
        %3222 = vmatprep.subr.mxu0 0.0
        %v3223 = vand.u32 %v3008, 4294901760
        %v3224 = vsub.f32 %v3008, %v3223
        %v3225 = vand.u32 %v3224, 4294901760
        %v3226 = vsub.f32 %v3224, %v3225
        %v3227 = vand.u32 %v3226, 4294901760
        %3228 = vmatpush1.msra.mxu0 %v3227
        %3229 = vmatprep.subr.mxu0 0.0
        %v3230 = vand.u32 %v3009, 4294901760
        %v3231 = vsub.f32 %v3009, %v3230
        %v3232 = vand.u32 %v3231, 4294901760
        %v3233 = vsub.f32 %v3231, %v3232
        %v3234 = vand.u32 %v3233, 4294901760
        %3235 = vmatpush1.msra.mxu0 %v3234
        %3236 = vmatprep.subr.mxu0 0.0
        %v3237 = vand.u32 %v3010, 4294901760
        %v3238 = vsub.f32 %v3010, %v3237
        %v3239 = vand.u32 %v3238, 4294901760
        %v3240 = vsub.f32 %v3238, %v3239
        %v3241 = vand.u32 %v3240, 4294901760
        %3242 = vmatpush1.msra.mxu0 %v3241
        %3243 = vmatprep.subr.mxu0 0.0
        %3244 = vmatpush1.msra.mxu0 0.0
        %3245 = vmatprep.subr.mxu0 0.0
        %3246 = vmatpush1.msra.mxu0 0.0
        %3247 = vmatprep.subr.mxu0 0.0
        %3248 = vmatpush1.msra.mxu0 0.0
        %3249 = vmatprep.subr.mxu0 0.0
        %3250 = vmatpush1.msra.mxu0 0.0
        %3251 = vmatprep.subr.mxu0 0.0
        %3252 = vmatpush1.msra.mxu0 0.0
        %3253 = vmatprep.subr.mxu0 0.0
        %3254 = vmatpush1.msra.mxu0 0.0
        %3255 = vmatprep.subr.mxu0 0.0
        %3256 = vmatpush1.msra.mxu0 0.0
        %3257 = vmatprep.subr.mxu0 0.0
        %3258 = vmatpush1.msra.mxu0 0.0
        %3259 = vmatprep.subr.mxu0 0.0
        %3260 = vmatpush1.msra.mxu0 0.0
        %3261 = vmatprep.subr.mxu0 0.0
        %3262 = vmatpush1.msra.mxu0 0.0
        %3263 = vmatprep.subr.mxu0 0.0
        %3264 = vmatpush1.msra.mxu0 0.0
        %3265 = vmatprep.subr.mxu0 0.0
        %3266 = vmatpush1.msra.mxu0 0.0
        %3267 = vmatprep.subr.mxu0 0.0
        %3268 = vmatpush1.msra.mxu0 0.0
        %3269 = vmatprep.subr.mxu0 0.0
        %3270 = vmatpush1.msra.mxu0 0.0
        %3271 = vmatprep.subr.mxu0 0.0
        %3272 = vmatpush1.msra.mxu0 0.0
        %3273 = vmatprep.subr.mxu0 0.0
        %3274 = vmatpush1.msra.mxu0 0.0
        %3275 = vmatprep.mubr.f32.mxu0 0.0
        %v3276 = vand.u32 %v3014, 4294901760
        %3277 = vmatmul.mubr.f32.gmra.mrb[0].mxu0 %v3276
        %v3278 = vpop.f32.mrb[0].mxu0
        %v3279 = vadd.f32 %v3108, %v3278
        %v3280 = vpop.f32.mrb[0].mxu0
        %3281 = vmatprep.mubr.f32.mxu0 0.0
        %v3282 = vand.u32 %v3016, 4294901760
        %3283 = vmatmul.mubr.f32.gmra.mrb[0].mxu0 %v3282
        %v3284 = vpop.f32.mrb[0].mxu0
        %v3285 = vadd.f32 %v3118, %v3284
        %v3286 = vpop.f32.mrb[0].mxu0
        %3287 = vmatprep.mubr.f32.mxu0 0.0
        %v3288 = vand.u32 %v3015, 4294901760
        %3289 = vmatmul.mubr.f32.gmra.mrb[0].mxu0 %v3288
        %v3290 = vpop.f32.mrb[0].mxu0
        %v3291 = vadd.f32 %v3128, %v3290
        %v3292 = vpop.f32.mrb[0].mxu0
        %3293 = vdwg.mxu0
        %3294 = vmatprep.subr.mxu0 0.0
        %v3295 = vand.u32 %v2995, 4294901760
        %v3296 = vsub.f32 %v2995, %v3295
        %3297 = vmatpush1.msra.mxu0 %v3296
        %3298 = vmatprep.subr.mxu0 0.0
        %v3299 = vand.u32 %v2996, 4294901760
        %v3300 = vsub.f32 %v2996, %v3299
        %3301 = vmatpush1.msra.mxu0 %v3300
        %3302 = vmatprep.subr.mxu0 0.0
        %v3303 = vand.u32 %v2997, 4294901760
        %v3304 = vsub.f32 %v2997, %v3303
        %3305 = vmatpush1.msra.mxu0 %v3304
        %3306 = vmatprep.subr.mxu0 0.0
        %v3307 = vand.u32 %v2998, 4294901760
        %v3308 = vsub.f32 %v2998, %v3307
        %3309 = vmatpush1.msra.mxu0 %v3308
        %3310 = vmatprep.subr.mxu0 0.0
        %v3311 = vand.u32 %v2999, 4294901760
        %v3312 = vsub.f32 %v2999, %v3311
        %3313 = vmatpush1.msra.mxu0 %v3312
        %3314 = vmatprep.subr.mxu0 0.0
        %v3315 = vand.u32 %v3000, 4294901760
        %v3316 = vsub.f32 %v3000, %v3315
        %3317 = vmatpush1.msra.mxu0 %v3316
        %3318 = vmatprep.subr.mxu0 0.0
        %v3319 = vand.u32 %v3001, 4294901760
        %v3320 = vsub.f32 %v3001, %v3319
        %3321 = vmatpush1.msra.mxu0 %v3320
        %3322 = vmatprep.subr.mxu0 0.0
        %v3323 = vand.u32 %v3002, 4294901760
        %v3324 = vsub.f32 %v3002, %v3323
        %3325 = vmatpush1.msra.mxu0 %v3324
        %3326 = vmatprep.subr.mxu0 0.0
        %v3327 = vand.u32 %v3003, 4294901760
        %v3328 = vsub.f32 %v3003, %v3327
        %3329 = vmatpush1.msra.mxu0 %v3328
        %3330 = vmatprep.subr.mxu0 0.0
        %v3331 = vand.u32 %v3004, 4294901760
        %v3332 = vsub.f32 %v3004, %v3331
        %3333 = vmatpush1.msra.mxu0 %v3332
        %3334 = vmatprep.subr.mxu0 0.0
        %v3335 = vand.u32 %v3005, 4294901760
        %v3336 = vsub.f32 %v3005, %v3335
        %3337 = vmatpush1.msra.mxu0 %v3336
        %3338 = vmatprep.subr.mxu0 0.0
        %v3339 = vand.u32 %v3006, 4294901760
        %v3340 = vsub.f32 %v3006, %v3339
        %3341 = vmatpush1.msra.mxu0 %v3340
        %3342 = vmatprep.subr.mxu0 0.0
        %v3343 = vand.u32 %v3007, 4294901760
        %v3344 = vsub.f32 %v3007, %v3343
        %3345 = vmatpush1.msra.mxu0 %v3344
        %3346 = vmatprep.subr.mxu0 0.0
        %v3347 = vand.u32 %v3008, 4294901760
        %v3348 = vsub.f32 %v3008, %v3347
        %3349 = vmatpush1.msra.mxu0 %v3348
        %3350 = vmatprep.subr.mxu0 0.0
        %v3351 = vand.u32 %v3009, 4294901760
        %v3352 = vsub.f32 %v3009, %v3351
        %3353 = vmatpush1.msra.mxu0 %v3352
        %3354 = vmatprep.subr.mxu0 0.0
        %v3355 = vand.u32 %v3010, 4294901760
        %v3356 = vsub.f32 %v3010, %v3355
        %3357 = vmatpush1.msra.mxu0 %v3356
        %3358 = vmatprep.subr.mxu0 0.0
        %3359 = vmatpush1.msra.mxu0 0.0
        %3360 = vmatprep.subr.mxu0 0.0
        %3361 = vmatpush1.msra.mxu0 0.0
        %3362 = vmatprep.subr.mxu0 0.0
        %3363 = vmatpush1.msra.mxu0 0.0
        %3364 = vmatprep.subr.mxu0 0.0
        %3365 = vmatpush1.msra.mxu0 0.0
        %3366 = vmatprep.subr.mxu0 0.0
        %3367 = vmatpush1.msra.mxu0 0.0
        %3368 = vmatprep.subr.mxu0 0.0
        %3369 = vmatpush1.msra.mxu0 0.0
        %3370 = vmatprep.subr.mxu0 0.0
        %3371 = vmatpush1.msra.mxu0 0.0
        %3372 = vmatprep.subr.mxu0 0.0
        %3373 = vmatpush1.msra.mxu0 0.0
        %3374 = vmatprep.subr.mxu0 0.0
        %3375 = vmatpush1.msra.mxu0 0.0
        %3376 = vmatprep.subr.mxu0 0.0
        %3377 = vmatpush1.msra.mxu0 0.0
        %3378 = vmatprep.subr.mxu0 0.0
        %3379 = vmatpush1.msra.mxu0 0.0
        %3380 = vmatprep.subr.mxu0 0.0
        %3381 = vmatpush1.msra.mxu0 0.0
        %3382 = vmatprep.subr.mxu0 0.0
        %3383 = vmatpush1.msra.mxu0 0.0
        %3384 = vmatprep.subr.mxu0 0.0
        %3385 = vmatpush1.msra.mxu0 0.0
        %3386 = vmatprep.subr.mxu0 0.0
        %3387 = vmatpush1.msra.mxu0 0.0
        %3388 = vmatprep.subr.mxu0 0.0
        %3389 = vmatpush1.msra.mxu0 0.0
        %3390 = vmatprep.mubr.f32.mxu0 0.0
        %v3391 = vand.u32 %v3014, 4294901760
        %v3392 = vsub.f32 %v3014, %v3391
        %3393 = vmatmul.mubr.f32.gmra.mrb[0].mxu0 %v3392
        %v3394 = vpop.f32.mrb[0].mxu0
        %v3395 = vadd.f32 %v3279, %v3394
        %v3396 = vpop.f32.mrb[0].mxu0
        %3397 = vmatprep.mubr.f32.mxu0 0.0
        %v3398 = vand.u32 %v3016, 4294901760
        %v3399 = vsub.f32 %v3016, %v3398
        %3400 = vmatmul.mubr.f32.gmra.mrb[0].mxu0 %v3399
        %v3401 = vpop.f32.mrb[0].mxu0
        %v3402 = vadd.f32 %v3285, %v3401
        %v3403 = vpop.f32.mrb[0].mxu0
        %3404 = vmatprep.mubr.f32.mxu0 0.0
        %v3405 = vand.u32 %v3015, 4294901760
        %v3406 = vsub.f32 %v3015, %v3405
        %3407 = vmatmul.mubr.f32.gmra.mrb[0].mxu0 %v3406
        %v3408 = vpop.f32.mrb[0].mxu0
        %v3409 = vadd.f32 %v3291, %v3408
        %v3410 = vpop.f32.mrb[0].mxu0
        %3411 = vdwg.mxu0
        %3412 = vmatprep.subr.mxu0 0.0
        %v3413 = vand.u32 %v2995, 4294901760
        %3414 = vmatpush1.msra.mxu0 %v3413
        %3415 = vmatprep.subr.mxu0 0.0
        %v3416 = vand.u32 %v2996, 4294901760
        %3417 = vmatpush1.msra.mxu0 %v3416
        %3418 = vmatprep.subr.mxu0 0.0
        %v3419 = vand.u32 %v2997, 4294901760
        %3420 = vmatpush1.msra.mxu0 %v3419
        %3421 = vmatprep.subr.mxu0 0.0
        %v3422 = vand.u32 %v2998, 4294901760
        %3423 = vmatpush1.msra.mxu0 %v3422
        %3424 = vmatprep.subr.mxu0 0.0
        %v3425 = vand.u32 %v2999, 4294901760
        %3426 = vmatpush1.msra.mxu0 %v3425
        %3427 = vmatprep.subr.mxu0 0.0
        %v3428 = vand.u32 %v3000, 4294901760
        %3429 = vmatpush1.msra.mxu0 %v3428
        %3430 = vmatprep.subr.mxu0 0.0
        %v3431 = vand.u32 %v3001, 4294901760
        %3432 = vmatpush1.msra.mxu0 %v3431
        %3433 = vmatprep.subr.mxu0 0.0
        %v3434 = vand.u32 %v3002, 4294901760
        %3435 = vmatpush1.msra.mxu0 %v3434
        %3436 = vmatprep.subr.mxu0 0.0
        %v3437 = vand.u32 %v3003, 4294901760
        %3438 = vmatpush1.msra.mxu0 %v3437
        %3439 = vmatprep.subr.mxu0 0.0
        %v3440 = vand.u32 %v3004, 4294901760
        %3441 = vmatpush1.msra.mxu0 %v3440
        %3442 = vmatprep.subr.mxu0 0.0
        %v3443 = vand.u32 %v3005, 4294901760
        %3444 = vmatpush1.msra.mxu0 %v3443
        %3445 = vmatprep.subr.mxu0 0.0
        %v3446 = vand.u32 %v3006, 4294901760
        %3447 = vmatpush1.msra.mxu0 %v3446
        %3448 = vmatprep.subr.mxu0 0.0
        %v3449 = vand.u32 %v3007, 4294901760
        %3450 = vmatpush1.msra.mxu0 %v3449
        %3451 = vmatprep.subr.mxu0 0.0
        %v3452 = vand.u32 %v3008, 4294901760
        %3453 = vmatpush1.msra.mxu0 %v3452
        %3454 = vmatprep.subr.mxu0 0.0
        %v3455 = vand.u32 %v3009, 4294901760
        %3456 = vmatpush1.msra.mxu0 %v3455
        %3457 = vmatprep.subr.mxu0 0.0
        %v3458 = vand.u32 %v3010, 4294901760
        %3459 = vmatpush1.msra.mxu0 %v3458
        %3460 = vmatprep.subr.mxu0 0.0
        %3461 = vmatpush1.msra.mxu0 0.0
        %3462 = vmatprep.subr.mxu0 0.0
        %3463 = vmatpush1.msra.mxu0 0.0
        %3464 = vmatprep.subr.mxu0 0.0
        %3465 = vmatpush1.msra.mxu0 0.0
        %3466 = vmatprep.subr.mxu0 0.0
        %3467 = vmatpush1.msra.mxu0 0.0
        %3468 = vmatprep.subr.mxu0 0.0
        %3469 = vmatpush1.msra.mxu0 0.0
        %3470 = vmatprep.subr.mxu0 0.0
        %3471 = vmatpush1.msra.mxu0 0.0
        %3472 = vmatprep.subr.mxu0 0.0
        %3473 = vmatpush1.msra.mxu0 0.0
        %3474 = vmatprep.subr.mxu0 0.0
        %3475 = vmatpush1.msra.mxu0 0.0
        %3476 = vmatprep.subr.mxu0 0.0
        %3477 = vmatpush1.msra.mxu0 0.0
        %3478 = vmatprep.subr.mxu0 0.0
        %3479 = vmatpush1.msra.mxu0 0.0
        %3480 = vmatprep.subr.mxu0 0.0
        %3481 = vmatpush1.msra.mxu0 0.0
        %3482 = vmatprep.subr.mxu0 0.0
        %3483 = vmatpush1.msra.mxu0 0.0
        %3484 = vmatprep.subr.mxu0 0.0
        %3485 = vmatpush1.msra.mxu0 0.0
        %3486 = vmatprep.subr.mxu0 0.0
        %3487 = vmatpush1.msra.mxu0 0.0
        %3488 = vmatprep.subr.mxu0 0.0
        %3489 = vmatpush1.msra.mxu0 0.0
        %3490 = vmatprep.subr.mxu0 0.0
        %3491 = vmatpush1.msra.mxu0 0.0
        %3492 = vmatprep.mubr.f32.mxu0 0.0
        %v3493 = vand.u32 %v3014, 4294901760
        %v3494 = vsub.f32 %v3014, %v3493
        %v3495 = vand.u32 %v3494, 4294901760
        %3496 = vmatmul.mubr.f32.gmra.mrb[0].mxu0 %v3495
        %v3497 = vpop.f32.mrb[0].mxu0
        %v3498 = vadd.f32 %v3395, %v3497
        %v3499 = vpop.f32.mrb[0].mxu0
        %3500 = vmatprep.mubr.f32.mxu0 0.0
        %v3501 = vand.u32 %v3016, 4294901760
        %v3502 = vsub.f32 %v3016, %v3501
        %v3503 = vand.u32 %v3502, 4294901760
        %3504 = vmatmul.mubr.f32.gmra.mrb[0].mxu0 %v3503
        %v3505 = vpop.f32.mrb[0].mxu0
        %v3506 = vadd.f32 %v3402, %v3505
        %v3507 = vpop.f32.mrb[0].mxu0
        %3508 = vmatprep.mubr.f32.mxu0 0.0
        %v3509 = vand.u32 %v3015, 4294901760
        %v3510 = vsub.f32 %v3015, %v3509
        %v3511 = vand.u32 %v3510, 4294901760
        %3512 = vmatmul.mubr.f32.gmra.mrb[0].mxu0 %v3511
        %v3513 = vpop.f32.mrb[0].mxu0
        %v3514 = vadd.f32 %v3409, %v3513
        %v3515 = vpop.f32.mrb[0].mxu0
        %3516 = vdwg.mxu0
        %3517 = vmatprep.subr.mxu0 0.0
        %v3518 = vand.u32 %v2995, 4294901760
        %v3519 = vsub.f32 %v2995, %v3518
        %v3520 = vand.u32 %v3519, 4294901760
        %3521 = vmatpush1.msra.mxu0 %v3520
        %3522 = vmatprep.subr.mxu0 0.0
        %v3523 = vand.u32 %v2996, 4294901760
        %v3524 = vsub.f32 %v2996, %v3523
        %v3525 = vand.u32 %v3524, 4294901760
        %3526 = vmatpush1.msra.mxu0 %v3525
        %3527 = vmatprep.subr.mxu0 0.0
        %v3528 = vand.u32 %v2997, 4294901760
        %v3529 = vsub.f32 %v2997, %v3528
        %v3530 = vand.u32 %v3529, 4294901760
        %3531 = vmatpush1.msra.mxu0 %v3530
        %3532 = vmatprep.subr.mxu0 0.0
        %v3533 = vand.u32 %v2998, 4294901760
        %v3534 = vsub.f32 %v2998, %v3533
        %v3535 = vand.u32 %v3534, 4294901760
        %3536 = vmatpush1.msra.mxu0 %v3535
        %3537 = vmatprep.subr.mxu0 0.0
        %v3538 = vand.u32 %v2999, 4294901760
        %v3539 = vsub.f32 %v2999, %v3538
        %v3540 = vand.u32 %v3539, 4294901760
        %3541 = vmatpush1.msra.mxu0 %v3540
        %3542 = vmatprep.subr.mxu0 0.0
        %v3543 = vand.u32 %v3000, 4294901760
        %v3544 = vsub.f32 %v3000, %v3543
        %v3545 = vand.u32 %v3544, 4294901760
        %3546 = vmatpush1.msra.mxu0 %v3545
        %3547 = vmatprep.subr.mxu0 0.0
        %v3548 = vand.u32 %v3001, 4294901760
        %v3549 = vsub.f32 %v3001, %v3548
        %v3550 = vand.u32 %v3549, 4294901760
        %3551 = vmatpush1.msra.mxu0 %v3550
        %3552 = vmatprep.subr.mxu0 0.0
        %v3553 = vand.u32 %v3002, 4294901760
        %v3554 = vsub.f32 %v3002, %v3553
        %v3555 = vand.u32 %v3554, 4294901760
        %3556 = vmatpush1.msra.mxu0 %v3555
        %3557 = vmatprep.subr.mxu0 0.0
        %v3558 = vand.u32 %v3003, 4294901760
        %v3559 = vsub.f32 %v3003, %v3558
        %v3560 = vand.u32 %v3559, 4294901760
        %3561 = vmatpush1.msra.mxu0 %v3560
        %3562 = vmatprep.subr.mxu0 0.0
        %v3563 = vand.u32 %v3004, 4294901760
        %v3564 = vsub.f32 %v3004, %v3563
        %v3565 = vand.u32 %v3564, 4294901760
        %3566 = vmatpush1.msra.mxu0 %v3565
        %3567 = vmatprep.subr.mxu0 0.0
        %v3568 = vand.u32 %v3005, 4294901760
        %v3569 = vsub.f32 %v3005, %v3568
        %v3570 = vand.u32 %v3569, 4294901760
        %3571 = vmatpush1.msra.mxu0 %v3570
        %3572 = vmatprep.subr.mxu0 0.0
        %v3573 = vand.u32 %v3006, 4294901760
        %v3574 = vsub.f32 %v3006, %v3573
        %v3575 = vand.u32 %v3574, 4294901760
        %3576 = vmatpush1.msra.mxu0 %v3575
        %3577 = vmatprep.subr.mxu0 0.0
        %v3578 = vand.u32 %v3007, 4294901760
        %v3579 = vsub.f32 %v3007, %v3578
        %v3580 = vand.u32 %v3579, 4294901760
        %3581 = vmatpush1.msra.mxu0 %v3580
        %3582 = vmatprep.subr.mxu0 0.0
        %v3583 = vand.u32 %v3008, 4294901760
        %v3584 = vsub.f32 %v3008, %v3583
        %v3585 = vand.u32 %v3584, 4294901760
        %3586 = vmatpush1.msra.mxu0 %v3585
        %3587 = vmatprep.subr.mxu0 0.0
        %v3588 = vand.u32 %v3009, 4294901760
        %v3589 = vsub.f32 %v3009, %v3588
        %v3590 = vand.u32 %v3589, 4294901760
        %3591 = vmatpush1.msra.mxu0 %v3590
        %3592 = vmatprep.subr.mxu0 0.0
        %v3593 = vand.u32 %v3010, 4294901760
        %v3594 = vsub.f32 %v3010, %v3593
        %v3595 = vand.u32 %v3594, 4294901760
        %3596 = vmatpush1.msra.mxu0 %v3595
        %3597 = vmatprep.subr.mxu0 0.0
        %3598 = vmatpush1.msra.mxu0 0.0
        %3599 = vmatprep.subr.mxu0 0.0
        %3600 = vmatpush1.msra.mxu0 0.0
        %3601 = vmatprep.subr.mxu0 0.0
        %3602 = vmatpush1.msra.mxu0 0.0
        %3603 = vmatprep.subr.mxu0 0.0
        %3604 = vmatpush1.msra.mxu0 0.0
        %3605 = vmatprep.subr.mxu0 0.0
        %3606 = vmatpush1.msra.mxu0 0.0
        %3607 = vmatprep.subr.mxu0 0.0
        %3608 = vmatpush1.msra.mxu0 0.0
        %3609 = vmatprep.subr.mxu0 0.0
        %3610 = vmatpush1.msra.mxu0 0.0
        %3611 = vmatprep.subr.mxu0 0.0
        %3612 = vmatpush1.msra.mxu0 0.0
        %3613 = vmatprep.subr.mxu0 0.0
        %3614 = vmatpush1.msra.mxu0 0.0
        %3615 = vmatprep.subr.mxu0 0.0
        %3616 = vmatpush1.msra.mxu0 0.0
        %3617 = vmatprep.subr.mxu0 0.0
        %3618 = vmatpush1.msra.mxu0 0.0
        %3619 = vmatprep.subr.mxu0 0.0
        %3620 = vmatpush1.msra.mxu0 0.0
        %3621 = vmatprep.subr.mxu0 0.0
        %3622 = vmatpush1.msra.mxu0 0.0
        %3623 = vmatprep.subr.mxu0 0.0
        %3624 = vmatpush1.msra.mxu0 0.0
        %3625 = vmatprep.subr.mxu0 0.0
        %3626 = vmatpush1.msra.mxu0 0.0
        %3627 = vmatprep.subr.mxu0 0.0
        %3628 = vmatpush1.msra.mxu0 0.0
        %3629 = vmatprep.mubr.f32.mxu0 0.0
        %v3630 = vand.u32 %v3014, 4294901760
        %3631 = vmatmul.mubr.f32.gmra.mrb[0].mxu0 %v3630
        %v3632 = vpop.f32.mrb[0].mxu0
        %v3633 = vadd.f32 %v3498, %v3632
        %v3634 = vpop.f32.mrb[0].mxu0
        %3635 = vmatprep.mubr.f32.mxu0 0.0
        %v3636 = vand.u32 %v3016, 4294901760
        %3637 = vmatmul.mubr.f32.gmra.mrb[0].mxu0 %v3636
        %v3638 = vpop.f32.mrb[0].mxu0
        %v3639 = vadd.f32 %v3506, %v3638
        %v3640 = vpop.f32.mrb[0].mxu0
        %3641 = vmatprep.mubr.f32.mxu0 0.0
        %v3642 = vand.u32 %v3015, 4294901760
        %3643 = vmatmul.mubr.f32.gmra.mrb[0].mxu0 %v3642
        %v3644 = vpop.f32.mrb[0].mxu0
        %v3645 = vadd.f32 %v3514, %v3644
        %v3646 = vpop.f32.mrb[0].mxu0
        %3647 = vdwg.mxu0
        %3648 = vmatprep.subr.mxu0 0.0
        %v3649 = vand.u32 %v2995, 4294901760
        %3650 = vmatpush1.msra.mxu0 %v3649
        %3651 = vmatprep.subr.mxu0 0.0
        %v3652 = vand.u32 %v2996, 4294901760
        %3653 = vmatpush1.msra.mxu0 %v3652
        %3654 = vmatprep.subr.mxu0 0.0
        %v3655 = vand.u32 %v2997, 4294901760
        %3656 = vmatpush1.msra.mxu0 %v3655
        %3657 = vmatprep.subr.mxu0 0.0
        %v3658 = vand.u32 %v2998, 4294901760
        %3659 = vmatpush1.msra.mxu0 %v3658
        %3660 = vmatprep.subr.mxu0 0.0
        %v3661 = vand.u32 %v2999, 4294901760
        %3662 = vmatpush1.msra.mxu0 %v3661
        %3663 = vmatprep.subr.mxu0 0.0
        %v3664 = vand.u32 %v3000, 4294901760
        %3665 = vmatpush1.msra.mxu0 %v3664
        %3666 = vmatprep.subr.mxu0 0.0
        %v3667 = vand.u32 %v3001, 4294901760
        %3668 = vmatpush1.msra.mxu0 %v3667
        %3669 = vmatprep.subr.mxu0 0.0
        %v3670 = vand.u32 %v3002, 4294901760
        %3671 = vmatpush1.msra.mxu0 %v3670
        %3672 = vmatprep.subr.mxu0 0.0
        %v3673 = vand.u32 %v3003, 4294901760
        %3674 = vmatpush1.msra.mxu0 %v3673
        %3675 = vmatprep.subr.mxu0 0.0
        %v3676 = vand.u32 %v3004, 4294901760
        %3677 = vmatpush1.msra.mxu0 %v3676
        %3678 = vmatprep.subr.mxu0 0.0
        %v3679 = vand.u32 %v3005, 4294901760
        %3680 = vmatpush1.msra.mxu0 %v3679
        %3681 = vmatprep.subr.mxu0 0.0
        %v3682 = vand.u32 %v3006, 4294901760
        %3683 = vmatpush1.msra.mxu0 %v3682
        %3684 = vmatprep.subr.mxu0 0.0
        %v3685 = vand.u32 %v3007, 4294901760
        %3686 = vmatpush1.msra.mxu0 %v3685
        %3687 = vmatprep.subr.mxu0 0.0
        %v3688 = vand.u32 %v3008, 4294901760
        %3689 = vmatpush1.msra.mxu0 %v3688
        %3690 = vmatprep.subr.mxu0 0.0
        %v3691 = vand.u32 %v3009, 4294901760
        %3692 = vmatpush1.msra.mxu0 %v3691
        %3693 = vmatprep.subr.mxu0 0.0
        %v3694 = vand.u32 %v3010, 4294901760
        %3695 = vmatpush1.msra.mxu0 %v3694
        %3696 = vmatprep.subr.mxu0 0.0
        %3697 = vmatpush1.msra.mxu0 0.0
        %3698 = vmatprep.subr.mxu0 0.0
        %3699 = vmatpush1.msra.mxu0 0.0
        %3700 = vmatprep.subr.mxu0 0.0
        %3701 = vmatpush1.msra.mxu0 0.0
        %3702 = vmatprep.subr.mxu0 0.0
        %3703 = vmatpush1.msra.mxu0 0.0
        %3704 = vmatprep.subr.mxu0 0.0
        %3705 = vmatpush1.msra.mxu0 0.0
        %3706 = vmatprep.subr.mxu0 0.0
        %3707 = vmatpush1.msra.mxu0 0.0
        %3708 = vmatprep.subr.mxu0 0.0
        %3709 = vmatpush1.msra.mxu0 0.0
        %3710 = vmatprep.subr.mxu0 0.0
        %3711 = vmatpush1.msra.mxu0 0.0
        %3712 = vmatprep.subr.mxu0 0.0
        %3713 = vmatpush1.msra.mxu0 0.0
        %3714 = vmatprep.subr.mxu0 0.0
        %3715 = vmatpush1.msra.mxu0 0.0
        %3716 = vmatprep.subr.mxu0 0.0
        %3717 = vmatpush1.msra.mxu0 0.0
        %3718 = vmatprep.subr.mxu0 0.0
        %3719 = vmatpush1.msra.mxu0 0.0
        %3720 = vmatprep.subr.mxu0 0.0
        %3721 = vmatpush1.msra.mxu0 0.0
        %3722 = vmatprep.subr.mxu0 0.0
        %3723 = vmatpush1.msra.mxu0 0.0
        %3724 = vmatprep.subr.mxu0 0.0
        %3725 = vmatpush1.msra.mxu0 0.0
        %3726 = vmatprep.subr.mxu0 0.0
        %3727 = vmatpush1.msra.mxu0 0.0
        %3728 = vmatprep.mubr.f32.mxu0 0.0
        %v3729 = vand.u32 %v3014, 4294901760
        %3730 = vmatmul.mubr.f32.gmra.mrb[0].mxu0 %v3729
        %v3731 = vpop.f32.mrb[0].mxu0
        %v3732 = vadd.f32 %v3633, %v3731
        %v3733 = vpop.f32.mrb[0].mxu0
        %3734 = vmatprep.mubr.f32.mxu0 0.0
        %v3735 = vand.u32 %v3016, 4294901760
        %3736 = vmatmul.mubr.f32.gmra.mrb[0].mxu0 %v3735
        %v3737 = vpop.f32.mrb[0].mxu0
        %v3738 = vadd.f32 %v3639, %v3737
        %v3739 = vpop.f32.mrb[0].mxu0
        %3740 = vmatprep.mubr.f32.mxu0 0.0
        %v3741 = vand.u32 %v3015, 4294901760
        %3742 = vmatmul.mubr.f32.gmra.mrb[0].mxu0 %v3741
        %v3743 = vpop.f32.mrb[0].mxu0
        %v3744 = vadd.f32 %v3645, %v3743
        %v3745 = vpop.f32.mrb[0].mxu0
        %3746 = vdwg.mxu0
        %v3747 = vadd.f32 %v2979, %v3732
        %v3748 = vadd.f32 %v2985, %v3738
        %v3749 = vadd.f32 %v2991, %v3744
        %s3750 = scalar_lea.vmem [#allocation2], 384
        %v3751 = vld [vmem:[%s3750] sm:$0xff]
        %v3752 = vld [vmem:[%s3750 + $0x8] sm:$0xff]
        %v3753 = vld [vmem:[%s3750 + $0x10] sm:$0xff]
        %v3754 = vld [vmem:[%s3750 + $0x18] sm:$0xff]
        %v3755 = vld [vmem:[%s3750 + $0x20] sm:$0xff]
        %v3756 = vld [vmem:[%s3750 + $0x28] sm:$0xff]
        %v3757 = vld [vmem:[%s3750 + $0x30] sm:$0xff]
        %v3758 = vld [vmem:[%s3750 + $0x38] sm:$0xff]
        %v3759 = vld [vmem:[%s3750 + $0x40] sm:$0xff]
        %v3760 = vld [vmem:[%s3750 + $0x48] sm:$0xff]
        %v3761 = vld [vmem:[%s3750 + $0x50] sm:$0xff]
        %v3762 = vld [vmem:[%s3750 + $0x58] sm:$0xff]
        %v3763 = vld [vmem:[%s3750 + $0x60] sm:$0xff]
        %v3764 = vld [vmem:[%s3750 + $0x68] sm:$0xff]
        %v3765 = vld [vmem:[%s3750 + $0x70] sm:$0xff]
        %v3766 = vld [vmem:[%s3750 + $0x78] sm:$0xff]
        %vm3767 = vcmask 1044480
        %v3768 = vrot.slane %v1491, 3
        %v3769 = vrot.slane %v1492, 3
        %v3770 = vsel %vm3767, %v3768, %v3769
        %v3771 = vrot.slane %v1493, 3
        %v3772 = vsel %vm3767, %v3769, %v3771
        %3776 = vmatprep.subr.mxu0 0.0
        %v3777 = vand.u32 %v3751, 4294901760
        %3778 = vmatpush1.msra.mxu0 %v3777
        %3779 = vmatprep.subr.mxu0 0.0
        %v3780 = vand.u32 %v3752, 4294901760
        %3781 = vmatpush1.msra.mxu0 %v3780
        %3782 = vmatprep.subr.mxu0 0.0
        %v3783 = vand.u32 %v3753, 4294901760
        %3784 = vmatpush1.msra.mxu0 %v3783
        %3785 = vmatprep.subr.mxu0 0.0
        %v3786 = vand.u32 %v3754, 4294901760
        %3787 = vmatpush1.msra.mxu0 %v3786
        %3788 = vmatprep.subr.mxu0 0.0
        %v3789 = vand.u32 %v3755, 4294901760
        %3790 = vmatpush1.msra.mxu0 %v3789
        %3791 = vmatprep.subr.mxu0 0.0
        %v3792 = vand.u32 %v3756, 4294901760
        %3793 = vmatpush1.msra.mxu0 %v3792
        %3794 = vmatprep.subr.mxu0 0.0
        %v3795 = vand.u32 %v3757, 4294901760
        %3796 = vmatpush1.msra.mxu0 %v3795
        %3797 = vmatprep.subr.mxu0 0.0
        %v3798 = vand.u32 %v3758, 4294901760
        %3799 = vmatpush1.msra.mxu0 %v3798
        %3800 = vmatprep.subr.mxu0 0.0
        %v3801 = vand.u32 %v3759, 4294901760
        %3802 = vmatpush1.msra.mxu0 %v3801
        %3803 = vmatprep.subr.mxu0 0.0
        %v3804 = vand.u32 %v3760, 4294901760
        %3805 = vmatpush1.msra.mxu0 %v3804
        %3806 = vmatprep.subr.mxu0 0.0
        %v3807 = vand.u32 %v3761, 4294901760
        %3808 = vmatpush1.msra.mxu0 %v3807
        %3809 = vmatprep.subr.mxu0 0.0
        %v3810 = vand.u32 %v3762, 4294901760
        %3811 = vmatpush1.msra.mxu0 %v3810
        %3812 = vmatprep.subr.mxu0 0.0
        %v3813 = vand.u32 %v3763, 4294901760
        %3814 = vmatpush1.msra.mxu0 %v3813
        %3815 = vmatprep.subr.mxu0 0.0
        %v3816 = vand.u32 %v3764, 4294901760
        %3817 = vmatpush1.msra.mxu0 %v3816
        %3818 = vmatprep.subr.mxu0 0.0
        %v3819 = vand.u32 %v3765, 4294901760
        %3820 = vmatpush1.msra.mxu0 %v3819
        %3821 = vmatprep.subr.mxu0 0.0
        %v3822 = vand.u32 %v3766, 4294901760
        %3823 = vmatpush1.msra.mxu0 %v3822
        %3824 = vmatprep.subr.mxu0 0.0
        %3825 = vmatpush1.msra.mxu0 0.0
        %3826 = vmatprep.subr.mxu0 0.0
        %3827 = vmatpush1.msra.mxu0 0.0
        %3828 = vmatprep.subr.mxu0 0.0
        %3829 = vmatpush1.msra.mxu0 0.0
        %3830 = vmatprep.subr.mxu0 0.0
        %3831 = vmatpush1.msra.mxu0 0.0
        %3832 = vmatprep.subr.mxu0 0.0
        %3833 = vmatpush1.msra.mxu0 0.0
        %3834 = vmatprep.subr.mxu0 0.0
        %3835 = vmatpush1.msra.mxu0 0.0
        %3836 = vmatprep.subr.mxu0 0.0
        %3837 = vmatpush1.msra.mxu0 0.0
        %3838 = vmatprep.subr.mxu0 0.0
        %3839 = vmatpush1.msra.mxu0 0.0
        %3840 = vmatprep.subr.mxu0 0.0
        %3841 = vmatpush1.msra.mxu0 0.0
        %3842 = vmatprep.subr.mxu0 0.0
        %3843 = vmatpush1.msra.mxu0 0.0
        %3844 = vmatprep.subr.mxu0 0.0
        %3845 = vmatpush1.msra.mxu0 0.0
        %3846 = vmatprep.subr.mxu0 0.0
        %3847 = vmatpush1.msra.mxu0 0.0
        %3848 = vmatprep.subr.mxu0 0.0
        %3849 = vmatpush1.msra.mxu0 0.0
        %3850 = vmatprep.subr.mxu0 0.0
        %3851 = vmatpush1.msra.mxu0 0.0
        %3852 = vmatprep.subr.mxu0 0.0
        %3853 = vmatpush1.msra.mxu0 0.0
        %3854 = vmatprep.subr.mxu0 0.0
        %3855 = vmatpush1.msra.mxu0 0.0
        %3856 = vmatprep.mubr.f32.mxu0 0.0
        %v3857 = vand.u32 %v3770, 4294901760
        %v3858 = vsub.f32 %v3770, %v3857
        %v3859 = vand.u32 %v3858, 4294901760
        %v3860 = vsub.f32 %v3858, %v3859
        %v3861 = vand.u32 %v3860, 4294901760
        %3862 = vmatmul.mubr.f32.gmra.mrb[0].mxu0 %v3861
        %v3863 = vpop.f32.mrb[0].mxu0
        %v3864 = vadd.f32 0.0, %v3863
        %v3865 = vpop.f32.mrb[0].mxu0
        %3866 = vmatprep.mubr.f32.mxu0 0.0
        %v3867 = vand.u32 %v3772, 4294901760
        %v3868 = vsub.f32 %v3772, %v3867
        %v3869 = vand.u32 %v3868, 4294901760
        %v3870 = vsub.f32 %v3868, %v3869
        %v3871 = vand.u32 %v3870, 4294901760
        %3872 = vmatmul.mubr.f32.gmra.mrb[0].mxu0 %v3871
        %v3873 = vpop.f32.mrb[0].mxu0
        %v3874 = vadd.f32 0.0, %v3873
        %v3875 = vpop.f32.mrb[0].mxu0
        %3876 = vmatprep.mubr.f32.mxu0 0.0
        %v3877 = vand.u32 %v3771, 4294901760
        %v3878 = vsub.f32 %v3771, %v3877
        %v3879 = vand.u32 %v3878, 4294901760
        %v3880 = vsub.f32 %v3878, %v3879
        %v3881 = vand.u32 %v3880, 4294901760
        %3882 = vmatmul.mubr.f32.gmra.mrb[0].mxu0 %v3881
        %v3883 = vpop.f32.mrb[0].mxu0
        %v3884 = vadd.f32 0.0, %v3883
        %v3885 = vpop.f32.mrb[0].mxu0
        %3886 = vdwg.mxu0
        %3887 = vmatprep.subr.mxu0 0.0
        %v3888 = vand.u32 %v3751, 4294901760
        %v3889 = vsub.f32 %v3751, %v3888
        %v3890 = vand.u32 %v3889, 4294901760
        %v3891 = vsub.f32 %v3889, %v3890
        %v3892 = vand.u32 %v3891, 4294901760
        %3893 = vmatpush1.msra.mxu0 %v3892
        %3894 = vmatprep.subr.mxu0 0.0
        %v3895 = vand.u32 %v3752, 4294901760
        %v3896 = vsub.f32 %v3752, %v3895
        %v3897 = vand.u32 %v3896, 4294901760
        %v3898 = vsub.f32 %v3896, %v3897
        %v3899 = vand.u32 %v3898, 4294901760
        %3900 = vmatpush1.msra.mxu0 %v3899
        %3901 = vmatprep.subr.mxu0 0.0
        %v3902 = vand.u32 %v3753, 4294901760
        %v3903 = vsub.f32 %v3753, %v3902
        %v3904 = vand.u32 %v3903, 4294901760
        %v3905 = vsub.f32 %v3903, %v3904
        %v3906 = vand.u32 %v3905, 4294901760
        %3907 = vmatpush1.msra.mxu0 %v3906
        %3908 = vmatprep.subr.mxu0 0.0
        %v3909 = vand.u32 %v3754, 4294901760
        %v3910 = vsub.f32 %v3754, %v3909
        %v3911 = vand.u32 %v3910, 4294901760
        %v3912 = vsub.f32 %v3910, %v3911
        %v3913 = vand.u32 %v3912, 4294901760
        %3914 = vmatpush1.msra.mxu0 %v3913
        %3915 = vmatprep.subr.mxu0 0.0
        %v3916 = vand.u32 %v3755, 4294901760
        %v3917 = vsub.f32 %v3755, %v3916
        %v3918 = vand.u32 %v3917, 4294901760
        %v3919 = vsub.f32 %v3917, %v3918
        %v3920 = vand.u32 %v3919, 4294901760
        %3921 = vmatpush1.msra.mxu0 %v3920
        %3922 = vmatprep.subr.mxu0 0.0
        %v3923 = vand.u32 %v3756, 4294901760
        %v3924 = vsub.f32 %v3756, %v3923
        %v3925 = vand.u32 %v3924, 4294901760
        %v3926 = vsub.f32 %v3924, %v3925
        %v3927 = vand.u32 %v3926, 4294901760
        %3928 = vmatpush1.msra.mxu0 %v3927
        %3929 = vmatprep.subr.mxu0 0.0
        %v3930 = vand.u32 %v3757, 4294901760
        %v3931 = vsub.f32 %v3757, %v3930
        %v3932 = vand.u32 %v3931, 4294901760
        %v3933 = vsub.f32 %v3931, %v3932
        %v3934 = vand.u32 %v3933, 4294901760
        %3935 = vmatpush1.msra.mxu0 %v3934
        %3936 = vmatprep.subr.mxu0 0.0
        %v3937 = vand.u32 %v3758, 4294901760
        %v3938 = vsub.f32 %v3758, %v3937
        %v3939 = vand.u32 %v3938, 4294901760
        %v3940 = vsub.f32 %v3938, %v3939
        %v3941 = vand.u32 %v3940, 4294901760
        %3942 = vmatpush1.msra.mxu0 %v3941
        %3943 = vmatprep.subr.mxu0 0.0
        %v3944 = vand.u32 %v3759, 4294901760
        %v3945 = vsub.f32 %v3759, %v3944
        %v3946 = vand.u32 %v3945, 4294901760
        %v3947 = vsub.f32 %v3945, %v3946
        %v3948 = vand.u32 %v3947, 4294901760
        %3949 = vmatpush1.msra.mxu0 %v3948
        %3950 = vmatprep.subr.mxu0 0.0
        %v3951 = vand.u32 %v3760, 4294901760
        %v3952 = vsub.f32 %v3760, %v3951
        %v3953 = vand.u32 %v3952, 4294901760
        %v3954 = vsub.f32 %v3952, %v3953
        %v3955 = vand.u32 %v3954, 4294901760
        %3956 = vmatpush1.msra.mxu0 %v3955
        %3957 = vmatprep.subr.mxu0 0.0
        %v3958 = vand.u32 %v3761, 4294901760
        %v3959 = vsub.f32 %v3761, %v3958
        %v3960 = vand.u32 %v3959, 4294901760
        %v3961 = vsub.f32 %v3959, %v3960
        %v3962 = vand.u32 %v3961, 4294901760
        %3963 = vmatpush1.msra.mxu0 %v3962
        %3964 = vmatprep.subr.mxu0 0.0
        %v3965 = vand.u32 %v3762, 4294901760
        %v3966 = vsub.f32 %v3762, %v3965
        %v3967 = vand.u32 %v3966, 4294901760
        %v3968 = vsub.f32 %v3966, %v3967
        %v3969 = vand.u32 %v3968, 4294901760
        %3970 = vmatpush1.msra.mxu0 %v3969
        %3971 = vmatprep.subr.mxu0 0.0
        %v3972 = vand.u32 %v3763, 4294901760
        %v3973 = vsub.f32 %v3763, %v3972
        %v3974 = vand.u32 %v3973, 4294901760
        %v3975 = vsub.f32 %v3973, %v3974
        %v3976 = vand.u32 %v3975, 4294901760
        %3977 = vmatpush1.msra.mxu0 %v3976
        %3978 = vmatprep.subr.mxu0 0.0
        %v3979 = vand.u32 %v3764, 4294901760
        %v3980 = vsub.f32 %v3764, %v3979
        %v3981 = vand.u32 %v3980, 4294901760
        %v3982 = vsub.f32 %v3980, %v3981
        %v3983 = vand.u32 %v3982, 4294901760
        %3984 = vmatpush1.msra.mxu0 %v3983
        %3985 = vmatprep.subr.mxu0 0.0
        %v3986 = vand.u32 %v3765, 4294901760
        %v3987 = vsub.f32 %v3765, %v3986
        %v3988 = vand.u32 %v3987, 4294901760
        %v3989 = vsub.f32 %v3987, %v3988
        %v3990 = vand.u32 %v3989, 4294901760
        %3991 = vmatpush1.msra.mxu0 %v3990
        %3992 = vmatprep.subr.mxu0 0.0
        %v3993 = vand.u32 %v3766, 4294901760
        %v3994 = vsub.f32 %v3766, %v3993
        %v3995 = vand.u32 %v3994, 4294901760
        %v3996 = vsub.f32 %v3994, %v3995
        %v3997 = vand.u32 %v3996, 4294901760
        %3998 = vmatpush1.msra.mxu0 %v3997
        %3999 = vmatprep.subr.mxu0 0.0
        %4000 = vmatpush1.msra.mxu0 0.0
        %4001 = vmatprep.subr.mxu0 0.0
        %4002 = vmatpush1.msra.mxu0 0.0
        %4003 = vmatprep.subr.mxu0 0.0
        %4004 = vmatpush1.msra.mxu0 0.0
        %4005 = vmatprep.subr.mxu0 0.0
        %4006 = vmatpush1.msra.mxu0 0.0
        %4007 = vmatprep.subr.mxu0 0.0
        %4008 = vmatpush1.msra.mxu0 0.0
        %4009 = vmatprep.subr.mxu0 0.0
        %4010 = vmatpush1.msra.mxu0 0.0
        %4011 = vmatprep.subr.mxu0 0.0
        %4012 = vmatpush1.msra.mxu0 0.0
        %4013 = vmatprep.subr.mxu0 0.0
        %4014 = vmatpush1.msra.mxu0 0.0
        %4015 = vmatprep.subr.mxu0 0.0
        %4016 = vmatpush1.msra.mxu0 0.0
        %4017 = vmatprep.subr.mxu0 0.0
        %4018 = vmatpush1.msra.mxu0 0.0
        %4019 = vmatprep.subr.mxu0 0.0
        %4020 = vmatpush1.msra.mxu0 0.0
        %4021 = vmatprep.subr.mxu0 0.0
        %4022 = vmatpush1.msra.mxu0 0.0
        %4023 = vmatprep.subr.mxu0 0.0
        %4024 = vmatpush1.msra.mxu0 0.0
        %4025 = vmatprep.subr.mxu0 0.0
        %4026 = vmatpush1.msra.mxu0 0.0
        %4027 = vmatprep.subr.mxu0 0.0
        %4028 = vmatpush1.msra.mxu0 0.0
        %4029 = vmatprep.subr.mxu0 0.0
        %4030 = vmatpush1.msra.mxu0 0.0
        %4031 = vmatprep.mubr.f32.mxu0 0.0
        %v4032 = vand.u32 %v3770, 4294901760
        %4033 = vmatmul.mubr.f32.gmra.mrb[0].mxu0 %v4032
        %v4034 = vpop.f32.mrb[0].mxu0
        %v4035 = vadd.f32 %v3864, %v4034
        %v4036 = vpop.f32.mrb[0].mxu0
        %4037 = vmatprep.mubr.f32.mxu0 0.0
        %v4038 = vand.u32 %v3772, 4294901760
        %4039 = vmatmul.mubr.f32.gmra.mrb[0].mxu0 %v4038
        %v4040 = vpop.f32.mrb[0].mxu0
        %v4041 = vadd.f32 %v3874, %v4040
        %v4042 = vpop.f32.mrb[0].mxu0
        %4043 = vmatprep.mubr.f32.mxu0 0.0
        %v4044 = vand.u32 %v3771, 4294901760
        %4045 = vmatmul.mubr.f32.gmra.mrb[0].mxu0 %v4044
        %v4046 = vpop.f32.mrb[0].mxu0
        %v4047 = vadd.f32 %v3884, %v4046
        %v4048 = vpop.f32.mrb[0].mxu0
        %4049 = vdwg.mxu0
        %4050 = vmatprep.subr.mxu0 0.0
        %v4051 = vand.u32 %v3751, 4294901760
        %v4052 = vsub.f32 %v3751, %v4051
        %4053 = vmatpush1.msra.mxu0 %v4052
        %4054 = vmatprep.subr.mxu0 0.0
        %v4055 = vand.u32 %v3752, 4294901760
        %v4056 = vsub.f32 %v3752, %v4055
        %4057 = vmatpush1.msra.mxu0 %v4056
        %4058 = vmatprep.subr.mxu0 0.0
        %v4059 = vand.u32 %v3753, 4294901760
        %v4060 = vsub.f32 %v3753, %v4059
        %4061 = vmatpush1.msra.mxu0 %v4060
        %4062 = vmatprep.subr.mxu0 0.0
        %v4063 = vand.u32 %v3754, 4294901760
        %v4064 = vsub.f32 %v3754, %v4063
        %4065 = vmatpush1.msra.mxu0 %v4064
        %4066 = vmatprep.subr.mxu0 0.0
        %v4067 = vand.u32 %v3755, 4294901760
        %v4068 = vsub.f32 %v3755, %v4067
        %4069 = vmatpush1.msra.mxu0 %v4068
        %4070 = vmatprep.subr.mxu0 0.0
        %v4071 = vand.u32 %v3756, 4294901760
        %v4072 = vsub.f32 %v3756, %v4071
        %4073 = vmatpush1.msra.mxu0 %v4072
        %4074 = vmatprep.subr.mxu0 0.0
        %v4075 = vand.u32 %v3757, 4294901760
        %v4076 = vsub.f32 %v3757, %v4075
        %4077 = vmatpush1.msra.mxu0 %v4076
        %4078 = vmatprep.subr.mxu0 0.0
        %v4079 = vand.u32 %v3758, 4294901760
        %v4080 = vsub.f32 %v3758, %v4079
        %4081 = vmatpush1.msra.mxu0 %v4080
        %4082 = vmatprep.subr.mxu0 0.0
        %v4083 = vand.u32 %v3759, 4294901760
        %v4084 = vsub.f32 %v3759, %v4083
        %4085 = vmatpush1.msra.mxu0 %v4084
        %4086 = vmatprep.subr.mxu0 0.0
        %v4087 = vand.u32 %v3760, 4294901760
        %v4088 = vsub.f32 %v3760, %v4087
        %4089 = vmatpush1.msra.mxu0 %v4088
        %4090 = vmatprep.subr.mxu0 0.0
        %v4091 = vand.u32 %v3761, 4294901760
        %v4092 = vsub.f32 %v3761, %v4091
        %4093 = vmatpush1.msra.mxu0 %v4092
        %4094 = vmatprep.subr.mxu0 0.0
        %v4095 = vand.u32 %v3762, 4294901760
        %v4096 = vsub.f32 %v3762, %v4095
        %4097 = vmatpush1.msra.mxu0 %v4096
        %4098 = vmatprep.subr.mxu0 0.0
        %v4099 = vand.u32 %v3763, 4294901760
        %v4100 = vsub.f32 %v3763, %v4099
        %4101 = vmatpush1.msra.mxu0 %v4100
        %4102 = vmatprep.subr.mxu0 0.0
        %v4103 = vand.u32 %v3764, 4294901760
        %v4104 = vsub.f32 %v3764, %v4103
        %4105 = vmatpush1.msra.mxu0 %v4104
        %4106 = vmatprep.subr.mxu0 0.0
        %v4107 = vand.u32 %v3765, 4294901760
        %v4108 = vsub.f32 %v3765, %v4107
        %4109 = vmatpush1.msra.mxu0 %v4108
        %4110 = vmatprep.subr.mxu0 0.0
        %v4111 = vand.u32 %v3766, 4294901760
        %v4112 = vsub.f32 %v3766, %v4111
        %4113 = vmatpush1.msra.mxu0 %v4112
        %4114 = vmatprep.subr.mxu0 0.0
        %4115 = vmatpush1.msra.mxu0 0.0
        %4116 = vmatprep.subr.mxu0 0.0
        %4117 = vmatpush1.msra.mxu0 0.0
        %4118 = vmatprep.subr.mxu0 0.0
        %4119 = vmatpush1.msra.mxu0 0.0
        %4120 = vmatprep.subr.mxu0 0.0
        %4121 = vmatpush1.msra.mxu0 0.0
        %4122 = vmatprep.subr.mxu0 0.0
        %4123 = vmatpush1.msra.mxu0 0.0
        %4124 = vmatprep.subr.mxu0 0.0
        %4125 = vmatpush1.msra.mxu0 0.0
        %4126 = vmatprep.subr.mxu0 0.0
        %4127 = vmatpush1.msra.mxu0 0.0
        %4128 = vmatprep.subr.mxu0 0.0
        %4129 = vmatpush1.msra.mxu0 0.0
        %4130 = vmatprep.subr.mxu0 0.0
        %4131 = vmatpush1.msra.mxu0 0.0
        %4132 = vmatprep.subr.mxu0 0.0
        %4133 = vmatpush1.msra.mxu0 0.0
        %4134 = vmatprep.subr.mxu0 0.0
        %4135 = vmatpush1.msra.mxu0 0.0
        %4136 = vmatprep.subr.mxu0 0.0
        %4137 = vmatpush1.msra.mxu0 0.0
        %4138 = vmatprep.subr.mxu0 0.0
        %4139 = vmatpush1.msra.mxu0 0.0
        %4140 = vmatprep.subr.mxu0 0.0
        %4141 = vmatpush1.msra.mxu0 0.0
        %4142 = vmatprep.subr.mxu0 0.0
        %4143 = vmatpush1.msra.mxu0 0.0
        %4144 = vmatprep.subr.mxu0 0.0
        %4145 = vmatpush1.msra.mxu0 0.0
        %4146 = vmatprep.mubr.f32.mxu0 0.0
        %v4147 = vand.u32 %v3770, 4294901760
        %v4148 = vsub.f32 %v3770, %v4147
        %4149 = vmatmul.mubr.f32.gmra.mrb[0].mxu0 %v4148
        %v4150 = vpop.f32.mrb[0].mxu0
        %v4151 = vadd.f32 %v4035, %v4150
        %v4152 = vpop.f32.mrb[0].mxu0
        %4153 = vmatprep.mubr.f32.mxu0 0.0
        %v4154 = vand.u32 %v3772, 4294901760
        %v4155 = vsub.f32 %v3772, %v4154
        %4156 = vmatmul.mubr.f32.gmra.mrb[0].mxu0 %v4155
        %v4157 = vpop.f32.mrb[0].mxu0
        %v4158 = vadd.f32 %v4041, %v4157
        %v4159 = vpop.f32.mrb[0].mxu0
        %4160 = vmatprep.mubr.f32.mxu0 0.0
        %v4161 = vand.u32 %v3771, 4294901760
        %v4162 = vsub.f32 %v3771, %v4161
        %4163 = vmatmul.mubr.f32.gmra.mrb[0].mxu0 %v4162
        %v4164 = vpop.f32.mrb[0].mxu0
        %v4165 = vadd.f32 %v4047, %v4164
        %v4166 = vpop.f32.mrb[0].mxu0
        %4167 = vdwg.mxu0
        %4168 = vmatprep.subr.mxu0 0.0
        %v4169 = vand.u32 %v3751, 4294901760
        %4170 = vmatpush1.msra.mxu0 %v4169
        %4171 = vmatprep.subr.mxu0 0.0
        %v4172 = vand.u32 %v3752, 4294901760
        %4173 = vmatpush1.msra.mxu0 %v4172
        %4174 = vmatprep.subr.mxu0 0.0
        %v4175 = vand.u32 %v3753, 4294901760
        %4176 = vmatpush1.msra.mxu0 %v4175
        %4177 = vmatprep.subr.mxu0 0.0
        %v4178 = vand.u32 %v3754, 4294901760
        %4179 = vmatpush1.msra.mxu0 %v4178
        %4180 = vmatprep.subr.mxu0 0.0
        %v4181 = vand.u32 %v3755, 4294901760
        %4182 = vmatpush1.msra.mxu0 %v4181
        %4183 = vmatprep.subr.mxu0 0.0
        %v4184 = vand.u32 %v3756, 4294901760
        %4185 = vmatpush1.msra.mxu0 %v4184
        %4186 = vmatprep.subr.mxu0 0.0
        %v4187 = vand.u32 %v3757, 4294901760
        %4188 = vmatpush1.msra.mxu0 %v4187
        %4189 = vmatprep.subr.mxu0 0.0
        %v4190 = vand.u32 %v3758, 4294901760
        %4191 = vmatpush1.msra.mxu0 %v4190
        %4192 = vmatprep.subr.mxu0 0.0
        %v4193 = vand.u32 %v3759, 4294901760
        %4194 = vmatpush1.msra.mxu0 %v4193
        %4195 = vmatprep.subr.mxu0 0.0
        %v4196 = vand.u32 %v3760, 4294901760
        %4197 = vmatpush1.msra.mxu0 %v4196
        %4198 = vmatprep.subr.mxu0 0.0
        %v4199 = vand.u32 %v3761, 4294901760
        %4200 = vmatpush1.msra.mxu0 %v4199
        %4201 = vmatprep.subr.mxu0 0.0
        %v4202 = vand.u32 %v3762, 4294901760
        %4203 = vmatpush1.msra.mxu0 %v4202
        %4204 = vmatprep.subr.mxu0 0.0
        %v4205 = vand.u32 %v3763, 4294901760
        %4206 = vmatpush1.msra.mxu0 %v4205
        %4207 = vmatprep.subr.mxu0 0.0
        %v4208 = vand.u32 %v3764, 4294901760
        %4209 = vmatpush1.msra.mxu0 %v4208
        %4210 = vmatprep.subr.mxu0 0.0
        %v4211 = vand.u32 %v3765, 4294901760
        %4212 = vmatpush1.msra.mxu0 %v4211
        %4213 = vmatprep.subr.mxu0 0.0
        %v4214 = vand.u32 %v3766, 4294901760
        %4215 = vmatpush1.msra.mxu0 %v4214
        %4216 = vmatprep.subr.mxu0 0.0
        %4217 = vmatpush1.msra.mxu0 0.0
        %4218 = vmatprep.subr.mxu0 0.0
        %4219 = vmatpush1.msra.mxu0 0.0
        %4220 = vmatprep.subr.mxu0 0.0
        %4221 = vmatpush1.msra.mxu0 0.0
        %4222 = vmatprep.subr.mxu0 0.0
        %4223 = vmatpush1.msra.mxu0 0.0
        %4224 = vmatprep.subr.mxu0 0.0
        %4225 = vmatpush1.msra.mxu0 0.0
        %4226 = vmatprep.subr.mxu0 0.0
        %4227 = vmatpush1.msra.mxu0 0.0
        %4228 = vmatprep.subr.mxu0 0.0
        %4229 = vmatpush1.msra.mxu0 0.0
        %4230 = vmatprep.subr.mxu0 0.0
        %4231 = vmatpush1.msra.mxu0 0.0
        %4232 = vmatprep.subr.mxu0 0.0
        %4233 = vmatpush1.msra.mxu0 0.0
        %4234 = vmatprep.subr.mxu0 0.0
        %4235 = vmatpush1.msra.mxu0 0.0
        %4236 = vmatprep.subr.mxu0 0.0
        %4237 = vmatpush1.msra.mxu0 0.0
        %4238 = vmatprep.subr.mxu0 0.0
        %4239 = vmatpush1.msra.mxu0 0.0
        %4240 = vmatprep.subr.mxu0 0.0
        %4241 = vmatpush1.msra.mxu0 0.0
        %4242 = vmatprep.subr.mxu0 0.0
        %4243 = vmatpush1.msra.mxu0 0.0
        %4244 = vmatprep.subr.mxu0 0.0
        %4245 = vmatpush1.msra.mxu0 0.0
        %4246 = vmatprep.subr.mxu0 0.0
        %4247 = vmatpush1.msra.mxu0 0.0
        %4248 = vmatprep.mubr.f32.mxu0 0.0
        %v4249 = vand.u32 %v3770, 4294901760
        %v4250 = vsub.f32 %v3770, %v4249
        %v4251 = vand.u32 %v4250, 4294901760
        %4252 = vmatmul.mubr.f32.gmra.mrb[0].mxu0 %v4251
        %v4253 = vpop.f32.mrb[0].mxu0
        %v4254 = vadd.f32 %v4151, %v4253
        %v4255 = vpop.f32.mrb[0].mxu0
        %4256 = vmatprep.mubr.f32.mxu0 0.0
        %v4257 = vand.u32 %v3772, 4294901760
        %v4258 = vsub.f32 %v3772, %v4257
        %v4259 = vand.u32 %v4258, 4294901760
        %4260 = vmatmul.mubr.f32.gmra.mrb[0].mxu0 %v4259
        %v4261 = vpop.f32.mrb[0].mxu0
        %v4262 = vadd.f32 %v4158, %v4261
        %v4263 = vpop.f32.mrb[0].mxu0
        %4264 = vmatprep.mubr.f32.mxu0 0.0
        %v4265 = vand.u32 %v3771, 4294901760
        %v4266 = vsub.f32 %v3771, %v4265
        %v4267 = vand.u32 %v4266, 4294901760
        %4268 = vmatmul.mubr.f32.gmra.mrb[0].mxu0 %v4267
        %v4269 = vpop.f32.mrb[0].mxu0
        %v4270 = vadd.f32 %v4165, %v4269
        %v4271 = vpop.f32.mrb[0].mxu0
        %4272 = vdwg.mxu0
        %4273 = vmatprep.subr.mxu0 0.0
        %v4274 = vand.u32 %v3751, 4294901760
        %v4275 = vsub.f32 %v3751, %v4274
        %v4276 = vand.u32 %v4275, 4294901760
        %4277 = vmatpush1.msra.mxu0 %v4276
        %4278 = vmatprep.subr.mxu0 0.0
        %v4279 = vand.u32 %v3752, 4294901760
        %v4280 = vsub.f32 %v3752, %v4279
        %v4281 = vand.u32 %v4280, 4294901760
        %4282 = vmatpush1.msra.mxu0 %v4281
        %4283 = vmatprep.subr.mxu0 0.0
        %v4284 = vand.u32 %v3753, 4294901760
        %v4285 = vsub.f32 %v3753, %v4284
        %v4286 = vand.u32 %v4285, 4294901760
        %4287 = vmatpush1.msra.mxu0 %v4286
        %4288 = vmatprep.subr.mxu0 0.0
        %v4289 = vand.u32 %v3754, 4294901760
        %v4290 = vsub.f32 %v3754, %v4289
        %v4291 = vand.u32 %v4290, 4294901760
        %4292 = vmatpush1.msra.mxu0 %v4291
        %4293 = vmatprep.subr.mxu0 0.0
        %v4294 = vand.u32 %v3755, 4294901760
        %v4295 = vsub.f32 %v3755, %v4294
        %v4296 = vand.u32 %v4295, 4294901760
        %4297 = vmatpush1.msra.mxu0 %v4296
        %4298 = vmatprep.subr.mxu0 0.0
        %v4299 = vand.u32 %v3756, 4294901760
        %v4300 = vsub.f32 %v3756, %v4299
        %v4301 = vand.u32 %v4300, 4294901760
        %4302 = vmatpush1.msra.mxu0 %v4301
        %4303 = vmatprep.subr.mxu0 0.0
        %v4304 = vand.u32 %v3757, 4294901760
        %v4305 = vsub.f32 %v3757, %v4304
        %v4306 = vand.u32 %v4305, 4294901760
        %4307 = vmatpush1.msra.mxu0 %v4306
        %4308 = vmatprep.subr.mxu0 0.0
        %v4309 = vand.u32 %v3758, 4294901760
        %v4310 = vsub.f32 %v3758, %v4309
        %v4311 = vand.u32 %v4310, 4294901760
        %4312 = vmatpush1.msra.mxu0 %v4311
        %4313 = vmatprep.subr.mxu0 0.0
        %v4314 = vand.u32 %v3759, 4294901760
        %v4315 = vsub.f32 %v3759, %v4314
        %v4316 = vand.u32 %v4315, 4294901760
        %4317 = vmatpush1.msra.mxu0 %v4316
        %4318 = vmatprep.subr.mxu0 0.0
        %v4319 = vand.u32 %v3760, 4294901760
        %v4320 = vsub.f32 %v3760, %v4319
        %v4321 = vand.u32 %v4320, 4294901760
        %4322 = vmatpush1.msra.mxu0 %v4321
        %4323 = vmatprep.subr.mxu0 0.0
        %v4324 = vand.u32 %v3761, 4294901760
        %v4325 = vsub.f32 %v3761, %v4324
        %v4326 = vand.u32 %v4325, 4294901760
        %4327 = vmatpush1.msra.mxu0 %v4326
        %4328 = vmatprep.subr.mxu0 0.0
        %v4329 = vand.u32 %v3762, 4294901760
        %v4330 = vsub.f32 %v3762, %v4329
        %v4331 = vand.u32 %v4330, 4294901760
        %4332 = vmatpush1.msra.mxu0 %v4331
        %4333 = vmatprep.subr.mxu0 0.0
        %v4334 = vand.u32 %v3763, 4294901760
        %v4335 = vsub.f32 %v3763, %v4334
        %v4336 = vand.u32 %v4335, 4294901760
        %4337 = vmatpush1.msra.mxu0 %v4336
        %4338 = vmatprep.subr.mxu0 0.0
        %v4339 = vand.u32 %v3764, 4294901760
        %v4340 = vsub.f32 %v3764, %v4339
        %v4341 = vand.u32 %v4340, 4294901760
        %4342 = vmatpush1.msra.mxu0 %v4341
        %4343 = vmatprep.subr.mxu0 0.0
        %v4344 = vand.u32 %v3765, 4294901760
        %v4345 = vsub.f32 %v3765, %v4344
        %v4346 = vand.u32 %v4345, 4294901760
        %4347 = vmatpush1.msra.mxu0 %v4346
        %4348 = vmatprep.subr.mxu0 0.0
        %v4349 = vand.u32 %v3766, 4294901760
        %v4350 = vsub.f32 %v3766, %v4349
        %v4351 = vand.u32 %v4350, 4294901760
        %4352 = vmatpush1.msra.mxu0 %v4351
        %4353 = vmatprep.subr.mxu0 0.0
        %4354 = vmatpush1.msra.mxu0 0.0
        %4355 = vmatprep.subr.mxu0 0.0
        %4356 = vmatpush1.msra.mxu0 0.0
        %4357 = vmatprep.subr.mxu0 0.0
        %4358 = vmatpush1.msra.mxu0 0.0
        %4359 = vmatprep.subr.mxu0 0.0
        %4360 = vmatpush1.msra.mxu0 0.0
        %4361 = vmatprep.subr.mxu0 0.0
        %4362 = vmatpush1.msra.mxu0 0.0
        %4363 = vmatprep.subr.mxu0 0.0
        %4364 = vmatpush1.msra.mxu0 0.0
        %4365 = vmatprep.subr.mxu0 0.0
        %4366 = vmatpush1.msra.mxu0 0.0
        %4367 = vmatprep.subr.mxu0 0.0
        %4368 = vmatpush1.msra.mxu0 0.0
        %4369 = vmatprep.subr.mxu0 0.0
        %4370 = vmatpush1.msra.mxu0 0.0
        %4371 = vmatprep.subr.mxu0 0.0
        %4372 = vmatpush1.msra.mxu0 0.0
        %4373 = vmatprep.subr.mxu0 0.0
        %4374 = vmatpush1.msra.mxu0 0.0
        %4375 = vmatprep.subr.mxu0 0.0
        %4376 = vmatpush1.msra.mxu0 0.0
        %4377 = vmatprep.subr.mxu0 0.0
        %4378 = vmatpush1.msra.mxu0 0.0
        %4379 = vmatprep.subr.mxu0 0.0
        %4380 = vmatpush1.msra.mxu0 0.0
        %4381 = vmatprep.subr.mxu0 0.0
        %4382 = vmatpush1.msra.mxu0 0.0
        %4383 = vmatprep.subr.mxu0 0.0
        %4384 = vmatpush1.msra.mxu0 0.0
        %4385 = vmatprep.mubr.f32.mxu0 0.0
        %v4386 = vand.u32 %v3770, 4294901760
        %4387 = vmatmul.mubr.f32.gmra.mrb[0].mxu0 %v4386
        %v4388 = vpop.f32.mrb[0].mxu0
        %v4389 = vadd.f32 %v4254, %v4388
        %v4390 = vpop.f32.mrb[0].mxu0
        %4391 = vmatprep.mubr.f32.mxu0 0.0
        %v4392 = vand.u32 %v3772, 4294901760
        %4393 = vmatmul.mubr.f32.gmra.mrb[0].mxu0 %v4392
        %v4394 = vpop.f32.mrb[0].mxu0
        %v4395 = vadd.f32 %v4262, %v4394
        %v4396 = vpop.f32.mrb[0].mxu0
        %4397 = vmatprep.mubr.f32.mxu0 0.0
        %v4398 = vand.u32 %v3771, 4294901760
        %4399 = vmatmul.mubr.f32.gmra.mrb[0].mxu0 %v4398
        %v4400 = vpop.f32.mrb[0].mxu0
        %v4401 = vadd.f32 %v4270, %v4400
        %v4402 = vpop.f32.mrb[0].mxu0
        %4403 = vdwg.mxu0
        %4404 = vmatprep.subr.mxu0 0.0
        %v4405 = vand.u32 %v3751, 4294901760
        %4406 = vmatpush1.msra.mxu0 %v4405
        %4407 = vmatprep.subr.mxu0 0.0
        %v4408 = vand.u32 %v3752, 4294901760
        %4409 = vmatpush1.msra.mxu0 %v4408
        %4410 = vmatprep.subr.mxu0 0.0
        %v4411 = vand.u32 %v3753, 4294901760
        %4412 = vmatpush1.msra.mxu0 %v4411
        %4413 = vmatprep.subr.mxu0 0.0
        %v4414 = vand.u32 %v3754, 4294901760
        %4415 = vmatpush1.msra.mxu0 %v4414
        %4416 = vmatprep.subr.mxu0 0.0
        %v4417 = vand.u32 %v3755, 4294901760
        %4418 = vmatpush1.msra.mxu0 %v4417
        %4419 = vmatprep.subr.mxu0 0.0
        %v4420 = vand.u32 %v3756, 4294901760
        %4421 = vmatpush1.msra.mxu0 %v4420
        %4422 = vmatprep.subr.mxu0 0.0
        %v4423 = vand.u32 %v3757, 4294901760
        %4424 = vmatpush1.msra.mxu0 %v4423
        %4425 = vmatprep.subr.mxu0 0.0
        %v4426 = vand.u32 %v3758, 4294901760
        %4427 = vmatpush1.msra.mxu0 %v4426
        %4428 = vmatprep.subr.mxu0 0.0
        %v4429 = vand.u32 %v3759, 4294901760
        %4430 = vmatpush1.msra.mxu0 %v4429
        %4431 = vmatprep.subr.mxu0 0.0
        %v4432 = vand.u32 %v3760, 4294901760
        %4433 = vmatpush1.msra.mxu0 %v4432
        %4434 = vmatprep.subr.mxu0 0.0
        %v4435 = vand.u32 %v3761, 4294901760
        %4436 = vmatpush1.msra.mxu0 %v4435
        %4437 = vmatprep.subr.mxu0 0.0
        %v4438 = vand.u32 %v3762, 4294901760
        %4439 = vmatpush1.msra.mxu0 %v4438
        %4440 = vmatprep.subr.mxu0 0.0
        %v4441 = vand.u32 %v3763, 4294901760
        %4442 = vmatpush1.msra.mxu0 %v4441
        %4443 = vmatprep.subr.mxu0 0.0
        %v4444 = vand.u32 %v3764, 4294901760
        %4445 = vmatpush1.msra.mxu0 %v4444
        %4446 = vmatprep.subr.mxu0 0.0
        %v4447 = vand.u32 %v3765, 4294901760
        %4448 = vmatpush1.msra.mxu0 %v4447
        %4449 = vmatprep.subr.mxu0 0.0
        %v4450 = vand.u32 %v3766, 4294901760
        %4451 = vmatpush1.msra.mxu0 %v4450
        %4452 = vmatprep.subr.mxu0 0.0
        %4453 = vmatpush1.msra.mxu0 0.0
        %4454 = vmatprep.subr.mxu0 0.0
        %4455 = vmatpush1.msra.mxu0 0.0
        %4456 = vmatprep.subr.mxu0 0.0
        %4457 = vmatpush1.msra.mxu0 0.0
        %4458 = vmatprep.subr.mxu0 0.0
        %4459 = vmatpush1.msra.mxu0 0.0
        %4460 = vmatprep.subr.mxu0 0.0
        %4461 = vmatpush1.msra.mxu0 0.0
        %4462 = vmatprep.subr.mxu0 0.0
        %4463 = vmatpush1.msra.mxu0 0.0
        %4464 = vmatprep.subr.mxu0 0.0
        %4465 = vmatpush1.msra.mxu0 0.0
        %4466 = vmatprep.subr.mxu0 0.0
        %4467 = vmatpush1.msra.mxu0 0.0
        %4468 = vmatprep.subr.mxu0 0.0
        %4469 = vmatpush1.msra.mxu0 0.0
        %4470 = vmatprep.subr.mxu0 0.0
        %4471 = vmatpush1.msra.mxu0 0.0
        %4472 = vmatprep.subr.mxu0 0.0
        %4473 = vmatpush1.msra.mxu0 0.0
        %4474 = vmatprep.subr.mxu0 0.0
        %4475 = vmatpush1.msra.mxu0 0.0
        %4476 = vmatprep.subr.mxu0 0.0
        %4477 = vmatpush1.msra.mxu0 0.0
        %4478 = vmatprep.subr.mxu0 0.0
        %4479 = vmatpush1.msra.mxu0 0.0
        %4480 = vmatprep.subr.mxu0 0.0
        %4481 = vmatpush1.msra.mxu0 0.0
        %4482 = vmatprep.subr.mxu0 0.0
        %4483 = vmatpush1.msra.mxu0 0.0
        %4484 = vmatprep.mubr.f32.mxu0 0.0
        %v4485 = vand.u32 %v3770, 4294901760
        %4486 = vmatmul.mubr.f32.gmra.mrb[0].mxu0 %v4485
        %v4487 = vpop.f32.mrb[0].mxu0
        %v4488 = vadd.f32 %v4389, %v4487
        %v4489 = vpop.f32.mrb[0].mxu0
        %4490 = vmatprep.mubr.f32.mxu0 0.0
        %v4491 = vand.u32 %v3772, 4294901760
        %4492 = vmatmul.mubr.f32.gmra.mrb[0].mxu0 %v4491
        %v4493 = vpop.f32.mrb[0].mxu0
        %v4494 = vadd.f32 %v4395, %v4493
        %v4495 = vpop.f32.mrb[0].mxu0
        %4496 = vmatprep.mubr.f32.mxu0 0.0
        %v4497 = vand.u32 %v3771, 4294901760
        %4498 = vmatmul.mubr.f32.gmra.mrb[0].mxu0 %v4497
        %v4499 = vpop.f32.mrb[0].mxu0
        %v4500 = vadd.f32 %v4401, %v4499
        %v4501 = vpop.f32.mrb[0].mxu0
        %4502 = vdwg.mxu0
        %v4503 = vadd.f32 %v3747, %v4488
        %v4504 = vadd.f32 %v3748, %v4494
        %v4505 = vadd.f32 %v3749, %v4500
        %s4506 = scalar_lea.vmem [#allocation2], 512
        %v4507 = vld [vmem:[%s4506] sm:$0xff]
        %v4508 = vld [vmem:[%s4506 + $0x8] sm:$0xff]
        %v4509 = vld [vmem:[%s4506 + $0x10] sm:$0xff]
        %v4510 = vld [vmem:[%s4506 + $0x18] sm:$0xff]
        %v4511 = vld [vmem:[%s4506 + $0x20] sm:$0xff]
        %v4512 = vld [vmem:[%s4506 + $0x28] sm:$0xff]
        %v4513 = vld [vmem:[%s4506 + $0x30] sm:$0xff]
        %v4514 = vld [vmem:[%s4506 + $0x38] sm:$0xff]
        %v4515 = vld [vmem:[%s4506 + $0x40] sm:$0xff]
        %v4516 = vld [vmem:[%s4506 + $0x48] sm:$0xff]
        %v4517 = vld [vmem:[%s4506 + $0x50] sm:$0xff]
        %v4518 = vld [vmem:[%s4506 + $0x58] sm:$0xff]
        %v4519 = vld [vmem:[%s4506 + $0x60] sm:$0xff]
        %v4520 = vld [vmem:[%s4506 + $0x68] sm:$0xff]
        %v4521 = vld [vmem:[%s4506 + $0x70] sm:$0xff]
        %v4522 = vld [vmem:[%s4506 + $0x78] sm:$0xff]
        %vm4524 = vcmask 1043456
        %v4525 = vrot.slane %v1491, 4
        %v4526 = vrot.slane %v1492, 4
        %v4527 = vsel %vm4524, %v4525, %v4526
        %v4528 = vrot.slane %v1493, 4
        %v4529 = vsel %vm4524, %v4526, %v4528
        %v4530 = vrot.slane %v1494, 4
        %v4531 = vsel %vm4524, %v4528, %v4530
        %4535 = vmatprep.subr.mxu0 0.0
        %v4536 = vand.u32 %v4507, 4294901760
        %4537 = vmatpush1.msra.mxu0 %v4536
        %4538 = vmatprep.subr.mxu0 0.0
        %v4539 = vand.u32 %v4508, 4294901760
        %4540 = vmatpush1.msra.mxu0 %v4539
        %4541 = vmatprep.subr.mxu0 0.0
        %v4542 = vand.u32 %v4509, 4294901760
        %4543 = vmatpush1.msra.mxu0 %v4542
        %4544 = vmatprep.subr.mxu0 0.0
        %v4545 = vand.u32 %v4510, 4294901760
        %4546 = vmatpush1.msra.mxu0 %v4545
        %4547 = vmatprep.subr.mxu0 0.0
        %v4548 = vand.u32 %v4511, 4294901760
        %4549 = vmatpush1.msra.mxu0 %v4548
        %4550 = vmatprep.subr.mxu0 0.0
        %v4551 = vand.u32 %v4512, 4294901760
        %4552 = vmatpush1.msra.mxu0 %v4551
        %4553 = vmatprep.subr.mxu0 0.0
        %v4554 = vand.u32 %v4513, 4294901760
        %4555 = vmatpush1.msra.mxu0 %v4554
        %4556 = vmatprep.subr.mxu0 0.0
        %v4557 = vand.u32 %v4514, 4294901760
        %4558 = vmatpush1.msra.mxu0 %v4557
        %4559 = vmatprep.subr.mxu0 0.0
        %v4560 = vand.u32 %v4515, 4294901760
        %4561 = vmatpush1.msra.mxu0 %v4560
        %4562 = vmatprep.subr.mxu0 0.0
        %v4563 = vand.u32 %v4516, 4294901760
        %4564 = vmatpush1.msra.mxu0 %v4563
        %4565 = vmatprep.subr.mxu0 0.0
        %v4566 = vand.u32 %v4517, 4294901760
        %4567 = vmatpush1.msra.mxu0 %v4566
        %4568 = vmatprep.subr.mxu0 0.0
        %v4569 = vand.u32 %v4518, 4294901760
        %4570 = vmatpush1.msra.mxu0 %v4569
        %4571 = vmatprep.subr.mxu0 0.0
        %v4572 = vand.u32 %v4519, 4294901760
        %4573 = vmatpush1.msra.mxu0 %v4572
        %4574 = vmatprep.subr.mxu0 0.0
        %v4575 = vand.u32 %v4520, 4294901760
        %4576 = vmatpush1.msra.mxu0 %v4575
        %4577 = vmatprep.subr.mxu0 0.0
        %v4578 = vand.u32 %v4521, 4294901760
        %4579 = vmatpush1.msra.mxu0 %v4578
        %4580 = vmatprep.subr.mxu0 0.0
        %v4581 = vand.u32 %v4522, 4294901760
        %4582 = vmatpush1.msra.mxu0 %v4581
        %4583 = vmatprep.subr.mxu0 0.0
        %4584 = vmatpush1.msra.mxu0 0.0
        %4585 = vmatprep.subr.mxu0 0.0
        %4586 = vmatpush1.msra.mxu0 0.0
        %4587 = vmatprep.subr.mxu0 0.0
        %4588 = vmatpush1.msra.mxu0 0.0
        %4589 = vmatprep.subr.mxu0 0.0
        %4590 = vmatpush1.msra.mxu0 0.0
        %4591 = vmatprep.subr.mxu0 0.0
        %4592 = vmatpush1.msra.mxu0 0.0
        %4593 = vmatprep.subr.mxu0 0.0
        %4594 = vmatpush1.msra.mxu0 0.0
        %4595 = vmatprep.subr.mxu0 0.0
        %4596 = vmatpush1.msra.mxu0 0.0
        %4597 = vmatprep.subr.mxu0 0.0
        %4598 = vmatpush1.msra.mxu0 0.0
        %4599 = vmatprep.subr.mxu0 0.0
        %4600 = vmatpush1.msra.mxu0 0.0
        %4601 = vmatprep.subr.mxu0 0.0
        %4602 = vmatpush1.msra.mxu0 0.0
        %4603 = vmatprep.subr.mxu0 0.0
        %4604 = vmatpush1.msra.mxu0 0.0
        %4605 = vmatprep.subr.mxu0 0.0
        %4606 = vmatpush1.msra.mxu0 0.0
        %4607 = vmatprep.subr.mxu0 0.0
        %4608 = vmatpush1.msra.mxu0 0.0
        %4609 = vmatprep.subr.mxu0 0.0
        %4610 = vmatpush1.msra.mxu0 0.0
        %4611 = vmatprep.subr.mxu0 0.0
        %4612 = vmatpush1.msra.mxu0 0.0
        %4613 = vmatprep.subr.mxu0 0.0
        %4614 = vmatpush1.msra.mxu0 0.0
        %4615 = vmatprep.mubr.f32.mxu0 0.0
        %v4616 = vand.u32 %v4527, 4294901760
        %v4617 = vsub.f32 %v4527, %v4616
        %v4618 = vand.u32 %v4617, 4294901760
        %v4619 = vsub.f32 %v4617, %v4618
        %v4620 = vand.u32 %v4619, 4294901760
        %4621 = vmatmul.mubr.f32.gmra.mrb[0].mxu0 %v4620
        %v4622 = vpop.f32.mrb[0].mxu0
        %v4623 = vadd.f32 0.0, %v4622
        %v4624 = vpop.f32.mrb[0].mxu0
        %4625 = vmatprep.mubr.f32.mxu0 0.0
        %v4626 = vand.u32 %v4529, 4294901760
        %v4627 = vsub.f32 %v4529, %v4626
        %v4628 = vand.u32 %v4627, 4294901760
        %v4629 = vsub.f32 %v4627, %v4628
        %v4630 = vand.u32 %v4629, 4294901760
        %4631 = vmatmul.mubr.f32.gmra.mrb[0].mxu0 %v4630
        %v4632 = vpop.f32.mrb[0].mxu0
        %v4633 = vadd.f32 0.0, %v4632
        %v4634 = vpop.f32.mrb[0].mxu0
        %4635 = vmatprep.mubr.f32.mxu0 0.0
        %v4636 = vand.u32 %v4531, 4294901760
        %v4637 = vsub.f32 %v4531, %v4636
        %v4638 = vand.u32 %v4637, 4294901760
        %v4639 = vsub.f32 %v4637, %v4638
        %v4640 = vand.u32 %v4639, 4294901760
        %4641 = vmatmul.mubr.f32.gmra.mrb[0].mxu0 %v4640
        %v4642 = vpop.f32.mrb[0].mxu0
        %v4643 = vadd.f32 0.0, %v4642
        %v4644 = vpop.f32.mrb[0].mxu0
        %4645 = vdwg.mxu0
        %4646 = vmatprep.subr.mxu0 0.0
        %v4647 = vand.u32 %v4507, 4294901760
        %v4648 = vsub.f32 %v4507, %v4647
        %v4649 = vand.u32 %v4648, 4294901760
        %v4650 = vsub.f32 %v4648, %v4649
        %v4651 = vand.u32 %v4650, 4294901760
        %4652 = vmatpush1.msra.mxu0 %v4651
        %4653 = vmatprep.subr.mxu0 0.0
        %v4654 = vand.u32 %v4508, 4294901760
        %v4655 = vsub.f32 %v4508, %v4654
        %v4656 = vand.u32 %v4655, 4294901760
        %v4657 = vsub.f32 %v4655, %v4656
        %v4658 = vand.u32 %v4657, 4294901760
        %4659 = vmatpush1.msra.mxu0 %v4658
        %4660 = vmatprep.subr.mxu0 0.0
        %v4661 = vand.u32 %v4509, 4294901760
        %v4662 = vsub.f32 %v4509, %v4661
        %v4663 = vand.u32 %v4662, 4294901760
        %v4664 = vsub.f32 %v4662, %v4663
        %v4665 = vand.u32 %v4664, 4294901760
        %4666 = vmatpush1.msra.mxu0 %v4665
        %4667 = vmatprep.subr.mxu0 0.0
        %v4668 = vand.u32 %v4510, 4294901760
        %v4669 = vsub.f32 %v4510, %v4668
        %v4670 = vand.u32 %v4669, 4294901760
        %v4671 = vsub.f32 %v4669, %v4670
        %v4672 = vand.u32 %v4671, 4294901760
        %4673 = vmatpush1.msra.mxu0 %v4672
        %4674 = vmatprep.subr.mxu0 0.0
        %v4675 = vand.u32 %v4511, 4294901760
        %v4676 = vsub.f32 %v4511, %v4675
        %v4677 = vand.u32 %v4676, 4294901760
        %v4678 = vsub.f32 %v4676, %v4677
        %v4679 = vand.u32 %v4678, 4294901760
        %4680 = vmatpush1.msra.mxu0 %v4679
        %4681 = vmatprep.subr.mxu0 0.0
        %v4682 = vand.u32 %v4512, 4294901760
        %v4683 = vsub.f32 %v4512, %v4682
        %v4684 = vand.u32 %v4683, 4294901760
        %v4685 = vsub.f32 %v4683, %v4684
        %v4686 = vand.u32 %v4685, 4294901760
        %4687 = vmatpush1.msra.mxu0 %v4686
        %4688 = vmatprep.subr.mxu0 0.0
        %v4689 = vand.u32 %v4513, 4294901760
        %v4690 = vsub.f32 %v4513, %v4689
        %v4691 = vand.u32 %v4690, 4294901760
        %v4692 = vsub.f32 %v4690, %v4691
        %v4693 = vand.u32 %v4692, 4294901760
        %4694 = vmatpush1.msra.mxu0 %v4693
        %4695 = vmatprep.subr.mxu0 0.0
        %v4696 = vand.u32 %v4514, 4294901760
        %v4697 = vsub.f32 %v4514, %v4696
        %v4698 = vand.u32 %v4697, 4294901760
        %v4699 = vsub.f32 %v4697, %v4698
        %v4700 = vand.u32 %v4699, 4294901760
        %4701 = vmatpush1.msra.mxu0 %v4700
        %4702 = vmatprep.subr.mxu0 0.0
        %v4703 = vand.u32 %v4515, 4294901760
        %v4704 = vsub.f32 %v4515, %v4703
        %v4705 = vand.u32 %v4704, 4294901760
        %v4706 = vsub.f32 %v4704, %v4705
        %v4707 = vand.u32 %v4706, 4294901760
        %4708 = vmatpush1.msra.mxu0 %v4707
        %4709 = vmatprep.subr.mxu0 0.0
        %v4710 = vand.u32 %v4516, 4294901760
        %v4711 = vsub.f32 %v4516, %v4710
        %v4712 = vand.u32 %v4711, 4294901760
        %v4713 = vsub.f32 %v4711, %v4712
        %v4714 = vand.u32 %v4713, 4294901760
        %4715 = vmatpush1.msra.mxu0 %v4714
        %4716 = vmatprep.subr.mxu0 0.0
        %v4717 = vand.u32 %v4517, 4294901760
        %v4718 = vsub.f32 %v4517, %v4717
        %v4719 = vand.u32 %v4718, 4294901760
        %v4720 = vsub.f32 %v4718, %v4719
        %v4721 = vand.u32 %v4720, 4294901760
        %4722 = vmatpush1.msra.mxu0 %v4721
        %4723 = vmatprep.subr.mxu0 0.0
        %v4724 = vand.u32 %v4518, 4294901760
        %v4725 = vsub.f32 %v4518, %v4724
        %v4726 = vand.u32 %v4725, 4294901760
        %v4727 = vsub.f32 %v4725, %v4726
        %v4728 = vand.u32 %v4727, 4294901760
        %4729 = vmatpush1.msra.mxu0 %v4728
        %4730 = vmatprep.subr.mxu0 0.0
        %v4731 = vand.u32 %v4519, 4294901760
        %v4732 = vsub.f32 %v4519, %v4731
        %v4733 = vand.u32 %v4732, 4294901760
        %v4734 = vsub.f32 %v4732, %v4733
        %v4735 = vand.u32 %v4734, 4294901760
        %4736 = vmatpush1.msra.mxu0 %v4735
        %4737 = vmatprep.subr.mxu0 0.0
        %v4738 = vand.u32 %v4520, 4294901760
        %v4739 = vsub.f32 %v4520, %v4738
        %v4740 = vand.u32 %v4739, 4294901760
        %v4741 = vsub.f32 %v4739, %v4740
        %v4742 = vand.u32 %v4741, 4294901760
        %4743 = vmatpush1.msra.mxu0 %v4742
        %4744 = vmatprep.subr.mxu0 0.0
        %v4745 = vand.u32 %v4521, 4294901760
        %v4746 = vsub.f32 %v4521, %v4745
        %v4747 = vand.u32 %v4746, 4294901760
        %v4748 = vsub.f32 %v4746, %v4747
        %v4749 = vand.u32 %v4748, 4294901760
        %4750 = vmatpush1.msra.mxu0 %v4749
        %4751 = vmatprep.subr.mxu0 0.0
        %v4752 = vand.u32 %v4522, 4294901760
        %v4753 = vsub.f32 %v4522, %v4752
        %v4754 = vand.u32 %v4753, 4294901760
        %v4755 = vsub.f32 %v4753, %v4754
        %v4756 = vand.u32 %v4755, 4294901760
        %4757 = vmatpush1.msra.mxu0 %v4756
        %4758 = vmatprep.subr.mxu0 0.0
        %4759 = vmatpush1.msra.mxu0 0.0
        %4760 = vmatprep.subr.mxu0 0.0
        %4761 = vmatpush1.msra.mxu0 0.0
        %4762 = vmatprep.subr.mxu0 0.0
        %4763 = vmatpush1.msra.mxu0 0.0
        %4764 = vmatprep.subr.mxu0 0.0
        %4765 = vmatpush1.msra.mxu0 0.0
        %4766 = vmatprep.subr.mxu0 0.0
        %4767 = vmatpush1.msra.mxu0 0.0
        %4768 = vmatprep.subr.mxu0 0.0
        %4769 = vmatpush1.msra.mxu0 0.0
        %4770 = vmatprep.subr.mxu0 0.0
        %4771 = vmatpush1.msra.mxu0 0.0
        %4772 = vmatprep.subr.mxu0 0.0
        %4773 = vmatpush1.msra.mxu0 0.0
        %4774 = vmatprep.subr.mxu0 0.0
        %4775 = vmatpush1.msra.mxu0 0.0
        %4776 = vmatprep.subr.mxu0 0.0
        %4777 = vmatpush1.msra.mxu0 0.0
        %4778 = vmatprep.subr.mxu0 0.0
        %4779 = vmatpush1.msra.mxu0 0.0
        %4780 = vmatprep.subr.mxu0 0.0
        %4781 = vmatpush1.msra.mxu0 0.0
        %4782 = vmatprep.subr.mxu0 0.0
        %4783 = vmatpush1.msra.mxu0 0.0
        %4784 = vmatprep.subr.mxu0 0.0
        %4785 = vmatpush1.msra.mxu0 0.0
        %4786 = vmatprep.subr.mxu0 0.0
        %4787 = vmatpush1.msra.mxu0 0.0
        %4788 = vmatprep.subr.mxu0 0.0
        %4789 = vmatpush1.msra.mxu0 0.0
        %4790 = vmatprep.mubr.f32.mxu0 0.0
        %v4791 = vand.u32 %v4527, 4294901760
        %4792 = vmatmul.mubr.f32.gmra.mrb[0].mxu0 %v4791
        %v4793 = vpop.f32.mrb[0].mxu0
        %v4794 = vadd.f32 %v4623, %v4793
        %v4795 = vpop.f32.mrb[0].mxu0
        %4796 = vmatprep.mubr.f32.mxu0 0.0
        %v4797 = vand.u32 %v4529, 4294901760
        %4798 = vmatmul.mubr.f32.gmra.mrb[0].mxu0 %v4797
        %v4799 = vpop.f32.mrb[0].mxu0
        %v4800 = vadd.f32 %v4633, %v4799
        %v4801 = vpop.f32.mrb[0].mxu0
        %4802 = vmatprep.mubr.f32.mxu0 0.0
        %v4803 = vand.u32 %v4531, 4294901760
        %4804 = vmatmul.mubr.f32.gmra.mrb[0].mxu0 %v4803
        %v4805 = vpop.f32.mrb[0].mxu0
        %v4806 = vadd.f32 %v4643, %v4805
        %v4807 = vpop.f32.mrb[0].mxu0
        %4808 = vdwg.mxu0
        %4809 = vmatprep.subr.mxu0 0.0
        %v4810 = vand.u32 %v4507, 4294901760
        %v4811 = vsub.f32 %v4507, %v4810
        %4812 = vmatpush1.msra.mxu0 %v4811
        %4813 = vmatprep.subr.mxu0 0.0
        %v4814 = vand.u32 %v4508, 4294901760
        %v4815 = vsub.f32 %v4508, %v4814
        %4816 = vmatpush1.msra.mxu0 %v4815
        %4817 = vmatprep.subr.mxu0 0.0
        %v4818 = vand.u32 %v4509, 4294901760
        %v4819 = vsub.f32 %v4509, %v4818
        %4820 = vmatpush1.msra.mxu0 %v4819
        %4821 = vmatprep.subr.mxu0 0.0
        %v4822 = vand.u32 %v4510, 4294901760
        %v4823 = vsub.f32 %v4510, %v4822
        %4824 = vmatpush1.msra.mxu0 %v4823
        %4825 = vmatprep.subr.mxu0 0.0
        %v4826 = vand.u32 %v4511, 4294901760
        %v4827 = vsub.f32 %v4511, %v4826
        %4828 = vmatpush1.msra.mxu0 %v4827
        %4829 = vmatprep.subr.mxu0 0.0
        %v4830 = vand.u32 %v4512, 4294901760
        %v4831 = vsub.f32 %v4512, %v4830
        %4832 = vmatpush1.msra.mxu0 %v4831
        %4833 = vmatprep.subr.mxu0 0.0
        %v4834 = vand.u32 %v4513, 4294901760
        %v4835 = vsub.f32 %v4513, %v4834
        %4836 = vmatpush1.msra.mxu0 %v4835
        %4837 = vmatprep.subr.mxu0 0.0
        %v4838 = vand.u32 %v4514, 4294901760
        %v4839 = vsub.f32 %v4514, %v4838
        %4840 = vmatpush1.msra.mxu0 %v4839
        %4841 = vmatprep.subr.mxu0 0.0
        %v4842 = vand.u32 %v4515, 4294901760
        %v4843 = vsub.f32 %v4515, %v4842
        %4844 = vmatpush1.msra.mxu0 %v4843
        %4845 = vmatprep.subr.mxu0 0.0
        %v4846 = vand.u32 %v4516, 4294901760
        %v4847 = vsub.f32 %v4516, %v4846
        %4848 = vmatpush1.msra.mxu0 %v4847
        %4849 = vmatprep.subr.mxu0 0.0
        %v4850 = vand.u32 %v4517, 4294901760
        %v4851 = vsub.f32 %v4517, %v4850
        %4852 = vmatpush1.msra.mxu0 %v4851
        %4853 = vmatprep.subr.mxu0 0.0
        %v4854 = vand.u32 %v4518, 4294901760
        %v4855 = vsub.f32 %v4518, %v4854
        %4856 = vmatpush1.msra.mxu0 %v4855
        %4857 = vmatprep.subr.mxu0 0.0
        %v4858 = vand.u32 %v4519, 4294901760
        %v4859 = vsub.f32 %v4519, %v4858
        %4860 = vmatpush1.msra.mxu0 %v4859
        %4861 = vmatprep.subr.mxu0 0.0
        %v4862 = vand.u32 %v4520, 4294901760
        %v4863 = vsub.f32 %v4520, %v4862
        %4864 = vmatpush1.msra.mxu0 %v4863
        %4865 = vmatprep.subr.mxu0 0.0
        %v4866 = vand.u32 %v4521, 4294901760
        %v4867 = vsub.f32 %v4521, %v4866
        %4868 = vmatpush1.msra.mxu0 %v4867
        %4869 = vmatprep.subr.mxu0 0.0
        %v4870 = vand.u32 %v4522, 4294901760
        %v4871 = vsub.f32 %v4522, %v4870
        %4872 = vmatpush1.msra.mxu0 %v4871
        %4873 = vmatprep.subr.mxu0 0.0
        %4874 = vmatpush1.msra.mxu0 0.0
        %4875 = vmatprep.subr.mxu0 0.0
        %4876 = vmatpush1.msra.mxu0 0.0
        %4877 = vmatprep.subr.mxu0 0.0
        %4878 = vmatpush1.msra.mxu0 0.0
        %4879 = vmatprep.subr.mxu0 0.0
        %4880 = vmatpush1.msra.mxu0 0.0
        %4881 = vmatprep.subr.mxu0 0.0
        %4882 = vmatpush1.msra.mxu0 0.0
        %4883 = vmatprep.subr.mxu0 0.0
        %4884 = vmatpush1.msra.mxu0 0.0
        %4885 = vmatprep.subr.mxu0 0.0
        %4886 = vmatpush1.msra.mxu0 0.0
        %4887 = vmatprep.subr.mxu0 0.0
        %4888 = vmatpush1.msra.mxu0 0.0
        %4889 = vmatprep.subr.mxu0 0.0
        %4890 = vmatpush1.msra.mxu0 0.0
        %4891 = vmatprep.subr.mxu0 0.0
        %4892 = vmatpush1.msra.mxu0 0.0
        %4893 = vmatprep.subr.mxu0 0.0
        %4894 = vmatpush1.msra.mxu0 0.0
        %4895 = vmatprep.subr.mxu0 0.0
        %4896 = vmatpush1.msra.mxu0 0.0
        %4897 = vmatprep.subr.mxu0 0.0
        %4898 = vmatpush1.msra.mxu0 0.0
        %4899 = vmatprep.subr.mxu0 0.0
        %4900 = vmatpush1.msra.mxu0 0.0
        %4901 = vmatprep.subr.mxu0 0.0
        %4902 = vmatpush1.msra.mxu0 0.0
        %4903 = vmatprep.subr.mxu0 0.0
        %4904 = vmatpush1.msra.mxu0 0.0
        %4905 = vmatprep.mubr.f32.mxu0 0.0
        %v4906 = vand.u32 %v4527, 4294901760
        %v4907 = vsub.f32 %v4527, %v4906
        %4908 = vmatmul.mubr.f32.gmra.mrb[0].mxu0 %v4907
        %v4909 = vpop.f32.mrb[0].mxu0
        %v4910 = vadd.f32 %v4794, %v4909
        %v4911 = vpop.f32.mrb[0].mxu0
        %4912 = vmatprep.mubr.f32.mxu0 0.0
        %v4913 = vand.u32 %v4529, 4294901760
        %v4914 = vsub.f32 %v4529, %v4913
        %4915 = vmatmul.mubr.f32.gmra.mrb[0].mxu0 %v4914
        %v4916 = vpop.f32.mrb[0].mxu0
        %v4917 = vadd.f32 %v4800, %v4916
        %v4918 = vpop.f32.mrb[0].mxu0
        %4919 = vmatprep.mubr.f32.mxu0 0.0
        %v4920 = vand.u32 %v4531, 4294901760
        %v4921 = vsub.f32 %v4531, %v4920
        %4922 = vmatmul.mubr.f32.gmra.mrb[0].mxu0 %v4921
        %v4923 = vpop.f32.mrb[0].mxu0
        %v4924 = vadd.f32 %v4806, %v4923
        %v4925 = vpop.f32.mrb[0].mxu0
        %4926 = vdwg.mxu0
        %4927 = vmatprep.subr.mxu0 0.0
        %v4928 = vand.u32 %v4507, 4294901760
        %4929 = vmatpush1.msra.mxu0 %v4928
        %4930 = vmatprep.subr.mxu0 0.0
        %v4931 = vand.u32 %v4508, 4294901760
        %4932 = vmatpush1.msra.mxu0 %v4931
        %4933 = vmatprep.subr.mxu0 0.0
        %v4934 = vand.u32 %v4509, 4294901760
        %4935 = vmatpush1.msra.mxu0 %v4934
        %4936 = vmatprep.subr.mxu0 0.0
        %v4937 = vand.u32 %v4510, 4294901760
        %4938 = vmatpush1.msra.mxu0 %v4937
        %4939 = vmatprep.subr.mxu0 0.0
        %v4940 = vand.u32 %v4511, 4294901760
        %4941 = vmatpush1.msra.mxu0 %v4940
        %4942 = vmatprep.subr.mxu0 0.0
        %v4943 = vand.u32 %v4512, 4294901760
        %4944 = vmatpush1.msra.mxu0 %v4943
        %4945 = vmatprep.subr.mxu0 0.0
        %v4946 = vand.u32 %v4513, 4294901760
        %4947 = vmatpush1.msra.mxu0 %v4946
        %4948 = vmatprep.subr.mxu0 0.0
        %v4949 = vand.u32 %v4514, 4294901760
        %4950 = vmatpush1.msra.mxu0 %v4949
        %4951 = vmatprep.subr.mxu0 0.0
        %v4952 = vand.u32 %v4515, 4294901760
        %4953 = vmatpush1.msra.mxu0 %v4952
        %4954 = vmatprep.subr.mxu0 0.0
        %v4955 = vand.u32 %v4516, 4294901760
        %4956 = vmatpush1.msra.mxu0 %v4955
        %4957 = vmatprep.subr.mxu0 0.0
        %v4958 = vand.u32 %v4517, 4294901760
        %4959 = vmatpush1.msra.mxu0 %v4958
        %4960 = vmatprep.subr.mxu0 0.0
        %v4961 = vand.u32 %v4518, 4294901760
        %4962 = vmatpush1.msra.mxu0 %v4961
        %4963 = vmatprep.subr.mxu0 0.0
        %v4964 = vand.u32 %v4519, 4294901760
        %4965 = vmatpush1.msra.mxu0 %v4964
        %4966 = vmatprep.subr.mxu0 0.0
        %v4967 = vand.u32 %v4520, 4294901760
        %4968 = vmatpush1.msra.mxu0 %v4967
        %4969 = vmatprep.subr.mxu0 0.0
        %v4970 = vand.u32 %v4521, 4294901760
        %4971 = vmatpush1.msra.mxu0 %v4970
        %4972 = vmatprep.subr.mxu0 0.0
        %v4973 = vand.u32 %v4522, 4294901760
        %4974 = vmatpush1.msra.mxu0 %v4973
        %4975 = vmatprep.subr.mxu0 0.0
        %4976 = vmatpush1.msra.mxu0 0.0
        %4977 = vmatprep.subr.mxu0 0.0
        %4978 = vmatpush1.msra.mxu0 0.0
        %4979 = vmatprep.subr.mxu0 0.0
        %4980 = vmatpush1.msra.mxu0 0.0
        %4981 = vmatprep.subr.mxu0 0.0
        %4982 = vmatpush1.msra.mxu0 0.0
        %4983 = vmatprep.subr.mxu0 0.0
        %4984 = vmatpush1.msra.mxu0 0.0
        %4985 = vmatprep.subr.mxu0 0.0
        %4986 = vmatpush1.msra.mxu0 0.0
        %4987 = vmatprep.subr.mxu0 0.0
        %4988 = vmatpush1.msra.mxu0 0.0
        %4989 = vmatprep.subr.mxu0 0.0
        %4990 = vmatpush1.msra.mxu0 0.0
        %4991 = vmatprep.subr.mxu0 0.0
        %4992 = vmatpush1.msra.mxu0 0.0
        %4993 = vmatprep.subr.mxu0 0.0
        %4994 = vmatpush1.msra.mxu0 0.0
        %4995 = vmatprep.subr.mxu0 0.0
        %4996 = vmatpush1.msra.mxu0 0.0
        %4997 = vmatprep.subr.mxu0 0.0
        %4998 = vmatpush1.msra.mxu0 0.0
        %4999 = vmatprep.subr.mxu0 0.0
        %5000 = vmatpush1.msra.mxu0 0.0
        %5001 = vmatprep.subr.mxu0 0.0
        %5002 = vmatpush1.msra.mxu0 0.0
        %5003 = vmatprep.subr.mxu0 0.0
        %5004 = vmatpush1.msra.mxu0 0.0
        %5005 = vmatprep.subr.mxu0 0.0
        %5006 = vmatpush1.msra.mxu0 0.0
        %5007 = vmatprep.mubr.f32.mxu0 0.0
        %v5008 = vand.u32 %v4527, 4294901760
        %v5009 = vsub.f32 %v4527, %v5008
        %v5010 = vand.u32 %v5009, 4294901760
        %5011 = vmatmul.mubr.f32.gmra.mrb[0].mxu0 %v5010
        %v5012 = vpop.f32.mrb[0].mxu0
        %v5013 = vadd.f32 %v4910, %v5012
        %v5014 = vpop.f32.mrb[0].mxu0
        %5015 = vmatprep.mubr.f32.mxu0 0.0
        %v5016 = vand.u32 %v4529, 4294901760
        %v5017 = vsub.f32 %v4529, %v5016
        %v5018 = vand.u32 %v5017, 4294901760
        %5019 = vmatmul.mubr.f32.gmra.mrb[0].mxu0 %v5018
        %v5020 = vpop.f32.mrb[0].mxu0
        %v5021 = vadd.f32 %v4917, %v5020
        %v5022 = vpop.f32.mrb[0].mxu0
        %5023 = vmatprep.mubr.f32.mxu0 0.0
        %v5024 = vand.u32 %v4531, 4294901760
        %v5025 = vsub.f32 %v4531, %v5024
        %v5026 = vand.u32 %v5025, 4294901760
        %5027 = vmatmul.mubr.f32.gmra.mrb[0].mxu0 %v5026
        %v5028 = vpop.f32.mrb[0].mxu0
        %v5029 = vadd.f32 %v4924, %v5028
        %v5030 = vpop.f32.mrb[0].mxu0
        %5031 = vdwg.mxu0
        %5032 = vmatprep.subr.mxu0 0.0
        %v5033 = vand.u32 %v4507, 4294901760
        %v5034 = vsub.f32 %v4507, %v5033
        %v5035 = vand.u32 %v5034, 4294901760
        %5036 = vmatpush1.msra.mxu0 %v5035
        %5037 = vmatprep.subr.mxu0 0.0
        %v5038 = vand.u32 %v4508, 4294901760
        %v5039 = vsub.f32 %v4508, %v5038
        %v5040 = vand.u32 %v5039, 4294901760
        %5041 = vmatpush1.msra.mxu0 %v5040
        %5042 = vmatprep.subr.mxu0 0.0
        %v5043 = vand.u32 %v4509, 4294901760
        %v5044 = vsub.f32 %v4509, %v5043
        %v5045 = vand.u32 %v5044, 4294901760
        %5046 = vmatpush1.msra.mxu0 %v5045
        %5047 = vmatprep.subr.mxu0 0.0
        %v5048 = vand.u32 %v4510, 4294901760
        %v5049 = vsub.f32 %v4510, %v5048
        %v5050 = vand.u32 %v5049, 4294901760
        %5051 = vmatpush1.msra.mxu0 %v5050
        %5052 = vmatprep.subr.mxu0 0.0
        %v5053 = vand.u32 %v4511, 4294901760
        %v5054 = vsub.f32 %v4511, %v5053
        %v5055 = vand.u32 %v5054, 4294901760
        %5056 = vmatpush1.msra.mxu0 %v5055
        %5057 = vmatprep.subr.mxu0 0.0
        %v5058 = vand.u32 %v4512, 4294901760
        %v5059 = vsub.f32 %v4512, %v5058
        %v5060 = vand.u32 %v5059, 4294901760
        %5061 = vmatpush1.msra.mxu0 %v5060
        %5062 = vmatprep.subr.mxu0 0.0
        %v5063 = vand.u32 %v4513, 4294901760
        %v5064 = vsub.f32 %v4513, %v5063
        %v5065 = vand.u32 %v5064, 4294901760
        %5066 = vmatpush1.msra.mxu0 %v5065
        %5067 = vmatprep.subr.mxu0 0.0
        %v5068 = vand.u32 %v4514, 4294901760
        %v5069 = vsub.f32 %v4514, %v5068
        %v5070 = vand.u32 %v5069, 4294901760
        %5071 = vmatpush1.msra.mxu0 %v5070
        %5072 = vmatprep.subr.mxu0 0.0
        %v5073 = vand.u32 %v4515, 4294901760
        %v5074 = vsub.f32 %v4515, %v5073
        %v5075 = vand.u32 %v5074, 4294901760
        %5076 = vmatpush1.msra.mxu0 %v5075
        %5077 = vmatprep.subr.mxu0 0.0
        %v5078 = vand.u32 %v4516, 4294901760
        %v5079 = vsub.f32 %v4516, %v5078
        %v5080 = vand.u32 %v5079, 4294901760
        %5081 = vmatpush1.msra.mxu0 %v5080
        %5082 = vmatprep.subr.mxu0 0.0
        %v5083 = vand.u32 %v4517, 4294901760
        %v5084 = vsub.f32 %v4517, %v5083
        %v5085 = vand.u32 %v5084, 4294901760
        %5086 = vmatpush1.msra.mxu0 %v5085
        %5087 = vmatprep.subr.mxu0 0.0
        %v5088 = vand.u32 %v4518, 4294901760
        %v5089 = vsub.f32 %v4518, %v5088
        %v5090 = vand.u32 %v5089, 4294901760
        %5091 = vmatpush1.msra.mxu0 %v5090
        %5092 = vmatprep.subr.mxu0 0.0
        %v5093 = vand.u32 %v4519, 4294901760
        %v5094 = vsub.f32 %v4519, %v5093
        %v5095 = vand.u32 %v5094, 4294901760
        %5096 = vmatpush1.msra.mxu0 %v5095
        %5097 = vmatprep.subr.mxu0 0.0
        %v5098 = vand.u32 %v4520, 4294901760
        %v5099 = vsub.f32 %v4520, %v5098
        %v5100 = vand.u32 %v5099, 4294901760
        %5101 = vmatpush1.msra.mxu0 %v5100
        %5102 = vmatprep.subr.mxu0 0.0
        %v5103 = vand.u32 %v4521, 4294901760
        %v5104 = vsub.f32 %v4521, %v5103
        %v5105 = vand.u32 %v5104, 4294901760
        %5106 = vmatpush1.msra.mxu0 %v5105
        %5107 = vmatprep.subr.mxu0 0.0
        %v5108 = vand.u32 %v4522, 4294901760
        %v5109 = vsub.f32 %v4522, %v5108
        %v5110 = vand.u32 %v5109, 4294901760
        %5111 = vmatpush1.msra.mxu0 %v5110
        %5112 = vmatprep.subr.mxu0 0.0
        %5113 = vmatpush1.msra.mxu0 0.0
        %5114 = vmatprep.subr.mxu0 0.0
        %5115 = vmatpush1.msra.mxu0 0.0
        %5116 = vmatprep.subr.mxu0 0.0
        %5117 = vmatpush1.msra.mxu0 0.0
        %5118 = vmatprep.subr.mxu0 0.0
        %5119 = vmatpush1.msra.mxu0 0.0
        %5120 = vmatprep.subr.mxu0 0.0
        %5121 = vmatpush1.msra.mxu0 0.0
        %5122 = vmatprep.subr.mxu0 0.0
        %5123 = vmatpush1.msra.mxu0 0.0
        %5124 = vmatprep.subr.mxu0 0.0
        %5125 = vmatpush1.msra.mxu0 0.0
        %5126 = vmatprep.subr.mxu0 0.0
        %5127 = vmatpush1.msra.mxu0 0.0
        %5128 = vmatprep.subr.mxu0 0.0
        %5129 = vmatpush1.msra.mxu0 0.0
        %5130 = vmatprep.subr.mxu0 0.0
        %5131 = vmatpush1.msra.mxu0 0.0
        %5132 = vmatprep.subr.mxu0 0.0
        %5133 = vmatpush1.msra.mxu0 0.0
        %5134 = vmatprep.subr.mxu0 0.0
        %5135 = vmatpush1.msra.mxu0 0.0
        %5136 = vmatprep.subr.mxu0 0.0
        %5137 = vmatpush1.msra.mxu0 0.0
        %5138 = vmatprep.subr.mxu0 0.0
        %5139 = vmatpush1.msra.mxu0 0.0
        %5140 = vmatprep.subr.mxu0 0.0
        %5141 = vmatpush1.msra.mxu0 0.0
        %5142 = vmatprep.subr.mxu0 0.0
        %5143 = vmatpush1.msra.mxu0 0.0
        %5144 = vmatprep.mubr.f32.mxu0 0.0
        %v5145 = vand.u32 %v4527, 4294901760
        %5146 = vmatmul.mubr.f32.gmra.mrb[0].mxu0 %v5145
        %v5147 = vpop.f32.mrb[0].mxu0
        %v5148 = vadd.f32 %v5013, %v5147
        %v5149 = vpop.f32.mrb[0].mxu0
        %5150 = vmatprep.mubr.f32.mxu0 0.0
        %v5151 = vand.u32 %v4529, 4294901760
        %5152 = vmatmul.mubr.f32.gmra.mrb[0].mxu0 %v5151
        %v5153 = vpop.f32.mrb[0].mxu0
        %v5154 = vadd.f32 %v5021, %v5153
        %v5155 = vpop.f32.mrb[0].mxu0
        %5156 = vmatprep.mubr.f32.mxu0 0.0
        %v5157 = vand.u32 %v4531, 4294901760
        %5158 = vmatmul.mubr.f32.gmra.mrb[0].mxu0 %v5157
        %v5159 = vpop.f32.mrb[0].mxu0
        %v5160 = vadd.f32 %v5029, %v5159
        %v5161 = vpop.f32.mrb[0].mxu0
        %5162 = vdwg.mxu0
        %5163 = vmatprep.subr.mxu0 0.0
        %v5164 = vand.u32 %v4507, 4294901760
        %5165 = vmatpush1.msra.mxu0 %v5164
        %5166 = vmatprep.subr.mxu0 0.0
        %v5167 = vand.u32 %v4508, 4294901760
        %5168 = vmatpush1.msra.mxu0 %v5167
        %5169 = vmatprep.subr.mxu0 0.0
        %v5170 = vand.u32 %v4509, 4294901760
        %5171 = vmatpush1.msra.mxu0 %v5170
        %5172 = vmatprep.subr.mxu0 0.0
        %v5173 = vand.u32 %v4510, 4294901760
        %5174 = vmatpush1.msra.mxu0 %v5173
        %5175 = vmatprep.subr.mxu0 0.0
        %v5176 = vand.u32 %v4511, 4294901760
        %5177 = vmatpush1.msra.mxu0 %v5176
        %5178 = vmatprep.subr.mxu0 0.0
        %v5179 = vand.u32 %v4512, 4294901760
        %5180 = vmatpush1.msra.mxu0 %v5179
        %5181 = vmatprep.subr.mxu0 0.0
        %v5182 = vand.u32 %v4513, 4294901760
        %5183 = vmatpush1.msra.mxu0 %v5182
        %5184 = vmatprep.subr.mxu0 0.0
        %v5185 = vand.u32 %v4514, 4294901760
        %5186 = vmatpush1.msra.mxu0 %v5185
        %5187 = vmatprep.subr.mxu0 0.0
        %v5188 = vand.u32 %v4515, 4294901760
        %5189 = vmatpush1.msra.mxu0 %v5188
        %5190 = vmatprep.subr.mxu0 0.0
        %v5191 = vand.u32 %v4516, 4294901760
        %5192 = vmatpush1.msra.mxu0 %v5191
        %5193 = vmatprep.subr.mxu0 0.0
        %v5194 = vand.u32 %v4517, 4294901760
        %5195 = vmatpush1.msra.mxu0 %v5194
        %5196 = vmatprep.subr.mxu0 0.0
        %v5197 = vand.u32 %v4518, 4294901760
        %5198 = vmatpush1.msra.mxu0 %v5197
        %5199 = vmatprep.subr.mxu0 0.0
        %v5200 = vand.u32 %v4519, 4294901760
        %5201 = vmatpush1.msra.mxu0 %v5200
        %5202 = vmatprep.subr.mxu0 0.0
        %v5203 = vand.u32 %v4520, 4294901760
        %5204 = vmatpush1.msra.mxu0 %v5203
        %5205 = vmatprep.subr.mxu0 0.0
        %v5206 = vand.u32 %v4521, 4294901760
        %5207 = vmatpush1.msra.mxu0 %v5206
        %5208 = vmatprep.subr.mxu0 0.0
        %v5209 = vand.u32 %v4522, 4294901760
        %5210 = vmatpush1.msra.mxu0 %v5209
        %5211 = vmatprep.subr.mxu0 0.0
        %5212 = vmatpush1.msra.mxu0 0.0
        %5213 = vmatprep.subr.mxu0 0.0
        %5214 = vmatpush1.msra.mxu0 0.0
        %5215 = vmatprep.subr.mxu0 0.0
        %5216 = vmatpush1.msra.mxu0 0.0
        %5217 = vmatprep.subr.mxu0 0.0
        %5218 = vmatpush1.msra.mxu0 0.0
        %5219 = vmatprep.subr.mxu0 0.0
        %5220 = vmatpush1.msra.mxu0 0.0
        %5221 = vmatprep.subr.mxu0 0.0
        %5222 = vmatpush1.msra.mxu0 0.0
        %5223 = vmatprep.subr.mxu0 0.0
        %5224 = vmatpush1.msra.mxu0 0.0
        %5225 = vmatprep.subr.mxu0 0.0
        %5226 = vmatpush1.msra.mxu0 0.0
        %5227 = vmatprep.subr.mxu0 0.0
        %5228 = vmatpush1.msra.mxu0 0.0
        %5229 = vmatprep.subr.mxu0 0.0
        %5230 = vmatpush1.msra.mxu0 0.0
        %5231 = vmatprep.subr.mxu0 0.0
        %5232 = vmatpush1.msra.mxu0 0.0
        %5233 = vmatprep.subr.mxu0 0.0
        %5234 = vmatpush1.msra.mxu0 0.0
        %5235 = vmatprep.subr.mxu0 0.0
        %5236 = vmatpush1.msra.mxu0 0.0
        %5237 = vmatprep.subr.mxu0 0.0
        %5238 = vmatpush1.msra.mxu0 0.0
        %5239 = vmatprep.subr.mxu0 0.0
        %5240 = vmatpush1.msra.mxu0 0.0
        %5241 = vmatprep.subr.mxu0 0.0
        %5242 = vmatpush1.msra.mxu0 0.0
        %5243 = vmatprep.mubr.f32.mxu0 0.0
        %v5244 = vand.u32 %v4527, 4294901760
        %5245 = vmatmul.mubr.f32.gmra.mrb[0].mxu0 %v5244
        %v5246 = vpop.f32.mrb[0].mxu0
        %v5247 = vadd.f32 %v5148, %v5246
        %v5248 = vpop.f32.mrb[0].mxu0
        %5249 = vmatprep.mubr.f32.mxu0 0.0
        %v5250 = vand.u32 %v4529, 4294901760
        %5251 = vmatmul.mubr.f32.gmra.mrb[0].mxu0 %v5250
        %v5252 = vpop.f32.mrb[0].mxu0
        %v5253 = vadd.f32 %v5154, %v5252
        %v5254 = vpop.f32.mrb[0].mxu0
        %5255 = vmatprep.mubr.f32.mxu0 0.0
        %v5256 = vand.u32 %v4531, 4294901760
        %5257 = vmatmul.mubr.f32.gmra.mrb[0].mxu0 %v5256
        %v5258 = vpop.f32.mrb[0].mxu0
        %v5259 = vadd.f32 %v5160, %v5258
        %v5260 = vpop.f32.mrb[0].mxu0
        %5261 = vdwg.mxu0
        %v5262 = vadd.f32 %v4503, %v5247
        %v5263 = vadd.f32 %v4504, %v5253
        %v5264 = vadd.f32 %v4505, %v5259
        %v5265 = vld [vmem:[%s3 + $0x1] sm:$0x1]
        %v5266 = vlaneseq
        %v5267 = vshrl.u32 %v5266, 7
        %v5268 = vsub.s32 0, %v5267
        %v5269 = vrot.slane %v5265, %v5268
        %v5270 = vadd.f32 %v5262, %v5269
        %v5271 = vadd.f32 %v5263, %v5269
        %v5272 = vadd.f32 %v5264, %v5269
        %v5273 = vmax.f32 %v5270, 0.0
        %v5274 = vmax.f32 %v5271, 0.0
        %v5275 = vmax.f32 %v5272, 0.0
        %5276 = vst [vmem:[%s212] sm:$0xff] %v5273
        %5277 = vst [vmem:[%s212 + $0x8] sm:$0xff] %v5274
        %5278 = vst [vmem:[%s212 + $0x10] sm:$0x1f] %v5275
        %p5279 = scmp.lt.s32.totalorder %s16, 1
        %s5280 = scalar_select %p5279, %s16, 1
        %s5281 = smul.addr %s5280, 3
        %s5282 = smul.addr %s5281, 8
        %s5283 = scalar_lea.vmem %s4, %s5282
        // Predicated region
        $region41: #{tpu_custom_call.1} parent=35 // pred_check
          %p5284 = pneg %p123
        $region42: #{tpu_custom_call.1} parent=35 // pred_check_branch
          %5286 = sbr.rel (%p5284) target = $region44
        $region43: #{tpu_custom_call.1} parent=35 // pred_region
          _
        $region44: #{tpu_custom_call.1} parent=35 // pred_fallthru
          _
      $region36: #{tpu_custom_call.1} parent=5 // pred_fallthru
        _
      %p5287 = scmp.le.s32.totalorder 2, %s11
      // Predicated region
      $region45: #{tpu_custom_call.1} parent=5 // pred_check
        %p5288 = pneg %p5287
      $region46: #{tpu_custom_call.1} parent=5 // pred_check_branch
        %5290 = sbr.rel (%p5288) target = $region48
      $region47: #{tpu_custom_call.1} parent=5 // pred_region
        %s5291 = ssub.s32 %s11, 2
        // Predicated region
        $region49: #{tpu_custom_call.1} parent=47 // pred_check
          %p5292 = pneg %p129
        $region50: #{tpu_custom_call.1} parent=47 // pred_check_branch
          %5294 = sbr.rel (%p5292) target = $region52
        $region51: #{tpu_custom_call.1} parent=47 // pred_region
          %p5295 = scmp.lt.s32.totalorder %s17, 1
          %s5296 = scalar_select %p5295, %s17, 1
          %s5297 = smul.addr %s5296, 3
          %s5298 = smul.addr %s5297, 8
          %s5299 = scalar_lea.vmem %s4, %s5298
        $region52: #{tpu_custom_call.1} parent=47 // pred_fallthru
          _
      $region48: #{tpu_custom_call.1} parent=5 // pred_fallthru
        _
    $region6: #{tpu_custom_call.1} parent=1 // loop_footer
      %s15 = sadd.s32 1, %s11
    $region7: #{tpu_custom_call.1} parent=1 // loop_footer_branch
      %10 = sbr.rel target = $region3
    $region8: #{tpu_custom_call.1} parent=1 // loop_exit
      _
    %5300 = vsyncpa [#allocation3], 1
    %s5301 = scalar_lea.sflag [#allocation3], 1
    %5302 = vsyncpa %s5301, 1

</llo_original>
